<compile_context>
chip_gen: v7x
topology: tpu7x:2x2x1
jax: 0.10.0
libtpu: 0.0.40
codegen_flags: <defaults>
</compile_context>

<pallas_src>
import math
import jax
import jax.numpy as jnp
from jax.experimental import pallas as pl
from jax.experimental.pallas import tpu as pltpu

_VMEM_LIMIT = 48 * 1024 * 1024


def _round_up(x, m):
    return ((x + m - 1) // m) * m


# ---------------------------------------------------------------------------
# Tiled, pipelined linear:  y = x @ W.T + b   (torch nn.Linear semantics)
# ---------------------------------------------------------------------------
def _linear_kernel(x_ref, w_ref, b_ref, o_ref):
    acc = jax.lax.dot_general(
        x_ref[...], w_ref[...],
        dimension_numbers=(((1,), (1,)), ((), ())),
        preferred_element_type=jnp.float32)
    o_ref[...] = (acc + b_ref[...]).astype(o_ref.dtype)


def linear_pallas(x, w, b, *, tile_m=512):
    # x: (M, K); w: (O, K) torch-style weight; b: (O,)
    M, K = x.shape
    O = w.shape[0]
    tm = min(tile_m, _round_up(M, 8))
    M_pad = _round_up(M, tm)
    if M_pad != M:
        x = jnp.pad(x, ((0, M_pad - M), (0, 0)))
    grid_m = M_pad // tm
    b2 = b.reshape(1, O)
    out = pl.pallas_call(
        _linear_kernel,
        out_shape=jax.ShapeDtypeStruct((M_pad, O), x.dtype),
        grid=(grid_m,),
        in_specs=[pl.BlockSpec((tm, K), lambda i: (i, 0)),
                  pl.BlockSpec((O, K), lambda i: (0, 0)),   # resident weight
                  pl.BlockSpec((1, O), lambda i: (0, 0))],  # resident bias
        out_specs=pl.BlockSpec((tm, O), lambda i: (i, 0)),
        compiler_params=pltpu.CompilerParams(
            dimension_semantics=("parallel",),
            vmem_limit_bytes=_VMEM_LIMIT),
    )(x, w, b2)
    return out[:M] if M_pad != M else out


# ---------------------------------------------------------------------------
# Deformable-attention core: softmax + bilinear sampling + weighted reduction.
# One grid step per batch element; all heads handled inside the kernel,
# output block is lane-dense (Len_q, d_model).
# ---------------------------------------------------------------------------
def msda_core_pallas(value, x_pix, y_pix, attn_logits, spatial_shapes,
                     n_heads, n_levels, n_points):
    # value:       (N, Len_in, d_model)
    # x_pix/y_pix: (N, Len_q, H*L*P)  pixel-space sampling coords (loc*size-0.5)
    # attn_logits: (N, Len_q, H*L*P)  pre-softmax logits, column order (h, l, p)
    N, Len_in, d_model = value.shape
    Len_q = x_pix.shape[1]
    H, L, P = n_heads, n_levels, n_points
    LP = L * P
    HLP = H * LP
    dh = d_model // H
    starts = []
    s = 0
    for (hl, wl) in spatial_shapes:
        starts.append(s)
        s += hl * wl
    assert s == Len_in
    assert x_pix.shape == (N, Len_q, HLP)

    def kernel(v_ref, x_ref, y_ref, a_ref, o_ref):
        val = v_ref[0]        # (Len_in, d_model)
        xs = x_ref[0]         # (Len_q, HLP)
        ys = y_ref[0]
        logits = a_ref[0]     # (Len_q, HLP)

        # Corner prep for the whole block (hoisted out of all loops).
        x0f = jnp.floor(xs)
        y0f = jnp.floor(ys)
        tx = xs - x0f
        ty = ys - y0f
        x0 = x0f.astype(jnp.int32)
        y0 = y0f.astype(jnp.int32)

        # Per-level iota, hoisted out of head/point/corner loops.
        iotas = [
            jax.lax.broadcasted_iota(
                jnp.int32,
                (Len_q, spatial_shapes[l][0] * spatial_shapes[l][1]), 1)
            for l in range(L)
        ]

        out_heads = []
        for h in range(H):                      # static loop over heads
            # softmax over this head's L*P logits
            lg = logits[:, h * LP:(h + 1) * LP]
            m = jnp.max(lg, axis=-1, keepdims=True)
            e = jnp.exp(lg - m)
            attn_h = e / jnp.sum(e, axis=-1, keepdims=True)      # (Len_q, LP)

            acc_h = jnp.zeros((Len_q, dh), jnp.float32)
            for l in range(L):                  # static loop over levels
                hl, wl = spatial_shapes[l]
                n_l = hl * wl
                iota_l = iotas[l]
                c0 = h * LP + l * P
                cx0 = x0[:, c0:c0 + P]
                cy0 = y0[:, c0:c0 + P]
                ctx = tx[:, c0:c0 + P]
                cty = ty[:, c0:c0 + P]
                a_l = attn_h[:, l * P:l * P + P]                 # (Len_q, P)

                # Accumulate all P points x 4 bilinear corners into a single
                # (Len_q, n_l) scatter matrix, then ONE MXU matmul per level.
                w_mat = jnp.zeros((Len_q, n_l), jnp.float32)
                for dy in (0, 1):
                    wy = cty if dy == 1 else 1.0 - cty
                    yi = cy0 + dy
                    for dx in (0, 1):
                        wx = ctx if dx == 1 else 1.0 - ctx
                        xi = cx0 + dx
                        valid = ((xi >= 0) & (xi < wl) &
                                 (yi >= 0) & (yi < hl))
                        wgt = jnp.where(valid, wx * wy * a_l, 0.0)  # (Len_q,P)
                        idx = yi * wl + xi                          # (Len_q,P)
                        for p in range(P):
                            w_mat = w_mat + jnp.where(
                                iota_l == idx[:, p:p + 1],
                                wgt[:, p:p + 1], 0.0)
                v_hl = val[starts[l]:starts[l] + n_l, h * dh:(h + 1) * dh]
                acc_h = acc_h + jnp.dot(
                    w_mat, v_hl, preferred_element_type=jnp.float32)
            out_heads.append(acc_h)
        # single lane-dense store of the full (Len_q, d_model) slab
        o_ref[0] = jnp.concatenate(out_heads, axis=-1).astype(o_ref.dtype)

    return pl.pallas_call(
        kernel,
        out_shape=jax.ShapeDtypeStruct((N, Len_q, d_model), value.dtype),
        grid=(N,),
        in_specs=[pl.BlockSpec((1, Len_in, d_model), lambda n: (n, 0, 0)),
                  pl.BlockSpec((1, Len_q, HLP), lambda n: (n, 0, 0)),
                  pl.BlockSpec((1, Len_q, HLP), lambda n: (n, 0, 0)),
                  pl.BlockSpec((1, Len_q, HLP), lambda n: (n, 0, 0))],
        out_specs=pl.BlockSpec((1, Len_q, d_model), lambda n: (n, 0, 0)),
        compiler_params=pltpu.CompilerParams(
            dimension_semantics=("parallel",),
            vmem_limit_bytes=_VMEM_LIMIT),
    )(value, x_pix, y_pix, attn_logits)


# ---------------------------------------------------------------------------
# Parameter init (mirrors MSDeformAttn._reset_parameters)
# ---------------------------------------------------------------------------
def _xavier_uniform(key, out_f, in_f):
    bound = math.sqrt(6.0 / (in_f + out_f))
    return jax.random.uniform(key, (out_f, in_f), jnp.float32, -bound, bound)


def init_params(key, d_model, n_levels, n_heads, n_points):
    k1, k2 = jax.random.split(key, 2)
    thetas = jnp.arange(n_heads, dtype=jnp.float32) * (2.0 * math.pi / n_heads)
    grid = jnp.stack([jnp.cos(thetas), jnp.sin(thetas)], -1)          # (H, 2)
    grid = grid / jnp.max(jnp.abs(grid), axis=-1, keepdims=True)
    grid = jnp.tile(grid[:, None, None, :], (1, n_levels, n_points, 1))
    grid = grid * jnp.arange(1, n_points + 1,
                             dtype=jnp.float32)[None, None, :, None]
    return {
        'sampling_offsets_w': jnp.zeros(
            (n_heads * n_levels * n_points * 2, d_model), jnp.float32),
        'sampling_offsets_b': grid.reshape(-1),
        'attention_weights_w': jnp.zeros(
            (n_heads * n_levels * n_points, d_model), jnp.float32),
        'attention_weights_b': jnp.zeros(
            (n_heads * n_levels * n_points,), jnp.float32),
        'value_proj_w': _xavier_uniform(k1, d_model, d_model),
        'value_proj_b': jnp.zeros((d_model,), jnp.float32),
        'output_proj_w': _xavier_uniform(k2, d_model, d_model),
        'output_proj_b': jnp.zeros((d_model,), jnp.float32),
    }


# ---------------------------------------------------------------------------
# Full forward (Pallas for all matmuls + the deformable-attention core)
# ---------------------------------------------------------------------------
def msdeform_attn_forward(params, cfg, query, reference_points, input_flatten,
                          spatial_shapes, input_padding_mask=None):
    d_model, n_levels, n_heads, n_points = cfg
    N, Len_q, C = query.shape
    _, Len_in, _ = input_flatten.shape
    H, L, P = n_heads, n_levels, n_points
    HLP = H * L * P

    # value projection (tiled, pipelined linear)
    value = linear_pallas(input_flatten.reshape(N * Len_in, C),
                          params['value_proj_w'], params['value_proj_b'])
    value = value.reshape(N, Len_in, d_model)
    if input_padding_mask is not None:
        value = jnp.where(input_padding_mask[..., None], 0.0, value)

    # fused sampling_offsets + attention_weights projection (one linear on q)
    w_fused = jnp.concatenate([params['sampling_offsets_w'],
                               params['attention_weights_w']], axis=0)
    b_fused = jnp.concatenate([params['sampling_offsets_b'],
                               params['attention_weights_b']], axis=0)
    qo = linear_pallas(query.reshape(N * Len_q, C), w_fused, b_fused)
    offs = qo[:, :HLP * 2].reshape(N, Len_q, H, L, P, 2)
    attn_logits = qo[:, HLP * 2:].reshape(N, Len_q, HLP)   # column order (h,l,p)

    # sampling locations (plain-JAX elementwise glue on small tensors)
    sizes_wh = jnp.array([[wl, hl] for (hl, wl) in spatial_shapes], jnp.float32)
    if reference_points.shape[-1] == 2:
        loc = (reference_points[:, :, None, :, None, :]
               + offs / sizes_wh[None, None, None, :, None, :])
    elif reference_points.shape[-1] == 4:
        loc = (reference_points[:, :, None, :, None, :2]
               + offs / P * reference_points[:, :, None, :, None, 2:] * 0.5)
    else:
        raise ValueError('reference_points last dim must be 2 or 4')
    # grid_sample(align_corners=False) pixel coords: p = loc * size - 0.5
    pix = loc * sizes_wh[None, None, None, :, None, :] - 0.5
    x_pix = pix[..., 0].reshape(N, Len_q, HLP)
    y_pix = pix[..., 1].reshape(N, Len_q, HLP)

    out = msda_core_pallas(value, x_pix, y_pix, attn_logits, spatial_shapes,
                           n_heads=H, n_levels=L, n_points=P)
    out = linear_pallas(out.reshape(N * Len_q, d_model),
                        params['output_proj_w'], params['output_proj_b'])
    return out.reshape(N, Len_q, d_model)


# ---------------------------------------------------------------------------
# Pure-JAX reference (independent gather-based path) for correctness checking
# ---------------------------------------------------------------------------
def _lin(x, w, b):
    return x @ w.T + b


def reference_forward(params, cfg, query, reference_points, input_flatten,
                      spatial_shapes, input_padding_mask=None):
    d_model, L, H, P = cfg
    N, Len_q, _ = query.shape
    _, Len_in, _ = input_flatten.shape
    dh = d_model // H
    value = _lin(input_flatten, params['value_proj_w'], params['value_proj_b'])
    if input_padding_mask is not None:
        value = jnp.where(input_padding_mask[..., None], 0.0, value)
    value = value.reshape(N, Len_in, H, dh)
    offs = _lin(query, params['sampling_offsets_w'],
                params['sampling_offsets_b']).reshape(N, Len_q, H, L, P, 2)
    attn = jax.nn.softmax(
        _lin(query, params['attention_weights_w'],
             params['attention_weights_b']).reshape(N, Len_q, H, L * P),
        axis=-1).reshape(N, Len_q, H, L, P)
    normalizer = jnp.array([[wl, hl] for (hl, wl) in spatial_shapes],
                           jnp.float32)
    if reference_points.shape[-1] == 2:
        loc = (reference_points[:, :, None, :, None, :]
               + offs / normalizer[None, None, None, :, None, :])
    else:
        loc = (reference_points[:, :, None, :, None, :2]
               + offs / P * reference_points[:, :, None, :, None, 2:] * 0.5)
    out = jnp.zeros((N, H, Len_q, dh), jnp.float32)
    start = 0
    for l, (hl, wl) in enumerate(spatial_shapes):
        n_l = hl * wl
        v_l = value[:, start:start + n_l].transpose(0, 2, 1, 3)   # (N,H,n_l,d)
        start += n_l
        x = loc[:, :, :, l, :, 0] * wl - 0.5      # (N, Len_q, H, P)
        y = loc[:, :, :, l, :, 1] * hl - 0.5
        x0 = jnp.floor(x)
        y0 = jnp.floor(y)
        a_l = attn[:, :, :, l, :]
        for dy in (0, 1):
            for dx in (0, 1):
                xi = x0.astype(jnp.int32) + dx
                yi = y0.astype(jnp.int32) + dy
                wx = 1.0 - jnp.abs(x - xi.astype(jnp.float32))
                wy = 1.0 - jnp.abs(y - yi.astype(jnp.float32))
                valid = (xi >= 0) & (xi < wl) & (yi >= 0) & (yi < hl)
                w = wx * wy * a_l * valid.astype(jnp.float32)
                idx = jnp.clip(yi * wl + xi, 0, n_l - 1)
                idx_t = idx.transpose(0, 2, 1, 3)           # (N,H,Len_q,P)

                def gather_one(vhd, ihd):
                    return vhd[ihd]                          # (Len_q,P,d)

                gathered = jax.vmap(jax.vmap(gather_one))(v_l, idx_t)
                w_t = w.transpose(0, 2, 1, 3)
                out = out + jnp.einsum('nhqp,nhqpd->nhqd', w_t, gathered)
    out = out.transpose(0, 2, 1, 3).reshape(N, Len_q, d_model)
    return _lin(out, params['output_proj_w'], params['output_proj_b'])


# ---------------------------------------------------------------------------
if __name__ == "__main__":
    d_model, n_levels, n_heads, n_points = 32, 2, 4, 2
    spatial_shapes = ((4, 4), (2, 2))     # static (H_l, W_l); Len_in = 20
    N, Len_q = 2, 8
    Len_in = sum(h * w for h, w in spatial_shapes)

    key = jax.random.PRNGKey(0)
    kp, kq, ki, kr, kow, kaw = jax.random.split(key, 6)
    params = init_params(kp, d_model, n_levels, n_heads, n_points)
    # Perturb the (zero-initialised) projection weights so the softmax and
    # out-of-bounds sampling paths are numerically exercised in the test.
    params['sampling_offsets_w'] = 0.05 * jax.random.normal(
        kow, params['sampling_offsets_w'].shape, jnp.float32)
    params['attention_weights_w'] = 0.5 * jax.random.normal(
        kaw, params['attention_weights_w'].shape, jnp.float32)

    query = jax.random.normal(kq, (N, Len_q, d_model), jnp.float32)
    input_flatten = jax.random.normal(ki, (N, Len_in, d_model), jnp.float32)
    reference_points = jax.random.uniform(kr, (N, Len_q, n_levels, 2),
                                          jnp.float32)
    # padding mask: last two flattened positions are padding (True)
    pos = jnp.arange(Len_in)[None, :]
    input_padding_mask = jnp.broadcast_to(pos >= Len_in - 2, (N, Len_in))

    cfg = (d_model, n_levels, n_heads, n_points)
    fwd = jax.jit(msdeform_attn_forward, static_argnums=(1, 5))
    out = fwd(params, cfg, query, reference_points, input_flatten,
              spatial_shapes, input_padding_mask)
    out = jax.block_until_ready(out)

    ref = reference_forward(params, cfg, query, reference_points,
                            input_flatten, spatial_shapes, input_padding_mask)

    assert out.shape == (N, Len_q, d_model)
    err = float(jnp.max(jnp.abs(out - ref)))
    if not jnp.allclose(out, ref, atol=1e-4, rtol=1e-4):
        raise AssertionError(
            "Pallas output mismatch vs reference (max abs diff = %g)" % err)
    print("KERNEL_OK")
</pallas_src>

<mosaic_0001>
module attributes {stable_mosaic.version = 11 : i64} {
  func.func @_linear_kernel(%arg0: i32, %arg1: memref<16x32xf32, #tpu.memory_space<vmem>>, %arg2: memref<48x32xf32, #tpu.memory_space<vmem>>, %arg3: memref<1x48xf32, #tpu.memory_space<vmem>>, %arg4: memref<16x48xf32, #tpu.memory_space<vmem>>) attributes {dimension_semantics = [#tpu.dimension_semantics<parallel>], iteration_bounds = array<i64: 1>, scalar_prefetch = 0 : i64, scratch_operands = 0 : i64, tpu.core_type = #tpu.core_type<tc>, window_params = [{transform_indices = @transform_0, window_bounds = array<i64: 16, 32>}, {pipeline_mode = #tpu.pipeline_mode<synchronous>, transform_indices = @transform_1, window_bounds = array<i64: 48, 32>}, {pipeline_mode = #tpu.pipeline_mode<synchronous>, transform_indices = @transform_2, window_bounds = array<i64: 1, 48>}, {transform_indices = @transform_3, window_bounds = array<i64: 16, 48>}]} {
    %c0 = arith.constant 0 : index
    %c0_0 = arith.constant 0 : index
    %0 = vector.load %arg1[%c0, %c0_0] : memref<16x32xf32, #tpu.memory_space<vmem>>, vector<16x32xf32>
    %c0_1 = arith.constant 0 : index
    %c0_2 = arith.constant 0 : index
    %1 = vector.load %arg2[%c0_1, %c0_2] : memref<48x32xf32, #tpu.memory_space<vmem>>, vector<48x32xf32>
    %cst = arith.constant dense<0.000000e+00> : vector<16x48xf32>
    %2 = tpu.matmul %0, %1, %cst {dimension_numbers = #tpu.dot_dimension_numbers<[1], [1], [0], [0], [0, 0, 1, 0], [], []>} : vector<16x32xf32>, vector<48x32xf32>, vector<16x48xf32> -> vector<16x48xf32>
    %c0_3 = arith.constant 0 : index
    %c0_4 = arith.constant 0 : index
    %3 = vector.load %arg3[%c0_3, %c0_4] : memref<1x48xf32, #tpu.memory_space<vmem>>, vector<1x48xf32>
    %4 = vector.broadcast %3 : vector<1x48xf32> to vector<16x48xf32>
    %5 = arith.addf %2, %4 : vector<16x48xf32>
    %c0_5 = arith.constant 0 : index
    %c0_6 = arith.constant 0 : index
    %6 = vector.load %arg4[%c0_5, %c0_6] : memref<16x48xf32, #tpu.memory_space<vmem>>, vector<16x48xf32>
    tpu.vector_store %arg4[%c0_5, %c0_6], %5 {strides = array<i32>} : memref<16x48xf32, #tpu.memory_space<vmem>>, vector<16x48xf32>,
    return
  }
  func.func @transform_0(%arg0: i32) -> (i32, i32) {
    %c0_i32 = arith.constant 0 : i32
    %c0_i32_0 = arith.constant 0 : i32
    return %arg0, %c0_i32 : i32, i32
  }
  func.func @transform_1(%arg0: i32) -> (i32, i32) {
    %c0_i32 = arith.constant 0 : i32
    %c0_i32_0 = arith.constant 0 : i32
    %c0_i32_1 = arith.constant 0 : i32
    return %c0_i32, %c0_i32_0 : i32, i32
  }
  func.func @transform_2(%arg0: i32) -> (i32, i32) {
    %c0_i32 = arith.constant 0 : i32
    %c0_i32_0 = arith.constant 0 : i32
    %c0_i32_1 = arith.constant 0 : i32
    return %c0_i32, %c0_i32_0 : i32, i32
  }
  func.func @transform_3(%arg0: i32) -> (i32, i32) {
    %c0_i32 = arith.constant 0 : i32
    %c0_i32_0 = arith.constant 0 : i32
    return %arg0, %c0_i32 : i32, i32
  }
}

module attributes {stable_mosaic.version = 11 : i64} {
  func.func @_linear_kernel(%arg0: i32, %arg1: memref<40x32xf32, #tpu.memory_space<vmem>>, %arg2: memref<32x32xf32, #tpu.memory_space<vmem>>, %arg3: memref<1x32xf32, #tpu.memory_space<vmem>>, %arg4: memref<40x32xf32, #tpu.memory_space<vmem>>) attributes {dimension_semantics = [#tpu.dimension_semantics<parallel>], iteration_bounds = array<i64: 1>, scalar_prefetch = 0 : i64, scratch_operands = 0 : i64, tpu.core_type = #tpu.core_type<tc>, window_params = [{transform_indices = @transform_0, window_bounds = array<i64: 40, 32>}, {pipeline_mode = #tpu.pipeline_mode<synchronous>, transform_indices = @transform_1, window_bounds = array<i64: 32, 32>}, {pipeline_mode = #tpu.pipeline_mode<synchronous>, transform_indices = @transform_2, window_bounds = array<i64: 1, 32>}, {transform_indices = @transform_3, window_bounds = array<i64: 40, 32>}]} {
    %c0 = arith.constant 0 : index
    %c0_0 = arith.constant 0 : index
    %0 = vector.load %arg1[%c0, %c0_0] : memref<40x32xf32, #tpu.memory_space<vmem>>, vector<40x32xf32>
    %c0_1 = arith.constant 0 : index
    %c0_2 = arith.constant 0 : index
    %1 = vector.load %arg2[%c0_1, %c0_2] : memref<32x32xf32, #tpu.memory_space<vmem>>, vector<32x32xf32>
    %cst = arith.constant dense<0.000000e+00> : vector<40x32xf32>
    %2 = tpu.matmul %0, %1, %cst {dimension_numbers = #tpu.dot_dimension_numbers<[1], [1], [0], [0], [0, 0, 1, 0], [], []>} : vector<40x32xf32>, vector<32x32xf32>, vector<40x32xf32> -> vector<40x32xf32>
    %c0_3 = arith.constant 0 : index
    %c0_4 = arith.constant 0 : index
    %3 = vector.load %arg3[%c0_3, %c0_4] : memref<1x32xf32, #tpu.memory_space<vmem>>, vector<1x32xf32>
    %4 = vector.broadcast %3 : vector<1x32xf32> to vector<40x32xf32>
    %5 = arith.addf %2, %4 : vector<40x32xf32>
    %c0_5 = arith.constant 0 : index
    %c0_6 = arith.constant 0 : index
    %6 = vector.load %arg4[%c0_5, %c0_6] : memref<40x32xf32, #tpu.memory_space<vmem>>, vector<40x32xf32>
    tpu.vector_store %arg4[%c0_5, %c0_6], %5 {strides = array<i32>} : memref<40x32xf32, #tpu.memory_space<vmem>>, vector<40x32xf32>,
    return
  }
  func.func @transform_0(%arg0: i32) -> (i32, i32) {
    %c0_i32 = arith.constant 0 : i32
    %c0_i32_0 = arith.constant 0 : i32
    return %arg0, %c0_i32 : i32, i32
  }
  func.func @transform_1(%arg0: i32) -> (i32, i32) {
    %c0_i32 = arith.constant 0 : i32
    %c0_i32_0 = arith.constant 0 : i32
    %c0_i32_1 = arith.constant 0 : i32
    return %c0_i32, %c0_i32_0 : i32, i32
  }
  func.func @transform_2(%arg0: i32) -> (i32, i32) {
    %c0_i32 = arith.constant 0 : i32
    %c0_i32_0 = arith.constant 0 : i32
    %c0_i32_1 = arith.constant 0 : i32
    return %c0_i32, %c0_i32_0 : i32, i32
  }
  func.func @transform_3(%arg0: i32) -> (i32, i32) {
    %c0_i32 = arith.constant 0 : i32
    %c0_i32_0 = arith.constant 0 : i32
    return %arg0, %c0_i32 : i32, i32
  }
}

module attributes {stable_mosaic.version = 11 : i64} {
  func.func @kernel(%arg0: i32, %arg1: memref<1x20x32xf32, #tpu.memory_space<vmem>>, %arg2: memref<1x8x16xf32, #tpu.memory_space<vmem>>, %arg3: memref<1x8x16xf32, #tpu.memory_space<vmem>>, %arg4: memref<1x8x16xf32, #tpu.memory_space<vmem>>, %arg5: memref<1x8x32xf32, #tpu.memory_space<vmem>>) attributes {dimension_semantics = [#tpu.dimension_semantics<parallel>], iteration_bounds = array<i64: 2>, scalar_prefetch = 0 : i64, scratch_operands = 0 : i64, tpu.core_type = #tpu.core_type<tc>, window_params = [{transform_indices = @transform_0, window_bounds = array<i64: 1, 20, 32>}, {transform_indices = @transform_1, window_bounds = array<i64: 1, 8, 16>}, {transform_indices = @transform_2, window_bounds = array<i64: 1, 8, 16>}, {transform_indices = @transform_3, window_bounds = array<i64: 1, 8, 16>}, {transform_indices = @transform_4, window_bounds = array<i64: 1, 8, 32>}]} {
    %c0 = arith.constant 0 : index
    %c0_0 = arith.constant 0 : index
    %c0_1 = arith.constant 0 : index
    %0 = vector.load %arg1[%c0, %c0_0, %c0_1] : memref<1x20x32xf32, #tpu.memory_space<vmem>>, vector<1x20x32xf32>
    %1 = vector.shape_cast %0 : vector<1x20x32xf32> to vector<20x32xf32>
    %c0_2 = arith.constant 0 : index
    %c0_3 = arith.constant 0 : index
    %c0_4 = arith.constant 0 : index
    %2 = vector.load %arg2[%c0_2, %c0_3, %c0_4] : memref<1x8x16xf32, #tpu.memory_space<vmem>>, vector<1x8x16xf32>
    %3 = vector.shape_cast %2 : vector<1x8x16xf32> to vector<8x16xf32>
    %c0_5 = arith.constant 0 : index
    %c0_6 = arith.constant 0 : index
    %c0_7 = arith.constant 0 : index
    %4 = vector.load %arg3[%c0_5, %c0_6, %c0_7] : memref<1x8x16xf32, #tpu.memory_space<vmem>>, vector<1x8x16xf32>
    %5 = vector.shape_cast %4 : vector<1x8x16xf32> to vector<8x16xf32>
    %c0_8 = arith.constant 0 : index
    %c0_9 = arith.constant 0 : index
    %c0_10 = arith.constant 0 : index
    %6 = vector.load %arg4[%c0_8, %c0_9, %c0_10] : memref<1x8x16xf32, #tpu.memory_space<vmem>>, vector<1x8x16xf32>
    %7 = vector.shape_cast %6 : vector<1x8x16xf32> to vector<8x16xf32>
    %8 = math.floor %3 : vector<8x16xf32>
    %9 = math.floor %5 : vector<8x16xf32>
    %10 = arith.subf %3, %8 : vector<8x16xf32>
    %11 = arith.subf %5, %9 : vector<8x16xf32>
    %12 = arith.fptosi %8 : vector<8x16xf32> to vector<8x16xi32>
    %13 = arith.fptosi %9 : vector<8x16xf32> to vector<8x16xi32>
    %14 = tpu.iota {dimensions = array<i32: 1>} : vector<8x16xi32>
    %15 = tpu.iota {dimensions = array<i32: 1>} : vector<8x4xi32>
    %16 = vector.extract_strided_slice %7 {offsets = [0, 0], sizes = [8, 4], strides = [1, 1]} : vector<8x16xf32> to vector<8x4xf32>
    %cst = arith.constant dense<0xFF800000> : vector<8xf32>
    %17 = vector.multi_reduction <maximumf>, %16, %cst [1] : vector<8x4xf32> to vector<8xf32>
    %18 = vector.shape_cast %17 : vector<8xf32> to vector<8x1xf32>
    %19 = vector.broadcast %18 : vector<8x1xf32> to vector<8x4xf32>
    %20 = arith.subf %16, %19 : vector<8x4xf32>
    %21 = math.exp %20 : vector<8x4xf32>
    %cst_11 = arith.constant dense<0.000000e+00> : vector<8xf32>
    %22 = vector.multi_reduction <add>, %21, %cst_11 [1] : vector<8x4xf32> to vector<8xf32>
    %23 = vector.shape_cast %22 : vector<8xf32> to vector<8x1xf32>
    %24 = vector.broadcast %23 : vector<8x1xf32> to vector<8x4xf32>
    %25 = arith.divf %21, %24 : vector<8x4xf32>
    %cst_12 = arith.constant 0.000000e+00 : f32
    %26 = vector.broadcast %cst_12 : f32 to vector<8x8xf32>
    %27 = vector.extract_strided_slice %12 {offsets = [0, 0], sizes = [8, 2], strides = [1, 1]} : vector<8x16xi32> to vector<8x2xi32>
    %28 = vector.extract_strided_slice %13 {offsets = [0, 0], sizes = [8, 2], strides = [1, 1]} : vector<8x16xi32> to vector<8x2xi32>
    %29 = vector.extract_strided_slice %10 {offsets = [0, 0], sizes = [8, 2], strides = [1, 1]} : vector<8x16xf32> to vector<8x2xf32>
    %30 = vector.extract_strided_slice %11 {offsets = [0, 0], sizes = [8, 2], strides = [1, 1]} : vector<8x16xf32> to vector<8x2xf32>
    %31 = vector.extract_strided_slice %25 {offsets = [0, 0], sizes = [8, 2], strides = [1, 1]} : vector<8x4xf32> to vector<8x2xf32>
    %cst_13 = arith.constant 0.000000e+00 : f32
    %32 = vector.broadcast %cst_13 : f32 to vector<8x16xf32>
    %cst_14 = arith.constant 1.000000e+00 : f32
    %33 = vector.broadcast %cst_14 : f32 to vector<8x2xf32>
    %34 = arith.subf %33, %30 : vector<8x2xf32>
    %c0_i32 = arith.constant 0 : i32
    %35 = vector.broadcast %c0_i32 : i32 to vector<8x2xi32>
    %36 = arith.addi %28, %35 : vector<8x2xi32>
    %cst_15 = arith.constant 1.000000e+00 : f32
    %37 = vector.broadcast %cst_15 : f32 to vector<8x2xf32>
    %38 = arith.subf %37, %29 : vector<8x2xf32>
    %c0_i32_16 = arith.constant 0 : i32
    %39 = vector.broadcast %c0_i32_16 : i32 to vector<8x2xi32>
    %40 = arith.addi %27, %39 : vector<8x2xi32>
    %c0_i32_17 = arith.constant 0 : i32
    %41 = vector.broadcast %c0_i32_17 : i32 to vector<8x2xi32>
    %42 = arith.cmpi sge, %40, %41 : vector<8x2xi32>
    %c4_i32 = arith.constant 4 : i32
    %43 = vector.broadcast %c4_i32 : i32 to vector<8x2xi32>
    %44 = arith.cmpi slt, %40, %43 : vector<8x2xi32>
    %45 = arith.andi %42, %44 : vector<8x2xi1>
    %c0_i32_18 = arith.constant 0 : i32
    %46 = vector.broadcast %c0_i32_18 : i32 to vector<8x2xi32>
    %47 = arith.cmpi sge, %36, %46 : vector<8x2xi32>
    %48 = arith.andi %45, %47 : vector<8x2xi1>
    %c4_i32_19 = arith.constant 4 : i32
    %49 = vector.broadcast %c4_i32_19 : i32 to vector<8x2xi32>
    %50 = arith.cmpi slt, %36, %49 : vector<8x2xi32>
    %51 = arith.andi %48, %50 : vector<8x2xi1>
    %52 = arith.mulf %38, %34 : vector<8x2xf32>
    %53 = arith.mulf %52, %31 : vector<8x2xf32>
    %cst_20 = arith.constant 0.000000e+00 : f32
    %54 = vector.broadcast %cst_20 : f32 to vector<8x2xf32>
    %55 = arith.select %51, %53, %54 : vector<8x2xi1>, vector<8x2xf32>
    %c4_i32_21 = arith.constant 4 : i32
    %56 = vector.broadcast %c4_i32_21 : i32 to vector<8x2xi32>
    %57 = arith.muli %36, %56 : vector<8x2xi32>
    %58 = arith.addi %57, %40 : vector<8x2xi32>
    %59 = vector.extract_strided_slice %58 {offsets = [0, 0], sizes = [8, 1], strides = [1, 1]} : vector<8x2xi32> to vector<8x1xi32>
    %60 = vector.broadcast %59 : vector<8x1xi32> to vector<8x16xi32>
    %61 = arith.cmpi eq, %14, %60 : vector<8x16xi32>
    %62 = vector.extract_strided_slice %55 {offsets = [0, 0], sizes = [8, 1], strides = [1, 1]} : vector<8x2xf32> to vector<8x1xf32>
    %cst_22 = arith.constant 0.000000e+00 : f32
    %63 = vector.shape_cast %62 : vector<8x1xf32> to vector<8x1xf32>
    %64 = vector.broadcast %63 : vector<8x1xf32> to vector<8x16xf32>
    %65 = vector.broadcast %cst_22 : f32 to vector<8x16xf32>
    %66 = arith.select %61, %64, %65 : vector<8x16xi1>, vector<8x16xf32>
    %67 = arith.addf %32, %66 : vector<8x16xf32>
    %68 = vector.extract_strided_slice %58 {offsets = [0, 1], sizes = [8, 1], strides = [1, 1]} : vector<8x2xi32> to vector<8x1xi32>
    %69 = vector.broadcast %68 : vector<8x1xi32> to vector<8x16xi32>
    %70 = arith.cmpi eq, %14, %69 : vector<8x16xi32>
    %71 = vector.extract_strided_slice %55 {offsets = [0, 1], sizes = [8, 1], strides = [1, 1]} : vector<8x2xf32> to vector<8x1xf32>
    %cst_23 = arith.constant 0.000000e+00 : f32
    %72 = vector.shape_cast %71 : vector<8x1xf32> to vector<8x1xf32>
    %73 = vector.broadcast %72 : vector<8x1xf32> to vector<8x16xf32>
    %74 = vector.broadcast %cst_23 : f32 to vector<8x16xf32>
    %75 = arith.select %70, %73, %74 : vector<8x16xi1>, vector<8x16xf32>
    %76 = arith.addf %67, %75 : vector<8x16xf32>
    %c1_i32 = arith.constant 1 : i32
    %77 = vector.broadcast %c1_i32 : i32 to vector<8x2xi32>
    %78 = arith.addi %27, %77 : vector<8x2xi32>
    %c0_i32_24 = arith.constant 0 : i32
    %79 = vector.broadcast %c0_i32_24 : i32 to vector<8x2xi32>
    %80 = arith.cmpi sge, %78, %79 : vector<8x2xi32>
    %c4_i32_25 = arith.constant 4 : i32
    %81 = vector.broadcast %c4_i32_25 : i32 to vector<8x2xi32>
    %82 = arith.cmpi slt, %78, %81 : vector<8x2xi32>
    %83 = arith.andi %80, %82 : vector<8x2xi1>
    %c0_i32_26 = arith.constant 0 : i32
    %84 = vector.broadcast %c0_i32_26 : i32 to vector<8x2xi32>
    %85 = arith.cmpi sge, %36, %84 : vector<8x2xi32>
    %86 = arith.andi %83, %85 : vector<8x2xi1>
    %c4_i32_27 = arith.constant 4 : i32
    %87 = vector.broadcast %c4_i32_27 : i32 to vector<8x2xi32>
    %88 = arith.cmpi slt, %36, %87 : vector<8x2xi32>
    %89 = arith.andi %86, %88 : vector<8x2xi1>
    %90 = arith.mulf %29, %34 : vector<8x2xf32>
    %91 = arith.mulf %90, %31 : vector<8x2xf32>
    %cst_28 = arith.constant 0.000000e+00 : f32
    %92 = vector.broadcast %cst_28 : f32 to vector<8x2xf32>
    %93 = arith.select %89, %91, %92 : vector<8x2xi1>, vector<8x2xf32>
    %c4_i32_29 = arith.constant 4 : i32
    %94 = vector.broadcast %c4_i32_29 : i32 to vector<8x2xi32>
    %95 = arith.muli %36, %94 : vector<8x2xi32>
    %96 = arith.addi %95, %78 : vector<8x2xi32>
    %97 = vector.extract_strided_slice %96 {offsets = [0, 0], sizes = [8, 1], strides = [1, 1]} : vector<8x2xi32> to vector<8x1xi32>
    %98 = vector.broadcast %97 : vector<8x1xi32> to vector<8x16xi32>
    %99 = arith.cmpi eq, %14, %98 : vector<8x16xi32>
    %100 = vector.extract_strided_slice %93 {offsets = [0, 0], sizes = [8, 1], strides = [1, 1]} : vector<8x2xf32> to vector<8x1xf32>
    %cst_30 = arith.constant 0.000000e+00 : f32
    %101 = vector.shape_cast %100 : vector<8x1xf32> to vector<8x1xf32>
    %102 = vector.broadcast %101 : vector<8x1xf32> to vector<8x16xf32>
    %103 = vector.broadcast %cst_30 : f32 to vector<8x16xf32>
    %104 = arith.select %99, %102, %103 : vector<8x16xi1>, vector<8x16xf32>
    %105 = arith.addf %76, %104 : vector<8x16xf32>
    %106 = vector.extract_strided_slice %96 {offsets = [0, 1], sizes = [8, 1], strides = [1, 1]} : vector<8x2xi32> to vector<8x1xi32>
    %107 = vector.broadcast %106 : vector<8x1xi32> to vector<8x16xi32>
    %108 = arith.cmpi eq, %14, %107 : vector<8x16xi32>
    %109 = vector.extract_strided_slice %93 {offsets = [0, 1], sizes = [8, 1], strides = [1, 1]} : vector<8x2xf32> to vector<8x1xf32>
    %cst_31 = arith.constant 0.000000e+00 : f32
    %110 = vector.shape_cast %109 : vector<8x1xf32> to vector<8x1xf32>
    %111 = vector.broadcast %110 : vector<8x1xf32> to vector<8x16xf32>
    %112 = vector.broadcast %cst_31 : f32 to vector<8x16xf32>
    %113 = arith.select %108, %111, %112 : vector<8x16xi1>, vector<8x16xf32>
    %114 = arith.addf %105, %113 : vector<8x16xf32>
    %c1_i32_32 = arith.constant 1 : i32
    %115 = vector.broadcast %c1_i32_32 : i32 to vector<8x2xi32>
    %116 = arith.addi %28, %115 : vector<8x2xi32>
    %cst_33 = arith.constant 1.000000e+00 : f32
    %117 = vector.broadcast %cst_33 : f32 to vector<8x2xf32>
    %118 = arith.subf %117, %29 : vector<8x2xf32>
    %c0_i32_34 = arith.constant 0 : i32
    %119 = vector.broadcast %c0_i32_34 : i32 to vector<8x2xi32>
    %120 = arith.addi %27, %119 : vector<8x2xi32>
    %c0_i32_35 = arith.constant 0 : i32
    %121 = vector.broadcast %c0_i32_35 : i32 to vector<8x2xi32>
    %122 = arith.cmpi sge, %120, %121 : vector<8x2xi32>
    %c4_i32_36 = arith.constant 4 : i32
    %123 = vector.broadcast %c4_i32_36 : i32 to vector<8x2xi32>
    %124 = arith.cmpi slt, %120, %123 : vector<8x2xi32>
    %125 = arith.andi %122, %124 : vector<8x2xi1>
    %c0_i32_37 = arith.constant 0 : i32
    %126 = vector.broadcast %c0_i32_37 : i32 to vector<8x2xi32>
    %127 = arith.cmpi sge, %116, %126 : vector<8x2xi32>
    %128 = arith.andi %125, %127 : vector<8x2xi1>
    %c4_i32_38 = arith.constant 4 : i32
    %129 = vector.broadcast %c4_i32_38 : i32 to vector<8x2xi32>
    %130 = arith.cmpi slt, %116, %129 : vector<8x2xi32>
    %131 = arith.andi %128, %130 : vector<8x2xi1>
    %132 = arith.mulf %118, %30 : vector<8x2xf32>
    %133 = arith.mulf %132, %31 : vector<8x2xf32>
    %cst_39 = arith.constant 0.000000e+00 : f32
    %134 = vector.broadcast %cst_39 : f32 to vector<8x2xf32>
    %135 = arith.select %131, %133, %134 : vector<8x2xi1>, vector<8x2xf32>
    %c4_i32_40 = arith.constant 4 : i32
    %136 = vector.broadcast %c4_i32_40 : i32 to vector<8x2xi32>
    %137 = arith.muli %116, %136 : vector<8x2xi32>
    %138 = arith.addi %137, %120 : vector<8x2xi32>
    %139 = vector.extract_strided_slice %138 {offsets = [0, 0], sizes = [8, 1], strides = [1, 1]} : vector<8x2xi32> to vector<8x1xi32>
    %140 = vector.broadcast %139 : vector<8x1xi32> to vector<8x16xi32>
    %141 = arith.cmpi eq, %14, %140 : vector<8x16xi32>
    %142 = vector.extract_strided_slice %135 {offsets = [0, 0], sizes = [8, 1], strides = [1, 1]} : vector<8x2xf32> to vector<8x1xf32>
    %cst_41 = arith.constant 0.000000e+00 : f32
    %143 = vector.shape_cast %142 : vector<8x1xf32> to vector<8x1xf32>
    %144 = vector.broadcast %143 : vector<8x1xf32> to vector<8x16xf32>
    %145 = vector.broadcast %cst_41 : f32 to vector<8x16xf32>
    %146 = arith.select %141, %144, %145 : vector<8x16xi1>, vector<8x16xf32>
    %147 = arith.addf %114, %146 : vector<8x16xf32>
    %148 = vector.extract_strided_slice %138 {offsets = [0, 1], sizes = [8, 1], strides = [1, 1]} : vector<8x2xi32> to vector<8x1xi32>
    %149 = vector.broadcast %148 : vector<8x1xi32> to vector<8x16xi32>
    %150 = arith.cmpi eq, %14, %149 : vector<8x16xi32>
    %151 = vector.extract_strided_slice %135 {offsets = [0, 1], sizes = [8, 1], strides = [1, 1]} : vector<8x2xf32> to vector<8x1xf32>
    %cst_42 = arith.constant 0.000000e+00 : f32
    %152 = vector.shape_cast %151 : vector<8x1xf32> to vector<8x1xf32>
    %153 = vector.broadcast %152 : vector<8x1xf32> to vector<8x16xf32>
    %154 = vector.broadcast %cst_42 : f32 to vector<8x16xf32>
    %155 = arith.select %150, %153, %154 : vector<8x16xi1>, vector<8x16xf32>
    %156 = arith.addf %147, %155 : vector<8x16xf32>
    %c1_i32_43 = arith.constant 1 : i32
    %157 = vector.broadcast %c1_i32_43 : i32 to vector<8x2xi32>
    %158 = arith.addi %27, %157 : vector<8x2xi32>
    %c0_i32_44 = arith.constant 0 : i32
    %159 = vector.broadcast %c0_i32_44 : i32 to vector<8x2xi32>
    %160 = arith.cmpi sge, %158, %159 : vector<8x2xi32>
    %c4_i32_45 = arith.constant 4 : i32
    %161 = vector.broadcast %c4_i32_45 : i32 to vector<8x2xi32>
    %162 = arith.cmpi slt, %158, %161 : vector<8x2xi32>
    %163 = arith.andi %160, %162 : vector<8x2xi1>
    %c0_i32_46 = arith.constant 0 : i32
    %164 = vector.broadcast %c0_i32_46 : i32 to vector<8x2xi32>
    %165 = arith.cmpi sge, %116, %164 : vector<8x2xi32>
    %166 = arith.andi %163, %165 : vector<8x2xi1>
    %c4_i32_47 = arith.constant 4 : i32
    %167 = vector.broadcast %c4_i32_47 : i32 to vector<8x2xi32>
    %168 = arith.cmpi slt, %116, %167 : vector<8x2xi32>
    %169 = arith.andi %166, %168 : vector<8x2xi1>
    %170 = arith.mulf %29, %30 : vector<8x2xf32>
    %171 = arith.mulf %170, %31 : vector<8x2xf32>
    %cst_48 = arith.constant 0.000000e+00 : f32
    %172 = vector.broadcast %cst_48 : f32 to vector<8x2xf32>
    %173 = arith.select %169, %171, %172 : vector<8x2xi1>, vector<8x2xf32>
    %c4_i32_49 = arith.constant 4 : i32
    %174 = vector.broadcast %c4_i32_49 : i32 to vector<8x2xi32>
    %175 = arith.muli %116, %174 : vector<8x2xi32>
    %176 = arith.addi %175, %158 : vector<8x2xi32>
    %177 = vector.extract_strided_slice %176 {offsets = [0, 0], sizes = [8, 1], strides = [1, 1]} : vector<8x2xi32> to vector<8x1xi32>
    %178 = vector.broadcast %177 : vector<8x1xi32> to vector<8x16xi32>
    %179 = arith.cmpi eq, %14, %178 : vector<8x16xi32>
    %180 = vector.extract_strided_slice %173 {offsets = [0, 0], sizes = [8, 1], strides = [1, 1]} : vector<8x2xf32> to vector<8x1xf32>
    %cst_50 = arith.constant 0.000000e+00 : f32
    %181 = vector.shape_cast %180 : vector<8x1xf32> to vector<8x1xf32>
    %182 = vector.broadcast %181 : vector<8x1xf32> to vector<8x16xf32>
    %183 = vector.broadcast %cst_50 : f32 to vector<8x16xf32>
    %184 = arith.select %179, %182, %183 : vector<8x16xi1>, vector<8x16xf32>
    %185 = arith.addf %156, %184 : vector<8x16xf32>
    %186 = vector.extract_strided_slice %176 {offsets = [0, 1], sizes = [8, 1], strides = [1, 1]} : vector<8x2xi32> to vector<8x1xi32>
    %187 = vector.broadcast %186 : vector<8x1xi32> to vector<8x16xi32>
    %188 = arith.cmpi eq, %14, %187 : vector<8x16xi32>
    %189 = vector.extract_strided_slice %173 {offsets = [0, 1], sizes = [8, 1], strides = [1, 1]} : vector<8x2xf32> to vector<8x1xf32>
    %cst_51 = arith.constant 0.000000e+00 : f32
    %190 = vector.shape_cast %189 : vector<8x1xf32> to vector<8x1xf32>
    %191 = vector.broadcast %190 : vector<8x1xf32> to vector<8x16xf32>
    %192 = vector.broadcast %cst_51 : f32 to vector<8x16xf32>
    %193 = arith.select %188, %191, %192 : vector<8x16xi1>, vector<8x16xf32>
    %194 = arith.addf %185, %193 : vector<8x16xf32>
    %195 = vector.extract_strided_slice %1 {offsets = [0, 0], sizes = [16, 8], strides = [1, 1]} : vector<20x32xf32> to vector<16x8xf32>
    %cst_52 = arith.constant dense<0.000000e+00> : vector<8x8xf32>
    %196 = tpu.matmul %194, %195, %cst_52 {dimension_numbers = #tpu.dot_dimension_numbers<[1], [0], [0], [1], [0, 0, 1, 1], [], []>} : vector<8x16xf32>, vector<16x8xf32>, vector<8x8xf32> -> vector<8x8xf32>
    %197 = arith.addf %26, %196 : vector<8x8xf32>
    %198 = vector.extract_strided_slice %12 {offsets = [0, 2], sizes = [8, 2], strides = [1, 1]} : vector<8x16xi32> to vector<8x2xi32>
    %199 = vector.extract_strided_slice %13 {offsets = [0, 2], sizes = [8, 2], strides = [1, 1]} : vector<8x16xi32> to vector<8x2xi32>
    %200 = vector.extract_strided_slice %10 {offsets = [0, 2], sizes = [8, 2], strides = [1, 1]} : vector<8x16xf32> to vector<8x2xf32>
    %201 = vector.extract_strided_slice %11 {offsets = [0, 2], sizes = [8, 2], strides = [1, 1]} : vector<8x16xf32> to vector<8x2xf32>
    %202 = vector.extract_strided_slice %25 {offsets = [0, 2], sizes = [8, 2], strides = [1, 1]} : vector<8x4xf32> to vector<8x2xf32>
    %cst_53 = arith.constant 0.000000e+00 : f32
    %203 = vector.broadcast %cst_53 : f32 to vector<8x4xf32>
    %cst_54 = arith.constant 1.000000e+00 : f32
    %204 = vector.broadcast %cst_54 : f32 to vector<8x2xf32>
    %205 = arith.subf %204, %201 : vector<8x2xf32>
    %c0_i32_55 = arith.constant 0 : i32
    %206 = vector.broadcast %c0_i32_55 : i32 to vector<8x2xi32>
    %207 = arith.addi %199, %206 : vector<8x2xi32>
    %cst_56 = arith.constant 1.000000e+00 : f32
    %208 = vector.broadcast %cst_56 : f32 to vector<8x2xf32>
    %209 = arith.subf %208, %200 : vector<8x2xf32>
    %c0_i32_57 = arith.constant 0 : i32
    %210 = vector.broadcast %c0_i32_57 : i32 to vector<8x2xi32>
    %211 = arith.addi %198, %210 : vector<8x2xi32>
    %c0_i32_58 = arith.constant 0 : i32
    %212 = vector.broadcast %c0_i32_58 : i32 to vector<8x2xi32>
    %213 = arith.cmpi sge, %211, %212 : vector<8x2xi32>
    %c2_i32 = arith.constant 2 : i32
    %214 = vector.broadcast %c2_i32 : i32 to vector<8x2xi32>
    %215 = arith.cmpi slt, %211, %214 : vector<8x2xi32>
    %216 = arith.andi %213, %215 : vector<8x2xi1>
    %c0_i32_59 = arith.constant 0 : i32
    %217 = vector.broadcast %c0_i32_59 : i32 to vector<8x2xi32>
    %218 = arith.cmpi sge, %207, %217 : vector<8x2xi32>
    %219 = arith.andi %216, %218 : vector<8x2xi1>
    %c2_i32_60 = arith.constant 2 : i32
    %220 = vector.broadcast %c2_i32_60 : i32 to vector<8x2xi32>
    %221 = arith.cmpi slt, %207, %220 : vector<8x2xi32>
    %222 = arith.andi %219, %221 : vector<8x2xi1>
    %223 = arith.mulf %209, %205 : vector<8x2xf32>
    %224 = arith.mulf %223, %202 : vector<8x2xf32>
    %cst_61 = arith.constant 0.000000e+00 : f32
    %225 = vector.broadcast %cst_61 : f32 to vector<8x2xf32>
    %226 = arith.select %222, %224, %225 : vector<8x2xi1>, vector<8x2xf32>
    %c2_i32_62 = arith.constant 2 : i32
    %227 = vector.broadcast %c2_i32_62 : i32 to vector<8x2xi32>
    %228 = arith.muli %207, %227 : vector<8x2xi32>
    %229 = arith.addi %228, %211 : vector<8x2xi32>
    %230 = vector.extract_strided_slice %229 {offsets = [0, 0], sizes = [8, 1], strides = [1, 1]} : vector<8x2xi32> to vector<8x1xi32>
    %231 = vector.broadcast %230 : vector<8x1xi32> to vector<8x4xi32>
    %232 = arith.cmpi eq, %15, %231 : vector<8x4xi32>
    %233 = vector.extract_strided_slice %226 {offsets = [0, 0], sizes = [8, 1], strides = [1, 1]} : vector<8x2xf32> to vector<8x1xf32>
    %cst_63 = arith.constant 0.000000e+00 : f32
    %234 = vector.shape_cast %233 : vector<8x1xf32> to vector<8x1xf32>
    %235 = vector.broadcast %234 : vector<8x1xf32> to vector<8x4xf32>
    %236 = vector.broadcast %cst_63 : f32 to vector<8x4xf32>
    %237 = arith.select %232, %235, %236 : vector<8x4xi1>, vector<8x4xf32>
    %238 = arith.addf %203, %237 : vector<8x4xf32>
    %239 = vector.extract_strided_slice %229 {offsets = [0, 1], sizes = [8, 1], strides = [1, 1]} : vector<8x2xi32> to vector<8x1xi32>
    %240 = vector.broadcast %239 : vector<8x1xi32> to vector<8x4xi32>
    %241 = arith.cmpi eq, %15, %240 : vector<8x4xi32>
    %242 = vector.extract_strided_slice %226 {offsets = [0, 1], sizes = [8, 1], strides = [1, 1]} : vector<8x2xf32> to vector<8x1xf32>
    %cst_64 = arith.constant 0.000000e+00 : f32
    %243 = vector.shape_cast %242 : vector<8x1xf32> to vector<8x1xf32>
    %244 = vector.broadcast %243 : vector<8x1xf32> to vector<8x4xf32>
    %245 = vector.broadcast %cst_64 : f32 to vector<8x4xf32>
    %246 = arith.select %241, %244, %245 : vector<8x4xi1>, vector<8x4xf32>
    %247 = arith.addf %238, %246 : vector<8x4xf32>
    %c1_i32_65 = arith.constant 1 : i32
    %248 = vector.broadcast %c1_i32_65 : i32 to vector<8x2xi32>
    %249 = arith.addi %198, %248 : vector<8x2xi32>
    %c0_i32_66 = arith.constant 0 : i32
    %250 = vector.broadcast %c0_i32_66 : i32 to vector<8x2xi32>
    %251 = arith.cmpi sge, %249, %250 : vector<8x2xi32>
    %c2_i32_67 = arith.constant 2 : i32
    %252 = vector.broadcast %c2_i32_67 : i32 to vector<8x2xi32>
    %253 = arith.cmpi slt, %249, %252 : vector<8x2xi32>
    %254 = arith.andi %251, %253 : vector<8x2xi1>
    %c0_i32_68 = arith.constant 0 : i32
    %255 = vector.broadcast %c0_i32_68 : i32 to vector<8x2xi32>
    %256 = arith.cmpi sge, %207, %255 : vector<8x2xi32>
    %257 = arith.andi %254, %256 : vector<8x2xi1>
    %c2_i32_69 = arith.constant 2 : i32
    %258 = vector.broadcast %c2_i32_69 : i32 to vector<8x2xi32>
    %259 = arith.cmpi slt, %207, %258 : vector<8x2xi32>
    %260 = arith.andi %257, %259 : vector<8x2xi1>
    %261 = arith.mulf %200, %205 : vector<8x2xf32>
    %262 = arith.mulf %261, %202 : vector<8x2xf32>
    %cst_70 = arith.constant 0.000000e+00 : f32
    %263 = vector.broadcast %cst_70 : f32 to vector<8x2xf32>
    %264 = arith.select %260, %262, %263 : vector<8x2xi1>, vector<8x2xf32>
    %c2_i32_71 = arith.constant 2 : i32
    %265 = vector.broadcast %c2_i32_71 : i32 to vector<8x2xi32>
    %266 = arith.muli %207, %265 : vector<8x2xi32>
    %267 = arith.addi %266, %249 : vector<8x2xi32>
    %268 = vector.extract_strided_slice %267 {offsets = [0, 0], sizes = [8, 1], strides = [1, 1]} : vector<8x2xi32> to vector<8x1xi32>
    %269 = vector.broadcast %268 : vector<8x1xi32> to vector<8x4xi32>
    %270 = arith.cmpi eq, %15, %269 : vector<8x4xi32>
    %271 = vector.extract_strided_slice %264 {offsets = [0, 0], sizes = [8, 1], strides = [1, 1]} : vector<8x2xf32> to vector<8x1xf32>
    %cst_72 = arith.constant 0.000000e+00 : f32
    %272 = vector.shape_cast %271 : vector<8x1xf32> to vector<8x1xf32>
    %273 = vector.broadcast %272 : vector<8x1xf32> to vector<8x4xf32>
    %274 = vector.broadcast %cst_72 : f32 to vector<8x4xf32>
    %275 = arith.select %270, %273, %274 : vector<8x4xi1>, vector<8x4xf32>
    %276 = arith.addf %247, %275 : vector<8x4xf32>
    %277 = vector.extract_strided_slice %267 {offsets = [0, 1], sizes = [8, 1], strides = [1, 1]} : vector<8x2xi32> to vector<8x1xi32>
    %278 = vector.broadcast %277 : vector<8x1xi32> to vector<8x4xi32>
    %279 = arith.cmpi eq, %15, %278 : vector<8x4xi32>
    %280 = vector.extract_strided_slice %264 {offsets = [0, 1], sizes = [8, 1], strides = [1, 1]} : vector<8x2xf32> to vector<8x1xf32>
    %cst_73 = arith.constant 0.000000e+00 : f32
    %281 = vector.shape_cast %280 : vector<8x1xf32> to vector<8x1xf32>
    %282 = vector.broadcast %281 : vector<8x1xf32> to vector<8x4xf32>
    %283 = vector.broadcast %cst_73 : f32 to vector<8x4xf32>
    %284 = arith.select %279, %282, %283 : vector<8x4xi1>, vector<8x4xf32>
    %285 = arith.addf %276, %284 : vector<8x4xf32>
    %c1_i32_74 = arith.constant 1 : i32
    %286 = vector.broadcast %c1_i32_74 : i32 to vector<8x2xi32>
    %287 = arith.addi %199, %286 : vector<8x2xi32>
    %cst_75 = arith.constant 1.000000e+00 : f32
    %288 = vector.broadcast %cst_75 : f32 to vector<8x2xf32>
    %289 = arith.subf %288, %200 : vector<8x2xf32>
    %c0_i32_76 = arith.constant 0 : i32
    %290 = vector.broadcast %c0_i32_76 : i32 to vector<8x2xi32>
    %291 = arith.addi %198, %290 : vector<8x2xi32>
    %c0_i32_77 = arith.constant 0 : i32
    %292 = vector.broadcast %c0_i32_77 : i32 to vector<8x2xi32>
    %293 = arith.cmpi sge, %291, %292 : vector<8x2xi32>
    %c2_i32_78 = arith.constant 2 : i32
    %294 = vector.broadcast %c2_i32_78 : i32 to vector<8x2xi32>
    %295 = arith.cmpi slt, %291, %294 : vector<8x2xi32>
    %296 = arith.andi %293, %295 : vector<8x2xi1>
    %c0_i32_79 = arith.constant 0 : i32
    %297 = vector.broadcast %c0_i32_79 : i32 to vector<8x2xi32>
    %298 = arith.cmpi sge, %287, %297 : vector<8x2xi32>
    %299 = arith.andi %296, %298 : vector<8x2xi1>
    %c2_i32_80 = arith.constant 2 : i32
    %300 = vector.broadcast %c2_i32_80 : i32 to vector<8x2xi32>
    %301 = arith.cmpi slt, %287, %300 : vector<8x2xi32>
    %302 = arith.andi %299, %301 : vector<8x2xi1>
    %303 = arith.mulf %289, %201 : vector<8x2xf32>
    %304 = arith.mulf %303, %202 : vector<8x2xf32>
    %cst_81 = arith.constant 0.000000e+00 : f32
    %305 = vector.broadcast %cst_81 : f32 to vector<8x2xf32>
    %306 = arith.select %302, %304, %305 : vector<8x2xi1>, vector<8x2xf32>
    %c2_i32_82 = arith.constant 2 : i32
    %307 = vector.broadcast %c2_i32_82 : i32 to vector<8x2xi32>
    %308 = arith.muli %287, %307 : vector<8x2xi32>
    %309 = arith.addi %308, %291 : vector<8x2xi32>
    %310 = vector.extract_strided_slice %309 {offsets = [0, 0], sizes = [8, 1], strides = [1, 1]} : vector<8x2xi32> to vector<8x1xi32>
    %311 = vector.broadcast %310 : vector<8x1xi32> to vector<8x4xi32>
    %312 = arith.cmpi eq, %15, %311 : vector<8x4xi32>
    %313 = vector.extract_strided_slice %306 {offsets = [0, 0], sizes = [8, 1], strides = [1, 1]} : vector<8x2xf32> to vector<8x1xf32>
    %cst_83 = arith.constant 0.000000e+00 : f32
    %314 = vector.shape_cast %313 : vector<8x1xf32> to vector<8x1xf32>
    %315 = vector.broadcast %314 : vector<8x1xf32> to vector<8x4xf32>
    %316 = vector.broadcast %cst_83 : f32 to vector<8x4xf32>
    %317 = arith.select %312, %315, %316 : vector<8x4xi1>, vector<8x4xf32>
    %318 = arith.addf %285, %317 : vector<8x4xf32>
    %319 = vector.extract_strided_slice %309 {offsets = [0, 1], sizes = [8, 1], strides = [1, 1]} : vector<8x2xi32> to vector<8x1xi32>
    %320 = vector.broadcast %319 : vector<8x1xi32> to vector<8x4xi32>
    %321 = arith.cmpi eq, %15, %320 : vector<8x4xi32>
    %322 = vector.extract_strided_slice %306 {offsets = [0, 1], sizes = [8, 1], strides = [1, 1]} : vector<8x2xf32> to vector<8x1xf32>
    %cst_84 = arith.constant 0.000000e+00 : f32
    %323 = vector.shape_cast %322 : vector<8x1xf32> to vector<8x1xf32>
    %324 = vector.broadcast %323 : vector<8x1xf32> to vector<8x4xf32>
    %325 = vector.broadcast %cst_84 : f32 to vector<8x4xf32>
    %326 = arith.select %321, %324, %325 : vector<8x4xi1>, vector<8x4xf32>
    %327 = arith.addf %318, %326 : vector<8x4xf32>
    %c1_i32_85 = arith.constant 1 : i32
    %328 = vector.broadcast %c1_i32_85 : i32 to vector<8x2xi32>
    %329 = arith.addi %198, %328 : vector<8x2xi32>
    %c0_i32_86 = arith.constant 0 : i32
    %330 = vector.broadcast %c0_i32_86 : i32 to vector<8x2xi32>
    %331 = arith.cmpi sge, %329, %330 : vector<8x2xi32>
    %c2_i32_87 = arith.constant 2 : i32
    %332 = vector.broadcast %c2_i32_87 : i32 to vector<8x2xi32>
    %333 = arith.cmpi slt, %329, %332 : vector<8x2xi32>
    %334 = arith.andi %331, %333 : vector<8x2xi1>
    %c0_i32_88 = arith.constant 0 : i32
    %335 = vector.broadcast %c0_i32_88 : i32 to vector<8x2xi32>
    %336 = arith.cmpi sge, %287, %335 : vector<8x2xi32>
    %337 = arith.andi %334, %336 : vector<8x2xi1>
    %c2_i32_89 = arith.constant 2 : i32
    %338 = vector.broadcast %c2_i32_89 : i32 to vector<8x2xi32>
    %339 = arith.cmpi slt, %287, %338 : vector<8x2xi32>
    %340 = arith.andi %337, %339 : vector<8x2xi1>
    %341 = arith.mulf %200, %201 : vector<8x2xf32>
    %342 = arith.mulf %341, %202 : vector<8x2xf32>
    %cst_90 = arith.constant 0.000000e+00 : f32
    %343 = vector.broadcast %cst_90 : f32 to vector<8x2xf32>
    %344 = arith.select %340, %342, %343 : vector<8x2xi1>, vector<8x2xf32>
    %c2_i32_91 = arith.constant 2 : i32
    %345 = vector.broadcast %c2_i32_91 : i32 to vector<8x2xi32>
    %346 = arith.muli %287, %345 : vector<8x2xi32>
    %347 = arith.addi %346, %329 : vector<8x2xi32>
    %348 = vector.extract_strided_slice %347 {offsets = [0, 0], sizes = [8, 1], strides = [1, 1]} : vector<8x2xi32> to vector<8x1xi32>
    %349 = vector.broadcast %348 : vector<8x1xi32> to vector<8x4xi32>
    %350 = arith.cmpi eq, %15, %349 : vector<8x4xi32>
    %351 = vector.extract_strided_slice %344 {offsets = [0, 0], sizes = [8, 1], strides = [1, 1]} : vector<8x2xf32> to vector<8x1xf32>
    %cst_92 = arith.constant 0.000000e+00 : f32
    %352 = vector.shape_cast %351 : vector<8x1xf32> to vector<8x1xf32>
    %353 = vector.broadcast %352 : vector<8x1xf32> to vector<8x4xf32>
    %354 = vector.broadcast %cst_92 : f32 to vector<8x4xf32>
    %355 = arith.select %350, %353, %354 : vector<8x4xi1>, vector<8x4xf32>
    %356 = arith.addf %327, %355 : vector<8x4xf32>
    %357 = vector.extract_strided_slice %347 {offsets = [0, 1], sizes = [8, 1], strides = [1, 1]} : vector<8x2xi32> to vector<8x1xi32>
    %358 = vector.broadcast %357 : vector<8x1xi32> to vector<8x4xi32>
    %359 = arith.cmpi eq, %15, %358 : vector<8x4xi32>
    %360 = vector.extract_strided_slice %344 {offsets = [0, 1], sizes = [8, 1], strides = [1, 1]} : vector<8x2xf32> to vector<8x1xf32>
    %cst_93 = arith.constant 0.000000e+00 : f32
    %361 = vector.shape_cast %360 : vector<8x1xf32> to vector<8x1xf32>
    %362 = vector.broadcast %361 : vector<8x1xf32> to vector<8x4xf32>
    %363 = vector.broadcast %cst_93 : f32 to vector<8x4xf32>
    %364 = arith.select %359, %362, %363 : vector<8x4xi1>, vector<8x4xf32>
    %365 = arith.addf %356, %364 : vector<8x4xf32>
    %366 = vector.extract_strided_slice %1 {offsets = [16, 0], sizes = [4, 8], strides = [1, 1]} : vector<20x32xf32> to vector<4x8xf32>
    %cst_94 = arith.constant dense<0.000000e+00> : vector<8x8xf32>
    %367 = tpu.matmul %365, %366, %cst_94 {dimension_numbers = #tpu.dot_dimension_numbers<[1], [0], [0], [1], [0, 0, 1, 1], [], []>} : vector<8x4xf32>, vector<4x8xf32>, vector<8x8xf32> -> vector<8x8xf32>
    %368 = arith.addf %197, %367 : vector<8x8xf32>
    %369 = vector.extract_strided_slice %7 {offsets = [0, 4], sizes = [8, 4], strides = [1, 1]} : vector<8x16xf32> to vector<8x4xf32>
    %cst_95 = arith.constant dense<0xFF800000> : vector<8xf32>
    %370 = vector.multi_reduction <maximumf>, %369, %cst_95 [1] : vector<8x4xf32> to vector<8xf32>
    %371 = vector.shape_cast %370 : vector<8xf32> to vector<8x1xf32>
    %372 = vector.broadcast %371 : vector<8x1xf32> to vector<8x4xf32>
    %373 = arith.subf %369, %372 : vector<8x4xf32>
    %374 = math.exp %373 : vector<8x4xf32>
    %cst_96 = arith.constant dense<0.000000e+00> : vector<8xf32>
    %375 = vector.multi_reduction <add>, %374, %cst_96 [1] : vector<8x4xf32> to vector<8xf32>
    %376 = vector.shape_cast %375 : vector<8xf32> to vector<8x1xf32>
    %377 = vector.broadcast %376 : vector<8x1xf32> to vector<8x4xf32>
    %378 = arith.divf %374, %377 : vector<8x4xf32>
    %cst_97 = arith.constant 0.000000e+00 : f32
    %379 = vector.broadcast %cst_97 : f32 to vector<8x8xf32>
    %380 = vector.extract_strided_slice %12 {offsets = [0, 4], sizes = [8, 2], strides = [1, 1]} : vector<8x16xi32> to vector<8x2xi32>
    %381 = vector.extract_strided_slice %13 {offsets = [0, 4], sizes = [8, 2], strides = [1, 1]} : vector<8x16xi32> to vector<8x2xi32>
    %382 = vector.extract_strided_slice %10 {offsets = [0, 4], sizes = [8, 2], strides = [1, 1]} : vector<8x16xf32> to vector<8x2xf32>
    %383 = vector.extract_strided_slice %11 {offsets = [0, 4], sizes = [8, 2], strides = [1, 1]} : vector<8x16xf32> to vector<8x2xf32>
    %384 = vector.extract_strided_slice %378 {offsets = [0, 0], sizes = [8, 2], strides = [1, 1]} : vector<8x4xf32> to vector<8x2xf32>
    %cst_98 = arith.constant 0.000000e+00 : f32
    %385 = vector.broadcast %cst_98 : f32 to vector<8x16xf32>
    %cst_99 = arith.constant 1.000000e+00 : f32
    %386 = vector.broadcast %cst_99 : f32 to vector<8x2xf32>
    %387 = arith.subf %386, %383 : vector<8x2xf32>
    %c0_i32_100 = arith.constant 0 : i32
    %388 = vector.broadcast %c0_i32_100 : i32 to vector<8x2xi32>
    %389 = arith.addi %381, %388 : vector<8x2xi32>
    %cst_101 = arith.constant 1.000000e+00 : f32
    %390 = vector.broadcast %cst_101 : f32 to vector<8x2xf32>
    %391 = arith.subf %390, %382 : vector<8x2xf32>
    %c0_i32_102 = arith.constant 0 : i32
    %392 = vector.broadcast %c0_i32_102 : i32 to vector<8x2xi32>
    %393 = arith.addi %380, %392 : vector<8x2xi32>
    %c0_i32_103 = arith.constant 0 : i32
    %394 = vector.broadcast %c0_i32_103 : i32 to vector<8x2xi32>
    %395 = arith.cmpi sge, %393, %394 : vector<8x2xi32>
    %c4_i32_104 = arith.constant 4 : i32
    %396 = vector.broadcast %c4_i32_104 : i32 to vector<8x2xi32>
    %397 = arith.cmpi slt, %393, %396 : vector<8x2xi32>
    %398 = arith.andi %395, %397 : vector<8x2xi1>
    %c0_i32_105 = arith.constant 0 : i32
    %399 = vector.broadcast %c0_i32_105 : i32 to vector<8x2xi32>
    %400 = arith.cmpi sge, %389, %399 : vector<8x2xi32>
    %401 = arith.andi %398, %400 : vector<8x2xi1>
    %c4_i32_106 = arith.constant 4 : i32
    %402 = vector.broadcast %c4_i32_106 : i32 to vector<8x2xi32>
    %403 = arith.cmpi slt, %389, %402 : vector<8x2xi32>
    %404 = arith.andi %401, %403 : vector<8x2xi1>
    %405 = arith.mulf %391, %387 : vector<8x2xf32>
    %406 = arith.mulf %405, %384 : vector<8x2xf32>
    %cst_107 = arith.constant 0.000000e+00 : f32
    %407 = vector.broadcast %cst_107 : f32 to vector<8x2xf32>
    %408 = arith.select %404, %406, %407 : vector<8x2xi1>, vector<8x2xf32>
    %c4_i32_108 = arith.constant 4 : i32
    %409 = vector.broadcast %c4_i32_108 : i32 to vector<8x2xi32>
    %410 = arith.muli %389, %409 : vector<8x2xi32>
    %411 = arith.addi %410, %393 : vector<8x2xi32>
    %412 = vector.extract_strided_slice %411 {offsets = [0, 0], sizes = [8, 1], strides = [1, 1]} : vector<8x2xi32> to vector<8x1xi32>
    %413 = vector.broadcast %412 : vector<8x1xi32> to vector<8x16xi32>
    %414 = arith.cmpi eq, %14, %413 : vector<8x16xi32>
    %415 = vector.extract_strided_slice %408 {offsets = [0, 0], sizes = [8, 1], strides = [1, 1]} : vector<8x2xf32> to vector<8x1xf32>
    %cst_109 = arith.constant 0.000000e+00 : f32
    %416 = vector.shape_cast %415 : vector<8x1xf32> to vector<8x1xf32>
    %417 = vector.broadcast %416 : vector<8x1xf32> to vector<8x16xf32>
    %418 = vector.broadcast %cst_109 : f32 to vector<8x16xf32>
    %419 = arith.select %414, %417, %418 : vector<8x16xi1>, vector<8x16xf32>
    %420 = arith.addf %385, %419 : vector<8x16xf32>
    %421 = vector.extract_strided_slice %411 {offsets = [0, 1], sizes = [8, 1], strides = [1, 1]} : vector<8x2xi32> to vector<8x1xi32>
    %422 = vector.broadcast %421 : vector<8x1xi32> to vector<8x16xi32>
    %423 = arith.cmpi eq, %14, %422 : vector<8x16xi32>
    %424 = vector.extract_strided_slice %408 {offsets = [0, 1], sizes = [8, 1], strides = [1, 1]} : vector<8x2xf32> to vector<8x1xf32>
    %cst_110 = arith.constant 0.000000e+00 : f32
    %425 = vector.shape_cast %424 : vector<8x1xf32> to vector<8x1xf32>
    %426 = vector.broadcast %425 : vector<8x1xf32> to vector<8x16xf32>
    %427 = vector.broadcast %cst_110 : f32 to vector<8x16xf32>
    %428 = arith.select %423, %426, %427 : vector<8x16xi1>, vector<8x16xf32>
    %429 = arith.addf %420, %428 : vector<8x16xf32>
    %c1_i32_111 = arith.constant 1 : i32
    %430 = vector.broadcast %c1_i32_111 : i32 to vector<8x2xi32>
    %431 = arith.addi %380, %430 : vector<8x2xi32>
    %c0_i32_112 = arith.constant 0 : i32
    %432 = vector.broadcast %c0_i32_112 : i32 to vector<8x2xi32>
    %433 = arith.cmpi sge, %431, %432 : vector<8x2xi32>
    %c4_i32_113 = arith.constant 4 : i32
    %434 = vector.broadcast %c4_i32_113 : i32 to vector<8x2xi32>
    %435 = arith.cmpi slt, %431, %434 : vector<8x2xi32>
    %436 = arith.andi %433, %435 : vector<8x2xi1>
    %c0_i32_114 = arith.constant 0 : i32
    %437 = vector.broadcast %c0_i32_114 : i32 to vector<8x2xi32>
    %438 = arith.cmpi sge, %389, %437 : vector<8x2xi32>
    %439 = arith.andi %436, %438 : vector<8x2xi1>
    %c4_i32_115 = arith.constant 4 : i32
    %440 = vector.broadcast %c4_i32_115 : i32 to vector<8x2xi32>
    %441 = arith.cmpi slt, %389, %440 : vector<8x2xi32>
    %442 = arith.andi %439, %441 : vector<8x2xi1>
    %443 = arith.mulf %382, %387 : vector<8x2xf32>
    %444 = arith.mulf %443, %384 : vector<8x2xf32>
    %cst_116 = arith.constant 0.000000e+00 : f32
    %445 = vector.broadcast %cst_116 : f32 to vector<8x2xf32>
    %446 = arith.select %442, %444, %445 : vector<8x2xi1>, vector<8x2xf32>
    %c4_i32_117 = arith.constant 4 : i32
    %447 = vector.broadcast %c4_i32_117 : i32 to vector<8x2xi32>
    %448 = arith.muli %389, %447 : vector<8x2xi32>
    %449 = arith.addi %448, %431 : vector<8x2xi32>
    %450 = vector.extract_strided_slice %449 {offsets = [0, 0], sizes = [8, 1], strides = [1, 1]} : vector<8x2xi32> to vector<8x1xi32>
    %451 = vector.broadcast %450 : vector<8x1xi32> to vector<8x16xi32>
    %452 = arith.cmpi eq, %14, %451 : vector<8x16xi32>
    %453 = vector.extract_strided_slice %446 {offsets = [0, 0], sizes = [8, 1], strides = [1, 1]} : vector<8x2xf32> to vector<8x1xf32>
    %cst_118 = arith.constant 0.000000e+00 : f32
    %454 = vector.shape_cast %453 : vector<8x1xf32> to vector<8x1xf32>
    %455 = vector.broadcast %454 : vector<8x1xf32> to vector<8x16xf32>
    %456 = vector.broadcast %cst_118 : f32 to vector<8x16xf32>
    %457 = arith.select %452, %455, %456 : vector<8x16xi1>, vector<8x16xf32>
    %458 = arith.addf %429, %457 : vector<8x16xf32>
    %459 = vector.extract_strided_slice %449 {offsets = [0, 1], sizes = [8, 1], strides = [1, 1]} : vector<8x2xi32> to vector<8x1xi32>
    %460 = vector.broadcast %459 : vector<8x1xi32> to vector<8x16xi32>
    %461 = arith.cmpi eq, %14, %460 : vector<8x16xi32>
    %462 = vector.extract_strided_slice %446 {offsets = [0, 1], sizes = [8, 1], strides = [1, 1]} : vector<8x2xf32> to vector<8x1xf32>
    %cst_119 = arith.constant 0.000000e+00 : f32
    %463 = vector.shape_cast %462 : vector<8x1xf32> to vector<8x1xf32>
    %464 = vector.broadcast %463 : vector<8x1xf32> to vector<8x16xf32>
    %465 = vector.broadcast %cst_119 : f32 to vector<8x16xf32>
    %466 = arith.select %461, %464, %465 : vector<8x16xi1>, vector<8x16xf32>
    %467 = arith.addf %458, %466 : vector<8x16xf32>
    %c1_i32_120 = arith.constant 1 : i32
    %468 = vector.broadcast %c1_i32_120 : i32 to vector<8x2xi32>
    %469 = arith.addi %381, %468 : vector<8x2xi32>
    %cst_121 = arith.constant 1.000000e+00 : f32
    %470 = vector.broadcast %cst_121 : f32 to vector<8x2xf32>
    %471 = arith.subf %470, %382 : vector<8x2xf32>
    %c0_i32_122 = arith.constant 0 : i32
    %472 = vector.broadcast %c0_i32_122 : i32 to vector<8x2xi32>
    %473 = arith.addi %380, %472 : vector<8x2xi32>
    %c0_i32_123 = arith.constant 0 : i32
    %474 = vector.broadcast %c0_i32_123 : i32 to vector<8x2xi32>
    %475 = arith.cmpi sge, %473, %474 : vector<8x2xi32>
    %c4_i32_124 = arith.constant 4 : i32
    %476 = vector.broadcast %c4_i32_124 : i32 to vector<8x2xi32>
    %477 = arith.cmpi slt, %473, %476 : vector<8x2xi32>
    %478 = arith.andi %475, %477 : vector<8x2xi1>
    %c0_i32_125 = arith.constant 0 : i32
    %479 = vector.broadcast %c0_i32_125 : i32 to vector<8x2xi32>
    %480 = arith.cmpi sge, %469, %479 : vector<8x2xi32>
    %481 = arith.andi %478, %480 : vector<8x2xi1>
    %c4_i32_126 = arith.constant 4 : i32
    %482 = vector.broadcast %c4_i32_126 : i32 to vector<8x2xi32>
    %483 = arith.cmpi slt, %469, %482 : vector<8x2xi32>
    %484 = arith.andi %481, %483 : vector<8x2xi1>
    %485 = arith.mulf %471, %383 : vector<8x2xf32>
    %486 = arith.mulf %485, %384 : vector<8x2xf32>
    %cst_127 = arith.constant 0.000000e+00 : f32
    %487 = vector.broadcast %cst_127 : f32 to vector<8x2xf32>
    %488 = arith.select %484, %486, %487 : vector<8x2xi1>, vector<8x2xf32>
    %c4_i32_128 = arith.constant 4 : i32
    %489 = vector.broadcast %c4_i32_128 : i32 to vector<8x2xi32>
    %490 = arith.muli %469, %489 : vector<8x2xi32>
    %491 = arith.addi %490, %473 : vector<8x2xi32>
    %492 = vector.extract_strided_slice %491 {offsets = [0, 0], sizes = [8, 1], strides = [1, 1]} : vector<8x2xi32> to vector<8x1xi32>
    %493 = vector.broadcast %492 : vector<8x1xi32> to vector<8x16xi32>
    %494 = arith.cmpi eq, %14, %493 : vector<8x16xi32>
    %495 = vector.extract_strided_slice %488 {offsets = [0, 0], sizes = [8, 1], strides = [1, 1]} : vector<8x2xf32> to vector<8x1xf32>
    %cst_129 = arith.constant 0.000000e+00 : f32
    %496 = vector.shape_cast %495 : vector<8x1xf32> to vector<8x1xf32>
    %497 = vector.broadcast %496 : vector<8x1xf32> to vector<8x16xf32>
    %498 = vector.broadcast %cst_129 : f32 to vector<8x16xf32>
    %499 = arith.select %494, %497, %498 : vector<8x16xi1>, vector<8x16xf32>
    %500 = arith.addf %467, %499 : vector<8x16xf32>
    %501 = vector.extract_strided_slice %491 {offsets = [0, 1], sizes = [8, 1], strides = [1, 1]} : vector<8x2xi32> to vector<8x1xi32>
    %502 = vector.broadcast %501 : vector<8x1xi32> to vector<8x16xi32>
    %503 = arith.cmpi eq, %14, %502 : vector<8x16xi32>
    %504 = vector.extract_strided_slice %488 {offsets = [0, 1], sizes = [8, 1], strides = [1, 1]} : vector<8x2xf32> to vector<8x1xf32>
    %cst_130 = arith.constant 0.000000e+00 : f32
    %505 = vector.shape_cast %504 : vector<8x1xf32> to vector<8x1xf32>
    %506 = vector.broadcast %505 : vector<8x1xf32> to vector<8x16xf32>
    %507 = vector.broadcast %cst_130 : f32 to vector<8x16xf32>
    %508 = arith.select %503, %506, %507 : vector<8x16xi1>, vector<8x16xf32>
    %509 = arith.addf %500, %508 : vector<8x16xf32>
    %c1_i32_131 = arith.constant 1 : i32
    %510 = vector.broadcast %c1_i32_131 : i32 to vector<8x2xi32>
    %511 = arith.addi %380, %510 : vector<8x2xi32>
    %c0_i32_132 = arith.constant 0 : i32
    %512 = vector.broadcast %c0_i32_132 : i32 to vector<8x2xi32>
    %513 = arith.cmpi sge, %511, %512 : vector<8x2xi32>
    %c4_i32_133 = arith.constant 4 : i32
    %514 = vector.broadcast %c4_i32_133 : i32 to vector<8x2xi32>
    %515 = arith.cmpi slt, %511, %514 : vector<8x2xi32>
    %516 = arith.andi %513, %515 : vector<8x2xi1>
    %c0_i32_134 = arith.constant 0 : i32
    %517 = vector.broadcast %c0_i32_134 : i32 to vector<8x2xi32>
    %518 = arith.cmpi sge, %469, %517 : vector<8x2xi32>
    %519 = arith.andi %516, %518 : vector<8x2xi1>
    %c4_i32_135 = arith.constant 4 : i32
    %520 = vector.broadcast %c4_i32_135 : i32 to vector<8x2xi32>
    %521 = arith.cmpi slt, %469, %520 : vector<8x2xi32>
    %522 = arith.andi %519, %521 : vector<8x2xi1>
    %523 = arith.mulf %382, %383 : vector<8x2xf32>
    %524 = arith.mulf %523, %384 : vector<8x2xf32>
    %cst_136 = arith.constant 0.000000e+00 : f32
    %525 = vector.broadcast %cst_136 : f32 to vector<8x2xf32>
    %526 = arith.select %522, %524, %525 : vector<8x2xi1>, vector<8x2xf32>
    %c4_i32_137 = arith.constant 4 : i32
    %527 = vector.broadcast %c4_i32_137 : i32 to vector<8x2xi32>
    %528 = arith.muli %469, %527 : vector<8x2xi32>
    %529 = arith.addi %528, %511 : vector<8x2xi32>
    %530 = vector.extract_strided_slice %529 {offsets = [0, 0], sizes = [8, 1], strides = [1, 1]} : vector<8x2xi32> to vector<8x1xi32>
    %531 = vector.broadcast %530 : vector<8x1xi32> to vector<8x16xi32>
    %532 = arith.cmpi eq, %14, %531 : vector<8x16xi32>
    %533 = vector.extract_strided_slice %526 {offsets = [0, 0], sizes = [8, 1], strides = [1, 1]} : vector<8x2xf32> to vector<8x1xf32>
    %cst_138 = arith.constant 0.000000e+00 : f32
    %534 = vector.shape_cast %533 : vector<8x1xf32> to vector<8x1xf32>
    %535 = vector.broadcast %534 : vector<8x1xf32> to vector<8x16xf32>
    %536 = vector.broadcast %cst_138 : f32 to vector<8x16xf32>
    %537 = arith.select %532, %535, %536 : vector<8x16xi1>, vector<8x16xf32>
    %538 = arith.addf %509, %537 : vector<8x16xf32>
    %539 = vector.extract_strided_slice %529 {offsets = [0, 1], sizes = [8, 1], strides = [1, 1]} : vector<8x2xi32> to vector<8x1xi32>
    %540 = vector.broadcast %539 : vector<8x1xi32> to vector<8x16xi32>
    %541 = arith.cmpi eq, %14, %540 : vector<8x16xi32>
    %542 = vector.extract_strided_slice %526 {offsets = [0, 1], sizes = [8, 1], strides = [1, 1]} : vector<8x2xf32> to vector<8x1xf32>
    %cst_139 = arith.constant 0.000000e+00 : f32
    %543 = vector.shape_cast %542 : vector<8x1xf32> to vector<8x1xf32>
    %544 = vector.broadcast %543 : vector<8x1xf32> to vector<8x16xf32>
    %545 = vector.broadcast %cst_139 : f32 to vector<8x16xf32>
    %546 = arith.select %541, %544, %545 : vector<8x16xi1>, vector<8x16xf32>
    %547 = arith.addf %538, %546 : vector<8x16xf32>
    %548 = vector.extract_strided_slice %1 {offsets = [0, 8], sizes = [16, 8], strides = [1, 1]} : vector<20x32xf32> to vector<16x8xf32>
    %cst_140 = arith.constant dense<0.000000e+00> : vector<8x8xf32>
    %549 = tpu.matmul %547, %548, %cst_140 {dimension_numbers = #tpu.dot_dimension_numbers<[1], [0], [0], [1], [0, 0, 1, 1], [], []>} : vector<8x16xf32>, vector<16x8xf32>, vector<8x8xf32> -> vector<8x8xf32>
    %550 = arith.addf %379, %549 : vector<8x8xf32>
    %551 = vector.extract_strided_slice %12 {offsets = [0, 6], sizes = [8, 2], strides = [1, 1]} : vector<8x16xi32> to vector<8x2xi32>
    %552 = vector.extract_strided_slice %13 {offsets = [0, 6], sizes = [8, 2], strides = [1, 1]} : vector<8x16xi32> to vector<8x2xi32>
    %553 = vector.extract_strided_slice %10 {offsets = [0, 6], sizes = [8, 2], strides = [1, 1]} : vector<8x16xf32> to vector<8x2xf32>
    %554 = vector.extract_strided_slice %11 {offsets = [0, 6], sizes = [8, 2], strides = [1, 1]} : vector<8x16xf32> to vector<8x2xf32>
    %555 = vector.extract_strided_slice %378 {offsets = [0, 2], sizes = [8, 2], strides = [1, 1]} : vector<8x4xf32> to vector<8x2xf32>
    %cst_141 = arith.constant 0.000000e+00 : f32
    %556 = vector.broadcast %cst_141 : f32 to vector<8x4xf32>
    %cst_142 = arith.constant 1.000000e+00 : f32
    %557 = vector.broadcast %cst_142 : f32 to vector<8x2xf32>
    %558 = arith.subf %557, %554 : vector<8x2xf32>
    %c0_i32_143 = arith.constant 0 : i32
    %559 = vector.broadcast %c0_i32_143 : i32 to vector<8x2xi32>
    %560 = arith.addi %552, %559 : vector<8x2xi32>
    %cst_144 = arith.constant 1.000000e+00 : f32
    %561 = vector.broadcast %cst_144 : f32 to vector<8x2xf32>
    %562 = arith.subf %561, %553 : vector<8x2xf32>
    %c0_i32_145 = arith.constant 0 : i32
    %563 = vector.broadcast %c0_i32_145 : i32 to vector<8x2xi32>
    %564 = arith.addi %551, %563 : vector<8x2xi32>
    %c0_i32_146 = arith.constant 0 : i32
    %565 = vector.broadcast %c0_i32_146 : i32 to vector<8x2xi32>
    %566 = arith.cmpi sge, %564, %565 : vector<8x2xi32>
    %c2_i32_147 = arith.constant 2 : i32
    %567 = vector.broadcast %c2_i32_147 : i32 to vector<8x2xi32>
    %568 = arith.cmpi slt, %564, %567 : vector<8x2xi32>
    %569 = arith.andi %566, %568 : vector<8x2xi1>
    %c0_i32_148 = arith.constant 0 : i32
    %570 = vector.broadcast %c0_i32_148 : i32 to vector<8x2xi32>
    %571 = arith.cmpi sge, %560, %570 : vector<8x2xi32>
    %572 = arith.andi %569, %571 : vector<8x2xi1>
    %c2_i32_149 = arith.constant 2 : i32
    %573 = vector.broadcast %c2_i32_149 : i32 to vector<8x2xi32>
    %574 = arith.cmpi slt, %560, %573 : vector<8x2xi32>
    %575 = arith.andi %572, %574 : vector<8x2xi1>
    %576 = arith.mulf %562, %558 : vector<8x2xf32>
    %577 = arith.mulf %576, %555 : vector<8x2xf32>
    %cst_150 = arith.constant 0.000000e+00 : f32
    %578 = vector.broadcast %cst_150 : f32 to vector<8x2xf32>
    %579 = arith.select %575, %577, %578 : vector<8x2xi1>, vector<8x2xf32>
    %c2_i32_151 = arith.constant 2 : i32
    %580 = vector.broadcast %c2_i32_151 : i32 to vector<8x2xi32>
    %581 = arith.muli %560, %580 : vector<8x2xi32>
    %582 = arith.addi %581, %564 : vector<8x2xi32>
    %583 = vector.extract_strided_slice %582 {offsets = [0, 0], sizes = [8, 1], strides = [1, 1]} : vector<8x2xi32> to vector<8x1xi32>
    %584 = vector.broadcast %583 : vector<8x1xi32> to vector<8x4xi32>
    %585 = arith.cmpi eq, %15, %584 : vector<8x4xi32>
    %586 = vector.extract_strided_slice %579 {offsets = [0, 0], sizes = [8, 1], strides = [1, 1]} : vector<8x2xf32> to vector<8x1xf32>
    %cst_152 = arith.constant 0.000000e+00 : f32
    %587 = vector.shape_cast %586 : vector<8x1xf32> to vector<8x1xf32>
    %588 = vector.broadcast %587 : vector<8x1xf32> to vector<8x4xf32>
    %589 = vector.broadcast %cst_152 : f32 to vector<8x4xf32>
    %590 = arith.select %585, %588, %589 : vector<8x4xi1>, vector<8x4xf32>
    %591 = arith.addf %556, %590 : vector<8x4xf32>
    %592 = vector.extract_strided_slice %582 {offsets = [0, 1], sizes = [8, 1], strides = [1, 1]} : vector<8x2xi32> to vector<8x1xi32>
    %593 = vector.broadcast %592 : vector<8x1xi32> to vector<8x4xi32>
    %594 = arith.cmpi eq, %15, %593 : vector<8x4xi32>
    %595 = vector.extract_strided_slice %579 {offsets = [0, 1], sizes = [8, 1], strides = [1, 1]} : vector<8x2xf32> to vector<8x1xf32>
    %cst_153 = arith.constant 0.000000e+00 : f32
    %596 = vector.shape_cast %595 : vector<8x1xf32> to vector<8x1xf32>
    %597 = vector.broadcast %596 : vector<8x1xf32> to vector<8x4xf32>
    %598 = vector.broadcast %cst_153 : f32 to vector<8x4xf32>
    %599 = arith.select %594, %597, %598 : vector<8x4xi1>, vector<8x4xf32>
    %600 = arith.addf %591, %599 : vector<8x4xf32>
    %c1_i32_154 = arith.constant 1 : i32
    %601 = vector.broadcast %c1_i32_154 : i32 to vector<8x2xi32>
    %602 = arith.addi %551, %601 : vector<8x2xi32>
    %c0_i32_155 = arith.constant 0 : i32
    %603 = vector.broadcast %c0_i32_155 : i32 to vector<8x2xi32>
    %604 = arith.cmpi sge, %602, %603 : vector<8x2xi32>
    %c2_i32_156 = arith.constant 2 : i32
    %605 = vector.broadcast %c2_i32_156 : i32 to vector<8x2xi32>
    %606 = arith.cmpi slt, %602, %605 : vector<8x2xi32>
    %607 = arith.andi %604, %606 : vector<8x2xi1>
    %c0_i32_157 = arith.constant 0 : i32
    %608 = vector.broadcast %c0_i32_157 : i32 to vector<8x2xi32>
    %609 = arith.cmpi sge, %560, %608 : vector<8x2xi32>
    %610 = arith.andi %607, %609 : vector<8x2xi1>
    %c2_i32_158 = arith.constant 2 : i32
    %611 = vector.broadcast %c2_i32_158 : i32 to vector<8x2xi32>
    %612 = arith.cmpi slt, %560, %611 : vector<8x2xi32>
    %613 = arith.andi %610, %612 : vector<8x2xi1>
    %614 = arith.mulf %553, %558 : vector<8x2xf32>
    %615 = arith.mulf %614, %555 : vector<8x2xf32>
    %cst_159 = arith.constant 0.000000e+00 : f32
    %616 = vector.broadcast %cst_159 : f32 to vector<8x2xf32>
    %617 = arith.select %613, %615, %616 : vector<8x2xi1>, vector<8x2xf32>
    %c2_i32_160 = arith.constant 2 : i32
    %618 = vector.broadcast %c2_i32_160 : i32 to vector<8x2xi32>
    %619 = arith.muli %560, %618 : vector<8x2xi32>
    %620 = arith.addi %619, %602 : vector<8x2xi32>
    %621 = vector.extract_strided_slice %620 {offsets = [0, 0], sizes = [8, 1], strides = [1, 1]} : vector<8x2xi32> to vector<8x1xi32>
    %622 = vector.broadcast %621 : vector<8x1xi32> to vector<8x4xi32>
    %623 = arith.cmpi eq, %15, %622 : vector<8x4xi32>
    %624 = vector.extract_strided_slice %617 {offsets = [0, 0], sizes = [8, 1], strides = [1, 1]} : vector<8x2xf32> to vector<8x1xf32>
    %cst_161 = arith.constant 0.000000e+00 : f32
    %625 = vector.shape_cast %624 : vector<8x1xf32> to vector<8x1xf32>
    %626 = vector.broadcast %625 : vector<8x1xf32> to vector<8x4xf32>
    %627 = vector.broadcast %cst_161 : f32 to vector<8x4xf32>
    %628 = arith.select %623, %626, %627 : vector<8x4xi1>, vector<8x4xf32>
    %629 = arith.addf %600, %628 : vector<8x4xf32>
    %630 = vector.extract_strided_slice %620 {offsets = [0, 1], sizes = [8, 1], strides = [1, 1]} : vector<8x2xi32> to vector<8x1xi32>
    %631 = vector.broadcast %630 : vector<8x1xi32> to vector<8x4xi32>
    %632 = arith.cmpi eq, %15, %631 : vector<8x4xi32>
    %633 = vector.extract_strided_slice %617 {offsets = [0, 1], sizes = [8, 1], strides = [1, 1]} : vector<8x2xf32> to vector<8x1xf32>
    %cst_162 = arith.constant 0.000000e+00 : f32
    %634 = vector.shape_cast %633 : vector<8x1xf32> to vector<8x1xf32>
    %635 = vector.broadcast %634 : vector<8x1xf32> to vector<8x4xf32>
    %636 = vector.broadcast %cst_162 : f32 to vector<8x4xf32>
    %637 = arith.select %632, %635, %636 : vector<8x4xi1>, vector<8x4xf32>
    %638 = arith.addf %629, %637 : vector<8x4xf32>
    %c1_i32_163 = arith.constant 1 : i32
    %639 = vector.broadcast %c1_i32_163 : i32 to vector<8x2xi32>
    %640 = arith.addi %552, %639 : vector<8x2xi32>
    %cst_164 = arith.constant 1.000000e+00 : f32
    %641 = vector.broadcast %cst_164 : f32 to vector<8x2xf32>
    %642 = arith.subf %641, %553 : vector<8x2xf32>
    %c0_i32_165 = arith.constant 0 : i32
    %643 = vector.broadcast %c0_i32_165 : i32 to vector<8x2xi32>
    %644 = arith.addi %551, %643 : vector<8x2xi32>
    %c0_i32_166 = arith.constant 0 : i32
    %645 = vector.broadcast %c0_i32_166 : i32 to vector<8x2xi32>
    %646 = arith.cmpi sge, %644, %645 : vector<8x2xi32>
    %c2_i32_167 = arith.constant 2 : i32
    %647 = vector.broadcast %c2_i32_167 : i32 to vector<8x2xi32>
    %648 = arith.cmpi slt, %644, %647 : vector<8x2xi32>
    %649 = arith.andi %646, %648 : vector<8x2xi1>
    %c0_i32_168 = arith.constant 0 : i32
    %650 = vector.broadcast %c0_i32_168 : i32 to vector<8x2xi32>
    %651 = arith.cmpi sge, %640, %650 : vector<8x2xi32>
    %652 = arith.andi %649, %651 : vector<8x2xi1>
    %c2_i32_169 = arith.constant 2 : i32
    %653 = vector.broadcast %c2_i32_169 : i32 to vector<8x2xi32>
    %654 = arith.cmpi slt, %640, %653 : vector<8x2xi32>
    %655 = arith.andi %652, %654 : vector<8x2xi1>
    %656 = arith.mulf %642, %554 : vector<8x2xf32>
    %657 = arith.mulf %656, %555 : vector<8x2xf32>
    %cst_170 = arith.constant 0.000000e+00 : f32
    %658 = vector.broadcast %cst_170 : f32 to vector<8x2xf32>
    %659 = arith.select %655, %657, %658 : vector<8x2xi1>, vector<8x2xf32>
    %c2_i32_171 = arith.constant 2 : i32
    %660 = vector.broadcast %c2_i32_171 : i32 to vector<8x2xi32>
    %661 = arith.muli %640, %660 : vector<8x2xi32>
    %662 = arith.addi %661, %644 : vector<8x2xi32>
    %663 = vector.extract_strided_slice %662 {offsets = [0, 0], sizes = [8, 1], strides = [1, 1]} : vector<8x2xi32> to vector<8x1xi32>
    %664 = vector.broadcast %663 : vector<8x1xi32> to vector<8x4xi32>
    %665 = arith.cmpi eq, %15, %664 : vector<8x4xi32>
    %666 = vector.extract_strided_slice %659 {offsets = [0, 0], sizes = [8, 1], strides = [1, 1]} : vector<8x2xf32> to vector<8x1xf32>
    %cst_172 = arith.constant 0.000000e+00 : f32
    %667 = vector.shape_cast %666 : vector<8x1xf32> to vector<8x1xf32>
    %668 = vector.broadcast %667 : vector<8x1xf32> to vector<8x4xf32>
    %669 = vector.broadcast %cst_172 : f32 to vector<8x4xf32>
    %670 = arith.select %665, %668, %669 : vector<8x4xi1>, vector<8x4xf32>
    %671 = arith.addf %638, %670 : vector<8x4xf32>
    %672 = vector.extract_strided_slice %662 {offsets = [0, 1], sizes = [8, 1], strides = [1, 1]} : vector<8x2xi32> to vector<8x1xi32>
    %673 = vector.broadcast %672 : vector<8x1xi32> to vector<8x4xi32>
    %674 = arith.cmpi eq, %15, %673 : vector<8x4xi32>
    %675 = vector.extract_strided_slice %659 {offsets = [0, 1], sizes = [8, 1], strides = [1, 1]} : vector<8x2xf32> to vector<8x1xf32>
    %cst_173 = arith.constant 0.000000e+00 : f32
    %676 = vector.shape_cast %675 : vector<8x1xf32> to vector<8x1xf32>
    %677 = vector.broadcast %676 : vector<8x1xf32> to vector<8x4xf32>
    %678 = vector.broadcast %cst_173 : f32 to vector<8x4xf32>
    %679 = arith.select %674, %677, %678 : vector<8x4xi1>, vector<8x4xf32>
    %680 = arith.addf %671, %679 : vector<8x4xf32>
    %c1_i32_174 = arith.constant 1 : i32
    %681 = vector.broadcast %c1_i32_174 : i32 to vector<8x2xi32>
    %682 = arith.addi %551, %681 : vector<8x2xi32>
    %c0_i32_175 = arith.constant 0 : i32
    %683 = vector.broadcast %c0_i32_175 : i32 to vector<8x2xi32>
    %684 = arith.cmpi sge, %682, %683 : vector<8x2xi32>
    %c2_i32_176 = arith.constant 2 : i32
    %685 = vector.broadcast %c2_i32_176 : i32 to vector<8x2xi32>
    %686 = arith.cmpi slt, %682, %685 : vector<8x2xi32>
    %687 = arith.andi %684, %686 : vector<8x2xi1>
    %c0_i32_177 = arith.constant 0 : i32
    %688 = vector.broadcast %c0_i32_177 : i32 to vector<8x2xi32>
    %689 = arith.cmpi sge, %640, %688 : vector<8x2xi32>
    %690 = arith.andi %687, %689 : vector<8x2xi1>
    %c2_i32_178 = arith.constant 2 : i32
    %691 = vector.broadcast %c2_i32_178 : i32 to vector<8x2xi32>
    %692 = arith.cmpi slt, %640, %691 : vector<8x2xi32>
    %693 = arith.andi %690, %692 : vector<8x2xi1>
    %694 = arith.mulf %553, %554 : vector<8x2xf32>
    %695 = arith.mulf %694, %555 : vector<8x2xf32>
    %cst_179 = arith.constant 0.000000e+00 : f32
    %696 = vector.broadcast %cst_179 : f32 to vector<8x2xf32>
    %697 = arith.select %693, %695, %696 : vector<8x2xi1>, vector<8x2xf32>
    %c2_i32_180 = arith.constant 2 : i32
    %698 = vector.broadcast %c2_i32_180 : i32 to vector<8x2xi32>
    %699 = arith.muli %640, %698 : vector<8x2xi32>
    %700 = arith.addi %699, %682 : vector<8x2xi32>
    %701 = vector.extract_strided_slice %700 {offsets = [0, 0], sizes = [8, 1], strides = [1, 1]} : vector<8x2xi32> to vector<8x1xi32>
    %702 = vector.broadcast %701 : vector<8x1xi32> to vector<8x4xi32>
    %703 = arith.cmpi eq, %15, %702 : vector<8x4xi32>
    %704 = vector.extract_strided_slice %697 {offsets = [0, 0], sizes = [8, 1], strides = [1, 1]} : vector<8x2xf32> to vector<8x1xf32>
    %cst_181 = arith.constant 0.000000e+00 : f32
    %705 = vector.shape_cast %704 : vector<8x1xf32> to vector<8x1xf32>
    %706 = vector.broadcast %705 : vector<8x1xf32> to vector<8x4xf32>
    %707 = vector.broadcast %cst_181 : f32 to vector<8x4xf32>
    %708 = arith.select %703, %706, %707 : vector<8x4xi1>, vector<8x4xf32>
    %709 = arith.addf %680, %708 : vector<8x4xf32>
    %710 = vector.extract_strided_slice %700 {offsets = [0, 1], sizes = [8, 1], strides = [1, 1]} : vector<8x2xi32> to vector<8x1xi32>
    %711 = vector.broadcast %710 : vector<8x1xi32> to vector<8x4xi32>
    %712 = arith.cmpi eq, %15, %711 : vector<8x4xi32>
    %713 = vector.extract_strided_slice %697 {offsets = [0, 1], sizes = [8, 1], strides = [1, 1]} : vector<8x2xf32> to vector<8x1xf32>
    %cst_182 = arith.constant 0.000000e+00 : f32
    %714 = vector.shape_cast %713 : vector<8x1xf32> to vector<8x1xf32>
    %715 = vector.broadcast %714 : vector<8x1xf32> to vector<8x4xf32>
    %716 = vector.broadcast %cst_182 : f32 to vector<8x4xf32>
    %717 = arith.select %712, %715, %716 : vector<8x4xi1>, vector<8x4xf32>
    %718 = arith.addf %709, %717 : vector<8x4xf32>
    %719 = vector.extract_strided_slice %1 {offsets = [16, 8], sizes = [4, 8], strides = [1, 1]} : vector<20x32xf32> to vector<4x8xf32>
    %cst_183 = arith.constant dense<0.000000e+00> : vector<8x8xf32>
    %720 = tpu.matmul %718, %719, %cst_183 {dimension_numbers = #tpu.dot_dimension_numbers<[1], [0], [0], [1], [0, 0, 1, 1], [], []>} : vector<8x4xf32>, vector<4x8xf32>, vector<8x8xf32> -> vector<8x8xf32>
    %721 = arith.addf %550, %720 : vector<8x8xf32>
    %722 = vector.extract_strided_slice %7 {offsets = [0, 8], sizes = [8, 4], strides = [1, 1]} : vector<8x16xf32> to vector<8x4xf32>
    %cst_184 = arith.constant dense<0xFF800000> : vector<8xf32>
    %723 = vector.multi_reduction <maximumf>, %722, %cst_184 [1] : vector<8x4xf32> to vector<8xf32>
    %724 = vector.shape_cast %723 : vector<8xf32> to vector<8x1xf32>
    %725 = vector.broadcast %724 : vector<8x1xf32> to vector<8x4xf32>
    %726 = arith.subf %722, %725 : vector<8x4xf32>
    %727 = math.exp %726 : vector<8x4xf32>
    %cst_185 = arith.constant dense<0.000000e+00> : vector<8xf32>
    %728 = vector.multi_reduction <add>, %727, %cst_185 [1] : vector<8x4xf32> to vector<8xf32>
    %729 = vector.shape_cast %728 : vector<8xf32> to vector<8x1xf32>
    %730 = vector.broadcast %729 : vector<8x1xf32> to vector<8x4xf32>
    %731 = arith.divf %727, %730 : vector<8x4xf32>
    %cst_186 = arith.constant 0.000000e+00 : f32
    %732 = vector.broadcast %cst_186 : f32 to vector<8x8xf32>
    %733 = vector.extract_strided_slice %12 {offsets = [0, 8], sizes = [8, 2], strides = [1, 1]} : vector<8x16xi32> to vector<8x2xi32>
    %734 = vector.extract_strided_slice %13 {offsets = [0, 8], sizes = [8, 2], strides = [1, 1]} : vector<8x16xi32> to vector<8x2xi32>
    %735 = vector.extract_strided_slice %10 {offsets = [0, 8], sizes = [8, 2], strides = [1, 1]} : vector<8x16xf32> to vector<8x2xf32>
    %736 = vector.extract_strided_slice %11 {offsets = [0, 8], sizes = [8, 2], strides = [1, 1]} : vector<8x16xf32> to vector<8x2xf32>
    %737 = vector.extract_strided_slice %731 {offsets = [0, 0], sizes = [8, 2], strides = [1, 1]} : vector<8x4xf32> to vector<8x2xf32>
    %cst_187 = arith.constant 0.000000e+00 : f32
    %738 = vector.broadcast %cst_187 : f32 to vector<8x16xf32>
    %cst_188 = arith.constant 1.000000e+00 : f32
    %739 = vector.broadcast %cst_188 : f32 to vector<8x2xf32>
    %740 = arith.subf %739, %736 : vector<8x2xf32>
    %c0_i32_189 = arith.constant 0 : i32
    %741 = vector.broadcast %c0_i32_189 : i32 to vector<8x2xi32>
    %742 = arith.addi %734, %741 : vector<8x2xi32>
    %cst_190 = arith.constant 1.000000e+00 : f32
    %743 = vector.broadcast %cst_190 : f32 to vector<8x2xf32>
    %744 = arith.subf %743, %735 : vector<8x2xf32>
    %c0_i32_191 = arith.constant 0 : i32
    %745 = vector.broadcast %c0_i32_191 : i32 to vector<8x2xi32>
    %746 = arith.addi %733, %745 : vector<8x2xi32>
    %c0_i32_192 = arith.constant 0 : i32
    %747 = vector.broadcast %c0_i32_192 : i32 to vector<8x2xi32>
    %748 = arith.cmpi sge, %746, %747 : vector<8x2xi32>
    %c4_i32_193 = arith.constant 4 : i32
    %749 = vector.broadcast %c4_i32_193 : i32 to vector<8x2xi32>
    %750 = arith.cmpi slt, %746, %749 : vector<8x2xi32>
    %751 = arith.andi %748, %750 : vector<8x2xi1>
    %c0_i32_194 = arith.constant 0 : i32
    %752 = vector.broadcast %c0_i32_194 : i32 to vector<8x2xi32>
    %753 = arith.cmpi sge, %742, %752 : vector<8x2xi32>
    %754 = arith.andi %751, %753 : vector<8x2xi1>
    %c4_i32_195 = arith.constant 4 : i32
    %755 = vector.broadcast %c4_i32_195 : i32 to vector<8x2xi32>
    %756 = arith.cmpi slt, %742, %755 : vector<8x2xi32>
    %757 = arith.andi %754, %756 : vector<8x2xi1>
    %758 = arith.mulf %744, %740 : vector<8x2xf32>
    %759 = arith.mulf %758, %737 : vector<8x2xf32>
    %cst_196 = arith.constant 0.000000e+00 : f32
    %760 = vector.broadcast %cst_196 : f32 to vector<8x2xf32>
    %761 = arith.select %757, %759, %760 : vector<8x2xi1>, vector<8x2xf32>
    %c4_i32_197 = arith.constant 4 : i32
    %762 = vector.broadcast %c4_i32_197 : i32 to vector<8x2xi32>
    %763 = arith.muli %742, %762 : vector<8x2xi32>
    %764 = arith.addi %763, %746 : vector<8x2xi32>
    %765 = vector.extract_strided_slice %764 {offsets = [0, 0], sizes = [8, 1], strides = [1, 1]} : vector<8x2xi32> to vector<8x1xi32>
    %766 = vector.broadcast %765 : vector<8x1xi32> to vector<8x16xi32>
    %767 = arith.cmpi eq, %14, %766 : vector<8x16xi32>
    %768 = vector.extract_strided_slice %761 {offsets = [0, 0], sizes = [8, 1], strides = [1, 1]} : vector<8x2xf32> to vector<8x1xf32>
    %cst_198 = arith.constant 0.000000e+00 : f32
    %769 = vector.shape_cast %768 : vector<8x1xf32> to vector<8x1xf32>
    %770 = vector.broadcast %769 : vector<8x1xf32> to vector<8x16xf32>
    %771 = vector.broadcast %cst_198 : f32 to vector<8x16xf32>
    %772 = arith.select %767, %770, %771 : vector<8x16xi1>, vector<8x16xf32>
    %773 = arith.addf %738, %772 : vector<8x16xf32>
    %774 = vector.extract_strided_slice %764 {offsets = [0, 1], sizes = [8, 1], strides = [1, 1]} : vector<8x2xi32> to vector<8x1xi32>
    %775 = vector.broadcast %774 : vector<8x1xi32> to vector<8x16xi32>
    %776 = arith.cmpi eq, %14, %775 : vector<8x16xi32>
    %777 = vector.extract_strided_slice %761 {offsets = [0, 1], sizes = [8, 1], strides = [1, 1]} : vector<8x2xf32> to vector<8x1xf32>
    %cst_199 = arith.constant 0.000000e+00 : f32
    %778 = vector.shape_cast %777 : vector<8x1xf32> to vector<8x1xf32>
    %779 = vector.broadcast %778 : vector<8x1xf32> to vector<8x16xf32>
    %780 = vector.broadcast %cst_199 : f32 to vector<8x16xf32>
    %781 = arith.select %776, %779, %780 : vector<8x16xi1>, vector<8x16xf32>
    %782 = arith.addf %773, %781 : vector<8x16xf32>
    %c1_i32_200 = arith.constant 1 : i32
    %783 = vector.broadcast %c1_i32_200 : i32 to vector<8x2xi32>
    %784 = arith.addi %733, %783 : vector<8x2xi32>
    %c0_i32_201 = arith.constant 0 : i32
    %785 = vector.broadcast %c0_i32_201 : i32 to vector<8x2xi32>
    %786 = arith.cmpi sge, %784, %785 : vector<8x2xi32>
    %c4_i32_202 = arith.constant 4 : i32
    %787 = vector.broadcast %c4_i32_202 : i32 to vector<8x2xi32>
    %788 = arith.cmpi slt, %784, %787 : vector<8x2xi32>
    %789 = arith.andi %786, %788 : vector<8x2xi1>
    %c0_i32_203 = arith.constant 0 : i32
    %790 = vector.broadcast %c0_i32_203 : i32 to vector<8x2xi32>
    %791 = arith.cmpi sge, %742, %790 : vector<8x2xi32>
    %792 = arith.andi %789, %791 : vector<8x2xi1>
    %c4_i32_204 = arith.constant 4 : i32
    %793 = vector.broadcast %c4_i32_204 : i32 to vector<8x2xi32>
    %794 = arith.cmpi slt, %742, %793 : vector<8x2xi32>
    %795 = arith.andi %792, %794 : vector<8x2xi1>
    %796 = arith.mulf %735, %740 : vector<8x2xf32>
    %797 = arith.mulf %796, %737 : vector<8x2xf32>
    %cst_205 = arith.constant 0.000000e+00 : f32
    %798 = vector.broadcast %cst_205 : f32 to vector<8x2xf32>
    %799 = arith.select %795, %797, %798 : vector<8x2xi1>, vector<8x2xf32>
    %c4_i32_206 = arith.constant 4 : i32
    %800 = vector.broadcast %c4_i32_206 : i32 to vector<8x2xi32>
    %801 = arith.muli %742, %800 : vector<8x2xi32>
    %802 = arith.addi %801, %784 : vector<8x2xi32>
    %803 = vector.extract_strided_slice %802 {offsets = [0, 0], sizes = [8, 1], strides = [1, 1]} : vector<8x2xi32> to vector<8x1xi32>
    %804 = vector.broadcast %803 : vector<8x1xi32> to vector<8x16xi32>
    %805 = arith.cmpi eq, %14, %804 : vector<8x16xi32>
    %806 = vector.extract_strided_slice %799 {offsets = [0, 0], sizes = [8, 1], strides = [1, 1]} : vector<8x2xf32> to vector<8x1xf32>
    %cst_207 = arith.constant 0.000000e+00 : f32
    %807 = vector.shape_cast %806 : vector<8x1xf32> to vector<8x1xf32>
    %808 = vector.broadcast %807 : vector<8x1xf32> to vector<8x16xf32>
    %809 = vector.broadcast %cst_207 : f32 to vector<8x16xf32>
    %810 = arith.select %805, %808, %809 : vector<8x16xi1>, vector<8x16xf32>
    %811 = arith.addf %782, %810 : vector<8x16xf32>
    %812 = vector.extract_strided_slice %802 {offsets = [0, 1], sizes = [8, 1], strides = [1, 1]} : vector<8x2xi32> to vector<8x1xi32>
    %813 = vector.broadcast %812 : vector<8x1xi32> to vector<8x16xi32>
    %814 = arith.cmpi eq, %14, %813 : vector<8x16xi32>
    %815 = vector.extract_strided_slice %799 {offsets = [0, 1], sizes = [8, 1], strides = [1, 1]} : vector<8x2xf32> to vector<8x1xf32>
    %cst_208 = arith.constant 0.000000e+00 : f32
    %816 = vector.shape_cast %815 : vector<8x1xf32> to vector<8x1xf32>
    %817 = vector.broadcast %816 : vector<8x1xf32> to vector<8x16xf32>
    %818 = vector.broadcast %cst_208 : f32 to vector<8x16xf32>
    %819 = arith.select %814, %817, %818 : vector<8x16xi1>, vector<8x16xf32>
    %820 = arith.addf %811, %819 : vector<8x16xf32>
    %c1_i32_209 = arith.constant 1 : i32
    %821 = vector.broadcast %c1_i32_209 : i32 to vector<8x2xi32>
    %822 = arith.addi %734, %821 : vector<8x2xi32>
    %cst_210 = arith.constant 1.000000e+00 : f32
    %823 = vector.broadcast %cst_210 : f32 to vector<8x2xf32>
    %824 = arith.subf %823, %735 : vector<8x2xf32>
    %c0_i32_211 = arith.constant 0 : i32
    %825 = vector.broadcast %c0_i32_211 : i32 to vector<8x2xi32>
    %826 = arith.addi %733, %825 : vector<8x2xi32>
    %c0_i32_212 = arith.constant 0 : i32
    %827 = vector.broadcast %c0_i32_212 : i32 to vector<8x2xi32>
    %828 = arith.cmpi sge, %826, %827 : vector<8x2xi32>
    %c4_i32_213 = arith.constant 4 : i32
    %829 = vector.broadcast %c4_i32_213 : i32 to vector<8x2xi32>
    %830 = arith.cmpi slt, %826, %829 : vector<8x2xi32>
    %831 = arith.andi %828, %830 : vector<8x2xi1>
    %c0_i32_214 = arith.constant 0 : i32
    %832 = vector.broadcast %c0_i32_214 : i32 to vector<8x2xi32>
    %833 = arith.cmpi sge, %822, %832 : vector<8x2xi32>
    %834 = arith.andi %831, %833 : vector<8x2xi1>
    %c4_i32_215 = arith.constant 4 : i32
    %835 = vector.broadcast %c4_i32_215 : i32 to vector<8x2xi32>
    %836 = arith.cmpi slt, %822, %835 : vector<8x2xi32>
    %837 = arith.andi %834, %836 : vector<8x2xi1>
    %838 = arith.mulf %824, %736 : vector<8x2xf32>
    %839 = arith.mulf %838, %737 : vector<8x2xf32>
    %cst_216 = arith.constant 0.000000e+00 : f32
    %840 = vector.broadcast %cst_216 : f32 to vector<8x2xf32>
    %841 = arith.select %837, %839, %840 : vector<8x2xi1>, vector<8x2xf32>
    %c4_i32_217 = arith.constant 4 : i32
    %842 = vector.broadcast %c4_i32_217 : i32 to vector<8x2xi32>
    %843 = arith.muli %822, %842 : vector<8x2xi32>
    %844 = arith.addi %843, %826 : vector<8x2xi32>
    %845 = vector.extract_strided_slice %844 {offsets = [0, 0], sizes = [8, 1], strides = [1, 1]} : vector<8x2xi32> to vector<8x1xi32>
    %846 = vector.broadcast %845 : vector<8x1xi32> to vector<8x16xi32>
    %847 = arith.cmpi eq, %14, %846 : vector<8x16xi32>
    %848 = vector.extract_strided_slice %841 {offsets = [0, 0], sizes = [8, 1], strides = [1, 1]} : vector<8x2xf32> to vector<8x1xf32>
    %cst_218 = arith.constant 0.000000e+00 : f32
    %849 = vector.shape_cast %848 : vector<8x1xf32> to vector<8x1xf32>
    %850 = vector.broadcast %849 : vector<8x1xf32> to vector<8x16xf32>
    %851 = vector.broadcast %cst_218 : f32 to vector<8x16xf32>
    %852 = arith.select %847, %850, %851 : vector<8x16xi1>, vector<8x16xf32>
    %853 = arith.addf %820, %852 : vector<8x16xf32>
    %854 = vector.extract_strided_slice %844 {offsets = [0, 1], sizes = [8, 1], strides = [1, 1]} : vector<8x2xi32> to vector<8x1xi32>
    %855 = vector.broadcast %854 : vector<8x1xi32> to vector<8x16xi32>
    %856 = arith.cmpi eq, %14, %855 : vector<8x16xi32>
    %857 = vector.extract_strided_slice %841 {offsets = [0, 1], sizes = [8, 1], strides = [1, 1]} : vector<8x2xf32> to vector<8x1xf32>
    %cst_219 = arith.constant 0.000000e+00 : f32
    %858 = vector.shape_cast %857 : vector<8x1xf32> to vector<8x1xf32>
    %859 = vector.broadcast %858 : vector<8x1xf32> to vector<8x16xf32>
    %860 = vector.broadcast %cst_219 : f32 to vector<8x16xf32>
    %861 = arith.select %856, %859, %860 : vector<8x16xi1>, vector<8x16xf32>
    %862 = arith.addf %853, %861 : vector<8x16xf32>
    %c1_i32_220 = arith.constant 1 : i32
    %863 = vector.broadcast %c1_i32_220 : i32 to vector<8x2xi32>
    %864 = arith.addi %733, %863 : vector<8x2xi32>
    %c0_i32_221 = arith.constant 0 : i32
    %865 = vector.broadcast %c0_i32_221 : i32 to vector<8x2xi32>
    %866 = arith.cmpi sge, %864, %865 : vector<8x2xi32>
    %c4_i32_222 = arith.constant 4 : i32
    %867 = vector.broadcast %c4_i32_222 : i32 to vector<8x2xi32>
    %868 = arith.cmpi slt, %864, %867 : vector<8x2xi32>
    %869 = arith.andi %866, %868 : vector<8x2xi1>
    %c0_i32_223 = arith.constant 0 : i32
    %870 = vector.broadcast %c0_i32_223 : i32 to vector<8x2xi32>
    %871 = arith.cmpi sge, %822, %870 : vector<8x2xi32>
    %872 = arith.andi %869, %871 : vector<8x2xi1>
    %c4_i32_224 = arith.constant 4 : i32
    %873 = vector.broadcast %c4_i32_224 : i32 to vector<8x2xi32>
    %874 = arith.cmpi slt, %822, %873 : vector<8x2xi32>
    %875 = arith.andi %872, %874 : vector<8x2xi1>
    %876 = arith.mulf %735, %736 : vector<8x2xf32>
    %877 = arith.mulf %876, %737 : vector<8x2xf32>
    %cst_225 = arith.constant 0.000000e+00 : f32
    %878 = vector.broadcast %cst_225 : f32 to vector<8x2xf32>
    %879 = arith.select %875, %877, %878 : vector<8x2xi1>, vector<8x2xf32>
    %c4_i32_226 = arith.constant 4 : i32
    %880 = vector.broadcast %c4_i32_226 : i32 to vector<8x2xi32>
    %881 = arith.muli %822, %880 : vector<8x2xi32>
    %882 = arith.addi %881, %864 : vector<8x2xi32>
    %883 = vector.extract_strided_slice %882 {offsets = [0, 0], sizes = [8, 1], strides = [1, 1]} : vector<8x2xi32> to vector<8x1xi32>
    %884 = vector.broadcast %883 : vector<8x1xi32> to vector<8x16xi32>
    %885 = arith.cmpi eq, %14, %884 : vector<8x16xi32>
    %886 = vector.extract_strided_slice %879 {offsets = [0, 0], sizes = [8, 1], strides = [1, 1]} : vector<8x2xf32> to vector<8x1xf32>
    %cst_227 = arith.constant 0.000000e+00 : f32
    %887 = vector.shape_cast %886 : vector<8x1xf32> to vector<8x1xf32>
    %888 = vector.broadcast %887 : vector<8x1xf32> to vector<8x16xf32>
    %889 = vector.broadcast %cst_227 : f32 to vector<8x16xf32>
    %890 = arith.select %885, %888, %889 : vector<8x16xi1>, vector<8x16xf32>
    %891 = arith.addf %862, %890 : vector<8x16xf32>
    %892 = vector.extract_strided_slice %882 {offsets = [0, 1], sizes = [8, 1], strides = [1, 1]} : vector<8x2xi32> to vector<8x1xi32>
    %893 = vector.broadcast %892 : vector<8x1xi32> to vector<8x16xi32>
    %894 = arith.cmpi eq, %14, %893 : vector<8x16xi32>
    %895 = vector.extract_strided_slice %879 {offsets = [0, 1], sizes = [8, 1], strides = [1, 1]} : vector<8x2xf32> to vector<8x1xf32>
    %cst_228 = arith.constant 0.000000e+00 : f32
    %896 = vector.shape_cast %895 : vector<8x1xf32> to vector<8x1xf32>
    %897 = vector.broadcast %896 : vector<8x1xf32> to vector<8x16xf32>
    %898 = vector.broadcast %cst_228 : f32 to vector<8x16xf32>
    %899 = arith.select %894, %897, %898 : vector<8x16xi1>, vector<8x16xf32>
    %900 = arith.addf %891, %899 : vector<8x16xf32>
    %901 = vector.extract_strided_slice %1 {offsets = [0, 16], sizes = [16, 8], strides = [1, 1]} : vector<20x32xf32> to vector<16x8xf32>
    %cst_229 = arith.constant dense<0.000000e+00> : vector<8x8xf32>
    %902 = tpu.matmul %900, %901, %cst_229 {dimension_numbers = #tpu.dot_dimension_numbers<[1], [0], [0], [1], [0, 0, 1, 1], [], []>} : vector<8x16xf32>, vector<16x8xf32>, vector<8x8xf32> -> vector<8x8xf32>
    %903 = arith.addf %732, %902 : vector<8x8xf32>
    %904 = vector.extract_strided_slice %12 {offsets = [0, 10], sizes = [8, 2], strides = [1, 1]} : vector<8x16xi32> to vector<8x2xi32>
    %905 = vector.extract_strided_slice %13 {offsets = [0, 10], sizes = [8, 2], strides = [1, 1]} : vector<8x16xi32> to vector<8x2xi32>
    %906 = vector.extract_strided_slice %10 {offsets = [0, 10], sizes = [8, 2], strides = [1, 1]} : vector<8x16xf32> to vector<8x2xf32>
    %907 = vector.extract_strided_slice %11 {offsets = [0, 10], sizes = [8, 2], strides = [1, 1]} : vector<8x16xf32> to vector<8x2xf32>
    %908 = vector.extract_strided_slice %731 {offsets = [0, 2], sizes = [8, 2], strides = [1, 1]} : vector<8x4xf32> to vector<8x2xf32>
    %cst_230 = arith.constant 0.000000e+00 : f32
    %909 = vector.broadcast %cst_230 : f32 to vector<8x4xf32>
    %cst_231 = arith.constant 1.000000e+00 : f32
    %910 = vector.broadcast %cst_231 : f32 to vector<8x2xf32>
    %911 = arith.subf %910, %907 : vector<8x2xf32>
    %c0_i32_232 = arith.constant 0 : i32
    %912 = vector.broadcast %c0_i32_232 : i32 to vector<8x2xi32>
    %913 = arith.addi %905, %912 : vector<8x2xi32>
    %cst_233 = arith.constant 1.000000e+00 : f32
    %914 = vector.broadcast %cst_233 : f32 to vector<8x2xf32>
    %915 = arith.subf %914, %906 : vector<8x2xf32>
    %c0_i32_234 = arith.constant 0 : i32
    %916 = vector.broadcast %c0_i32_234 : i32 to vector<8x2xi32>
    %917 = arith.addi %904, %916 : vector<8x2xi32>
    %c0_i32_235 = arith.constant 0 : i32
    %918 = vector.broadcast %c0_i32_235 : i32 to vector<8x2xi32>
    %919 = arith.cmpi sge, %917, %918 : vector<8x2xi32>
    %c2_i32_236 = arith.constant 2 : i32
    %920 = vector.broadcast %c2_i32_236 : i32 to vector<8x2xi32>
    %921 = arith.cmpi slt, %917, %920 : vector<8x2xi32>
    %922 = arith.andi %919, %921 : vector<8x2xi1>
    %c0_i32_237 = arith.constant 0 : i32
    %923 = vector.broadcast %c0_i32_237 : i32 to vector<8x2xi32>
    %924 = arith.cmpi sge, %913, %923 : vector<8x2xi32>
    %925 = arith.andi %922, %924 : vector<8x2xi1>
    %c2_i32_238 = arith.constant 2 : i32
    %926 = vector.broadcast %c2_i32_238 : i32 to vector<8x2xi32>
    %927 = arith.cmpi slt, %913, %926 : vector<8x2xi32>
    %928 = arith.andi %925, %927 : vector<8x2xi1>
    %929 = arith.mulf %915, %911 : vector<8x2xf32>
    %930 = arith.mulf %929, %908 : vector<8x2xf32>
    %cst_239 = arith.constant 0.000000e+00 : f32
    %931 = vector.broadcast %cst_239 : f32 to vector<8x2xf32>
    %932 = arith.select %928, %930, %931 : vector<8x2xi1>, vector<8x2xf32>
    %c2_i32_240 = arith.constant 2 : i32
    %933 = vector.broadcast %c2_i32_240 : i32 to vector<8x2xi32>
    %934 = arith.muli %913, %933 : vector<8x2xi32>
    %935 = arith.addi %934, %917 : vector<8x2xi32>
    %936 = vector.extract_strided_slice %935 {offsets = [0, 0], sizes = [8, 1], strides = [1, 1]} : vector<8x2xi32> to vector<8x1xi32>
    %937 = vector.broadcast %936 : vector<8x1xi32> to vector<8x4xi32>
    %938 = arith.cmpi eq, %15, %937 : vector<8x4xi32>
    %939 = vector.extract_strided_slice %932 {offsets = [0, 0], sizes = [8, 1], strides = [1, 1]} : vector<8x2xf32> to vector<8x1xf32>
    %cst_241 = arith.constant 0.000000e+00 : f32
    %940 = vector.shape_cast %939 : vector<8x1xf32> to vector<8x1xf32>
    %941 = vector.broadcast %940 : vector<8x1xf32> to vector<8x4xf32>
    %942 = vector.broadcast %cst_241 : f32 to vector<8x4xf32>
    %943 = arith.select %938, %941, %942 : vector<8x4xi1>, vector<8x4xf32>
    %944 = arith.addf %909, %943 : vector<8x4xf32>
    %945 = vector.extract_strided_slice %935 {offsets = [0, 1], sizes = [8, 1], strides = [1, 1]} : vector<8x2xi32> to vector<8x1xi32>
    %946 = vector.broadcast %945 : vector<8x1xi32> to vector<8x4xi32>
    %947 = arith.cmpi eq, %15, %946 : vector<8x4xi32>
    %948 = vector.extract_strided_slice %932 {offsets = [0, 1], sizes = [8, 1], strides = [1, 1]} : vector<8x2xf32> to vector<8x1xf32>
    %cst_242 = arith.constant 0.000000e+00 : f32
    %949 = vector.shape_cast %948 : vector<8x1xf32> to vector<8x1xf32>
    %950 = vector.broadcast %949 : vector<8x1xf32> to vector<8x4xf32>
    %951 = vector.broadcast %cst_242 : f32 to vector<8x4xf32>
    %952 = arith.select %947, %950, %951 : vector<8x4xi1>, vector<8x4xf32>
    %953 = arith.addf %944, %952 : vector<8x4xf32>
    %c1_i32_243 = arith.constant 1 : i32
    %954 = vector.broadcast %c1_i32_243 : i32 to vector<8x2xi32>
    %955 = arith.addi %904, %954 : vector<8x2xi32>
    %c0_i32_244 = arith.constant 0 : i32
    %956 = vector.broadcast %c0_i32_244 : i32 to vector<8x2xi32>
    %957 = arith.cmpi sge, %955, %956 : vector<8x2xi32>
    %c2_i32_245 = arith.constant 2 : i32
    %958 = vector.broadcast %c2_i32_245 : i32 to vector<8x2xi32>
    %959 = arith.cmpi slt, %955, %958 : vector<8x2xi32>
    %960 = arith.andi %957, %959 : vector<8x2xi1>
    %c0_i32_246 = arith.constant 0 : i32
    %961 = vector.broadcast %c0_i32_246 : i32 to vector<8x2xi32>
    %962 = arith.cmpi sge, %913, %961 : vector<8x2xi32>
    %963 = arith.andi %960, %962 : vector<8x2xi1>
    %c2_i32_247 = arith.constant 2 : i32
    %964 = vector.broadcast %c2_i32_247 : i32 to vector<8x2xi32>
    %965 = arith.cmpi slt, %913, %964 : vector<8x2xi32>
    %966 = arith.andi %963, %965 : vector<8x2xi1>
    %967 = arith.mulf %906, %911 : vector<8x2xf32>
    %968 = arith.mulf %967, %908 : vector<8x2xf32>
    %cst_248 = arith.constant 0.000000e+00 : f32
    %969 = vector.broadcast %cst_248 : f32 to vector<8x2xf32>
    %970 = arith.select %966, %968, %969 : vector<8x2xi1>, vector<8x2xf32>
    %c2_i32_249 = arith.constant 2 : i32
    %971 = vector.broadcast %c2_i32_249 : i32 to vector<8x2xi32>
    %972 = arith.muli %913, %971 : vector<8x2xi32>
    %973 = arith.addi %972, %955 : vector<8x2xi32>
    %974 = vector.extract_strided_slice %973 {offsets = [0, 0], sizes = [8, 1], strides = [1, 1]} : vector<8x2xi32> to vector<8x1xi32>
    %975 = vector.broadcast %974 : vector<8x1xi32> to vector<8x4xi32>
    %976 = arith.cmpi eq, %15, %975 : vector<8x4xi32>
    %977 = vector.extract_strided_slice %970 {offsets = [0, 0], sizes = [8, 1], strides = [1, 1]} : vector<8x2xf32> to vector<8x1xf32>
    %cst_250 = arith.constant 0.000000e+00 : f32
    %978 = vector.shape_cast %977 : vector<8x1xf32> to vector<8x1xf32>
    %979 = vector.broadcast %978 : vector<8x1xf32> to vector<8x4xf32>
    %980 = vector.broadcast %cst_250 : f32 to vector<8x4xf32>
    %981 = arith.select %976, %979, %980 : vector<8x4xi1>, vector<8x4xf32>
    %982 = arith.addf %953, %981 : vector<8x4xf32>
    %983 = vector.extract_strided_slice %973 {offsets = [0, 1], sizes = [8, 1], strides = [1, 1]} : vector<8x2xi32> to vector<8x1xi32>
    %984 = vector.broadcast %983 : vector<8x1xi32> to vector<8x4xi32>
    %985 = arith.cmpi eq, %15, %984 : vector<8x4xi32>
    %986 = vector.extract_strided_slice %970 {offsets = [0, 1], sizes = [8, 1], strides = [1, 1]} : vector<8x2xf32> to vector<8x1xf32>
    %cst_251 = arith.constant 0.000000e+00 : f32
    %987 = vector.shape_cast %986 : vector<8x1xf32> to vector<8x1xf32>
    %988 = vector.broadcast %987 : vector<8x1xf32> to vector<8x4xf32>
    %989 = vector.broadcast %cst_251 : f32 to vector<8x4xf32>
    %990 = arith.select %985, %988, %989 : vector<8x4xi1>, vector<8x4xf32>
    %991 = arith.addf %982, %990 : vector<8x4xf32>
    %c1_i32_252 = arith.constant 1 : i32
    %992 = vector.broadcast %c1_i32_252 : i32 to vector<8x2xi32>
    %993 = arith.addi %905, %992 : vector<8x2xi32>
    %cst_253 = arith.constant 1.000000e+00 : f32
    %994 = vector.broadcast %cst_253 : f32 to vector<8x2xf32>
    %995 = arith.subf %994, %906 : vector<8x2xf32>
    %c0_i32_254 = arith.constant 0 : i32
    %996 = vector.broadcast %c0_i32_254 : i32 to vector<8x2xi32>
    %997 = arith.addi %904, %996 : vector<8x2xi32>
    %c0_i32_255 = arith.constant 0 : i32
    %998 = vector.broadcast %c0_i32_255 : i32 to vector<8x2xi32>
    %999 = arith.cmpi sge, %997, %998 : vector<8x2xi32>
    %c2_i32_256 = arith.constant 2 : i32
    %1000 = vector.broadcast %c2_i32_256 : i32 to vector<8x2xi32>
    %1001 = arith.cmpi slt, %997, %1000 : vector<8x2xi32>
    %1002 = arith.andi %999, %1001 : vector<8x2xi1>
    %c0_i32_257 = arith.constant 0 : i32
    %1003 = vector.broadcast %c0_i32_257 : i32 to vector<8x2xi32>
    %1004 = arith.cmpi sge, %993, %1003 : vector<8x2xi32>
    %1005 = arith.andi %1002, %1004 : vector<8x2xi1>
    %c2_i32_258 = arith.constant 2 : i32
    %1006 = vector.broadcast %c2_i32_258 : i32 to vector<8x2xi32>
    %1007 = arith.cmpi slt, %993, %1006 : vector<8x2xi32>
    %1008 = arith.andi %1005, %1007 : vector<8x2xi1>
    %1009 = arith.mulf %995, %907 : vector<8x2xf32>
    %1010 = arith.mulf %1009, %908 : vector<8x2xf32>
    %cst_259 = arith.constant 0.000000e+00 : f32
    %1011 = vector.broadcast %cst_259 : f32 to vector<8x2xf32>
    %1012 = arith.select %1008, %1010, %1011 : vector<8x2xi1>, vector<8x2xf32>
    %c2_i32_260 = arith.constant 2 : i32
    %1013 = vector.broadcast %c2_i32_260 : i32 to vector<8x2xi32>
    %1014 = arith.muli %993, %1013 : vector<8x2xi32>
    %1015 = arith.addi %1014, %997 : vector<8x2xi32>
    %1016 = vector.extract_strided_slice %1015 {offsets = [0, 0], sizes = [8, 1], strides = [1, 1]} : vector<8x2xi32> to vector<8x1xi32>
    %1017 = vector.broadcast %1016 : vector<8x1xi32> to vector<8x4xi32>
    %1018 = arith.cmpi eq, %15, %1017 : vector<8x4xi32>
    %1019 = vector.extract_strided_slice %1012 {offsets = [0, 0], sizes = [8, 1], strides = [1, 1]} : vector<8x2xf32> to vector<8x1xf32>
    %cst_261 = arith.constant 0.000000e+00 : f32
    %1020 = vector.shape_cast %1019 : vector<8x1xf32> to vector<8x1xf32>
    %1021 = vector.broadcast %1020 : vector<8x1xf32> to vector<8x4xf32>
    %1022 = vector.broadcast %cst_261 : f32 to vector<8x4xf32>
    %1023 = arith.select %1018, %1021, %1022 : vector<8x4xi1>, vector<8x4xf32>
    %1024 = arith.addf %991, %1023 : vector<8x4xf32>
    %1025 = vector.extract_strided_slice %1015 {offsets = [0, 1], sizes = [8, 1], strides = [1, 1]} : vector<8x2xi32> to vector<8x1xi32>
    %1026 = vector.broadcast %1025 : vector<8x1xi32> to vector<8x4xi32>
    %1027 = arith.cmpi eq, %15, %1026 : vector<8x4xi32>
    %1028 = vector.extract_strided_slice %1012 {offsets = [0, 1], sizes = [8, 1], strides = [1, 1]} : vector<8x2xf32> to vector<8x1xf32>
    %cst_262 = arith.constant 0.000000e+00 : f32
    %1029 = vector.shape_cast %1028 : vector<8x1xf32> to vector<8x1xf32>
    %1030 = vector.broadcast %1029 : vector<8x1xf32> to vector<8x4xf32>
    %1031 = vector.broadcast %cst_262 : f32 to vector<8x4xf32>
    %1032 = arith.select %1027, %1030, %1031 : vector<8x4xi1>, vector<8x4xf32>
    %1033 = arith.addf %1024, %1032 : vector<8x4xf32>
    %c1_i32_263 = arith.constant 1 : i32
    %1034 = vector.broadcast %c1_i32_263 : i32 to vector<8x2xi32>
    %1035 = arith.addi %904, %1034 : vector<8x2xi32>
    %c0_i32_264 = arith.constant 0 : i32
    %1036 = vector.broadcast %c0_i32_264 : i32 to vector<8x2xi32>
    %1037 = arith.cmpi sge, %1035, %1036 : vector<8x2xi32>
    %c2_i32_265 = arith.constant 2 : i32
    %1038 = vector.broadcast %c2_i32_265 : i32 to vector<8x2xi32>
    %1039 = arith.cmpi slt, %1035, %1038 : vector<8x2xi32>
    %1040 = arith.andi %1037, %1039 : vector<8x2xi1>
    %c0_i32_266 = arith.constant 0 : i32
    %1041 = vector.broadcast %c0_i32_266 : i32 to vector<8x2xi32>
    %1042 = arith.cmpi sge, %993, %1041 : vector<8x2xi32>
    %1043 = arith.andi %1040, %1042 : vector<8x2xi1>
    %c2_i32_267 = arith.constant 2 : i32
    %1044 = vector.broadcast %c2_i32_267 : i32 to vector<8x2xi32>
    %1045 = arith.cmpi slt, %993, %1044 : vector<8x2xi32>
    %1046 = arith.andi %1043, %1045 : vector<8x2xi1>
    %1047 = arith.mulf %906, %907 : vector<8x2xf32>
    %1048 = arith.mulf %1047, %908 : vector<8x2xf32>
    %cst_268 = arith.constant 0.000000e+00 : f32
    %1049 = vector.broadcast %cst_268 : f32 to vector<8x2xf32>
    %1050 = arith.select %1046, %1048, %1049 : vector<8x2xi1>, vector<8x2xf32>
    %c2_i32_269 = arith.constant 2 : i32
    %1051 = vector.broadcast %c2_i32_269 : i32 to vector<8x2xi32>
    %1052 = arith.muli %993, %1051 : vector<8x2xi32>
    %1053 = arith.addi %1052, %1035 : vector<8x2xi32>
    %1054 = vector.extract_strided_slice %1053 {offsets = [0, 0], sizes = [8, 1], strides = [1, 1]} : vector<8x2xi32> to vector<8x1xi32>
    %1055 = vector.broadcast %1054 : vector<8x1xi32> to vector<8x4xi32>
    %1056 = arith.cmpi eq, %15, %1055 : vector<8x4xi32>
    %1057 = vector.extract_strided_slice %1050 {offsets = [0, 0], sizes = [8, 1], strides = [1, 1]} : vector<8x2xf32> to vector<8x1xf32>
    %cst_270 = arith.constant 0.000000e+00 : f32
    %1058 = vector.shape_cast %1057 : vector<8x1xf32> to vector<8x1xf32>
    %1059 = vector.broadcast %1058 : vector<8x1xf32> to vector<8x4xf32>
    %1060 = vector.broadcast %cst_270 : f32 to vector<8x4xf32>
    %1061 = arith.select %1056, %1059, %1060 : vector<8x4xi1>, vector<8x4xf32>
    %1062 = arith.addf %1033, %1061 : vector<8x4xf32>
    %1063 = vector.extract_strided_slice %1053 {offsets = [0, 1], sizes = [8, 1], strides = [1, 1]} : vector<8x2xi32> to vector<8x1xi32>
    %1064 = vector.broadcast %1063 : vector<8x1xi32> to vector<8x4xi32>
    %1065 = arith.cmpi eq, %15, %1064 : vector<8x4xi32>
    %1066 = vector.extract_strided_slice %1050 {offsets = [0, 1], sizes = [8, 1], strides = [1, 1]} : vector<8x2xf32> to vector<8x1xf32>
    %cst_271 = arith.constant 0.000000e+00 : f32
    %1067 = vector.shape_cast %1066 : vector<8x1xf32> to vector<8x1xf32>
    %1068 = vector.broadcast %1067 : vector<8x1xf32> to vector<8x4xf32>
    %1069 = vector.broadcast %cst_271 : f32 to vector<8x4xf32>
    %1070 = arith.select %1065, %1068, %1069 : vector<8x4xi1>, vector<8x4xf32>
    %1071 = arith.addf %1062, %1070 : vector<8x4xf32>
    %1072 = vector.extract_strided_slice %1 {offsets = [16, 16], sizes = [4, 8], strides = [1, 1]} : vector<20x32xf32> to vector<4x8xf32>
    %cst_272 = arith.constant dense<0.000000e+00> : vector<8x8xf32>
    %1073 = tpu.matmul %1071, %1072, %cst_272 {dimension_numbers = #tpu.dot_dimension_numbers<[1], [0], [0], [1], [0, 0, 1, 1], [], []>} : vector<8x4xf32>, vector<4x8xf32>, vector<8x8xf32> -> vector<8x8xf32>
    %1074 = arith.addf %903, %1073 : vector<8x8xf32>
    %1075 = vector.extract_strided_slice %7 {offsets = [0, 12], sizes = [8, 4], strides = [1, 1]} : vector<8x16xf32> to vector<8x4xf32>
    %cst_273 = arith.constant dense<0xFF800000> : vector<8xf32>
    %1076 = vector.multi_reduction <maximumf>, %1075, %cst_273 [1] : vector<8x4xf32> to vector<8xf32>
    %1077 = vector.shape_cast %1076 : vector<8xf32> to vector<8x1xf32>
    %1078 = vector.broadcast %1077 : vector<8x1xf32> to vector<8x4xf32>
    %1079 = arith.subf %1075, %1078 : vector<8x4xf32>
    %1080 = math.exp %1079 : vector<8x4xf32>
    %cst_274 = arith.constant dense<0.000000e+00> : vector<8xf32>
    %1081 = vector.multi_reduction <add>, %1080, %cst_274 [1] : vector<8x4xf32> to vector<8xf32>
    %1082 = vector.shape_cast %1081 : vector<8xf32> to vector<8x1xf32>
    %1083 = vector.broadcast %1082 : vector<8x1xf32> to vector<8x4xf32>
    %1084 = arith.divf %1080, %1083 : vector<8x4xf32>
    %cst_275 = arith.constant 0.000000e+00 : f32
    %1085 = vector.broadcast %cst_275 : f32 to vector<8x8xf32>
    %1086 = vector.extract_strided_slice %12 {offsets = [0, 12], sizes = [8, 2], strides = [1, 1]} : vector<8x16xi32> to vector<8x2xi32>
    %1087 = vector.extract_strided_slice %13 {offsets = [0, 12], sizes = [8, 2], strides = [1, 1]} : vector<8x16xi32> to vector<8x2xi32>
    %1088 = vector.extract_strided_slice %10 {offsets = [0, 12], sizes = [8, 2], strides = [1, 1]} : vector<8x16xf32> to vector<8x2xf32>
    %1089 = vector.extract_strided_slice %11 {offsets = [0, 12], sizes = [8, 2], strides = [1, 1]} : vector<8x16xf32> to vector<8x2xf32>
    %1090 = vector.extract_strided_slice %1084 {offsets = [0, 0], sizes = [8, 2], strides = [1, 1]} : vector<8x4xf32> to vector<8x2xf32>
    %cst_276 = arith.constant 0.000000e+00 : f32
    %1091 = vector.broadcast %cst_276 : f32 to vector<8x16xf32>
    %cst_277 = arith.constant 1.000000e+00 : f32
    %1092 = vector.broadcast %cst_277 : f32 to vector<8x2xf32>
    %1093 = arith.subf %1092, %1089 : vector<8x2xf32>
    %c0_i32_278 = arith.constant 0 : i32
    %1094 = vector.broadcast %c0_i32_278 : i32 to vector<8x2xi32>
    %1095 = arith.addi %1087, %1094 : vector<8x2xi32>
    %cst_279 = arith.constant 1.000000e+00 : f32
    %1096 = vector.broadcast %cst_279 : f32 to vector<8x2xf32>
    %1097 = arith.subf %1096, %1088 : vector<8x2xf32>
    %c0_i32_280 = arith.constant 0 : i32
    %1098 = vector.broadcast %c0_i32_280 : i32 to vector<8x2xi32>
    %1099 = arith.addi %1086, %1098 : vector<8x2xi32>
    %c0_i32_281 = arith.constant 0 : i32
    %1100 = vector.broadcast %c0_i32_281 : i32 to vector<8x2xi32>
    %1101 = arith.cmpi sge, %1099, %1100 : vector<8x2xi32>
    %c4_i32_282 = arith.constant 4 : i32
    %1102 = vector.broadcast %c4_i32_282 : i32 to vector<8x2xi32>
    %1103 = arith.cmpi slt, %1099, %1102 : vector<8x2xi32>
    %1104 = arith.andi %1101, %1103 : vector<8x2xi1>
    %c0_i32_283 = arith.constant 0 : i32
    %1105 = vector.broadcast %c0_i32_283 : i32 to vector<8x2xi32>
    %1106 = arith.cmpi sge, %1095, %1105 : vector<8x2xi32>
    %1107 = arith.andi %1104, %1106 : vector<8x2xi1>
    %c4_i32_284 = arith.constant 4 : i32
    %1108 = vector.broadcast %c4_i32_284 : i32 to vector<8x2xi32>
    %1109 = arith.cmpi slt, %1095, %1108 : vector<8x2xi32>
    %1110 = arith.andi %1107, %1109 : vector<8x2xi1>
    %1111 = arith.mulf %1097, %1093 : vector<8x2xf32>
    %1112 = arith.mulf %1111, %1090 : vector<8x2xf32>
    %cst_285 = arith.constant 0.000000e+00 : f32
    %1113 = vector.broadcast %cst_285 : f32 to vector<8x2xf32>
    %1114 = arith.select %1110, %1112, %1113 : vector<8x2xi1>, vector<8x2xf32>
    %c4_i32_286 = arith.constant 4 : i32
    %1115 = vector.broadcast %c4_i32_286 : i32 to vector<8x2xi32>
    %1116 = arith.muli %1095, %1115 : vector<8x2xi32>
    %1117 = arith.addi %1116, %1099 : vector<8x2xi32>
    %1118 = vector.extract_strided_slice %1117 {offsets = [0, 0], sizes = [8, 1], strides = [1, 1]} : vector<8x2xi32> to vector<8x1xi32>
    %1119 = vector.broadcast %1118 : vector<8x1xi32> to vector<8x16xi32>
    %1120 = arith.cmpi eq, %14, %1119 : vector<8x16xi32>
    %1121 = vector.extract_strided_slice %1114 {offsets = [0, 0], sizes = [8, 1], strides = [1, 1]} : vector<8x2xf32> to vector<8x1xf32>
    %cst_287 = arith.constant 0.000000e+00 : f32
    %1122 = vector.shape_cast %1121 : vector<8x1xf32> to vector<8x1xf32>
    %1123 = vector.broadcast %1122 : vector<8x1xf32> to vector<8x16xf32>
    %1124 = vector.broadcast %cst_287 : f32 to vector<8x16xf32>
    %1125 = arith.select %1120, %1123, %1124 : vector<8x16xi1>, vector<8x16xf32>
    %1126 = arith.addf %1091, %1125 : vector<8x16xf32>
    %1127 = vector.extract_strided_slice %1117 {offsets = [0, 1], sizes = [8, 1], strides = [1, 1]} : vector<8x2xi32> to vector<8x1xi32>
    %1128 = vector.broadcast %1127 : vector<8x1xi32> to vector<8x16xi32>
    %1129 = arith.cmpi eq, %14, %1128 : vector<8x16xi32>
    %1130 = vector.extract_strided_slice %1114 {offsets = [0, 1], sizes = [8, 1], strides = [1, 1]} : vector<8x2xf32> to vector<8x1xf32>
    %cst_288 = arith.constant 0.000000e+00 : f32
    %1131 = vector.shape_cast %1130 : vector<8x1xf32> to vector<8x1xf32>
    %1132 = vector.broadcast %1131 : vector<8x1xf32> to vector<8x16xf32>
    %1133 = vector.broadcast %cst_288 : f32 to vector<8x16xf32>
    %1134 = arith.select %1129, %1132, %1133 : vector<8x16xi1>, vector<8x16xf32>
    %1135 = arith.addf %1126, %1134 : vector<8x16xf32>
    %c1_i32_289 = arith.constant 1 : i32
    %1136 = vector.broadcast %c1_i32_289 : i32 to vector<8x2xi32>
    %1137 = arith.addi %1086, %1136 : vector<8x2xi32>
    %c0_i32_290 = arith.constant 0 : i32
    %1138 = vector.broadcast %c0_i32_290 : i32 to vector<8x2xi32>
    %1139 = arith.cmpi sge, %1137, %1138 : vector<8x2xi32>
    %c4_i32_291 = arith.constant 4 : i32
    %1140 = vector.broadcast %c4_i32_291 : i32 to vector<8x2xi32>
    %1141 = arith.cmpi slt, %1137, %1140 : vector<8x2xi32>
    %1142 = arith.andi %1139, %1141 : vector<8x2xi1>
    %c0_i32_292 = arith.constant 0 : i32
    %1143 = vector.broadcast %c0_i32_292 : i32 to vector<8x2xi32>
    %1144 = arith.cmpi sge, %1095, %1143 : vector<8x2xi32>
    %1145 = arith.andi %1142, %1144 : vector<8x2xi1>
    %c4_i32_293 = arith.constant 4 : i32
    %1146 = vector.broadcast %c4_i32_293 : i32 to vector<8x2xi32>
    %1147 = arith.cmpi slt, %1095, %1146 : vector<8x2xi32>
    %1148 = arith.andi %1145, %1147 : vector<8x2xi1>
    %1149 = arith.mulf %1088, %1093 : vector<8x2xf32>
    %1150 = arith.mulf %1149, %1090 : vector<8x2xf32>
    %cst_294 = arith.constant 0.000000e+00 : f32
    %1151 = vector.broadcast %cst_294 : f32 to vector<8x2xf32>
    %1152 = arith.select %1148, %1150, %1151 : vector<8x2xi1>, vector<8x2xf32>
    %c4_i32_295 = arith.constant 4 : i32
    %1153 = vector.broadcast %c4_i32_295 : i32 to vector<8x2xi32>
    %1154 = arith.muli %1095, %1153 : vector<8x2xi32>
    %1155 = arith.addi %1154, %1137 : vector<8x2xi32>
    %1156 = vector.extract_strided_slice %1155 {offsets = [0, 0], sizes = [8, 1], strides = [1, 1]} : vector<8x2xi32> to vector<8x1xi32>
    %1157 = vector.broadcast %1156 : vector<8x1xi32> to vector<8x16xi32>
    %1158 = arith.cmpi eq, %14, %1157 : vector<8x16xi32>
    %1159 = vector.extract_strided_slice %1152 {offsets = [0, 0], sizes = [8, 1], strides = [1, 1]} : vector<8x2xf32> to vector<8x1xf32>
    %cst_296 = arith.constant 0.000000e+00 : f32
    %1160 = vector.shape_cast %1159 : vector<8x1xf32> to vector<8x1xf32>
    %1161 = vector.broadcast %1160 : vector<8x1xf32> to vector<8x16xf32>
    %1162 = vector.broadcast %cst_296 : f32 to vector<8x16xf32>
    %1163 = arith.select %1158, %1161, %1162 : vector<8x16xi1>, vector<8x16xf32>
    %1164 = arith.addf %1135, %1163 : vector<8x16xf32>
    %1165 = vector.extract_strided_slice %1155 {offsets = [0, 1], sizes = [8, 1], strides = [1, 1]} : vector<8x2xi32> to vector<8x1xi32>
    %1166 = vector.broadcast %1165 : vector<8x1xi32> to vector<8x16xi32>
    %1167 = arith.cmpi eq, %14, %1166 : vector<8x16xi32>
    %1168 = vector.extract_strided_slice %1152 {offsets = [0, 1], sizes = [8, 1], strides = [1, 1]} : vector<8x2xf32> to vector<8x1xf32>
    %cst_297 = arith.constant 0.000000e+00 : f32
    %1169 = vector.shape_cast %1168 : vector<8x1xf32> to vector<8x1xf32>
    %1170 = vector.broadcast %1169 : vector<8x1xf32> to vector<8x16xf32>
    %1171 = vector.broadcast %cst_297 : f32 to vector<8x16xf32>
    %1172 = arith.select %1167, %1170, %1171 : vector<8x16xi1>, vector<8x16xf32>
    %1173 = arith.addf %1164, %1172 : vector<8x16xf32>
    %c1_i32_298 = arith.constant 1 : i32
    %1174 = vector.broadcast %c1_i32_298 : i32 to vector<8x2xi32>
    %1175 = arith.addi %1087, %1174 : vector<8x2xi32>
    %cst_299 = arith.constant 1.000000e+00 : f32
    %1176 = vector.broadcast %cst_299 : f32 to vector<8x2xf32>
    %1177 = arith.subf %1176, %1088 : vector<8x2xf32>
    %c0_i32_300 = arith.constant 0 : i32
    %1178 = vector.broadcast %c0_i32_300 : i32 to vector<8x2xi32>
    %1179 = arith.addi %1086, %1178 : vector<8x2xi32>
    %c0_i32_301 = arith.constant 0 : i32
    %1180 = vector.broadcast %c0_i32_301 : i32 to vector<8x2xi32>
    %1181 = arith.cmpi sge, %1179, %1180 : vector<8x2xi32>
    %c4_i32_302 = arith.constant 4 : i32
    %1182 = vector.broadcast %c4_i32_302 : i32 to vector<8x2xi32>
    %1183 = arith.cmpi slt, %1179, %1182 : vector<8x2xi32>
    %1184 = arith.andi %1181, %1183 : vector<8x2xi1>
    %c0_i32_303 = arith.constant 0 : i32
    %1185 = vector.broadcast %c0_i32_303 : i32 to vector<8x2xi32>
    %1186 = arith.cmpi sge, %1175, %1185 : vector<8x2xi32>
    %1187 = arith.andi %1184, %1186 : vector<8x2xi1>
    %c4_i32_304 = arith.constant 4 : i32
    %1188 = vector.broadcast %c4_i32_304 : i32 to vector<8x2xi32>
    %1189 = arith.cmpi slt, %1175, %1188 : vector<8x2xi32>
    %1190 = arith.andi %1187, %1189 : vector<8x2xi1>
    %1191 = arith.mulf %1177, %1089 : vector<8x2xf32>
    %1192 = arith.mulf %1191, %1090 : vector<8x2xf32>
    %cst_305 = arith.constant 0.000000e+00 : f32
    %1193 = vector.broadcast %cst_305 : f32 to vector<8x2xf32>
    %1194 = arith.select %1190, %1192, %1193 : vector<8x2xi1>, vector<8x2xf32>
    %c4_i32_306 = arith.constant 4 : i32
    %1195 = vector.broadcast %c4_i32_306 : i32 to vector<8x2xi32>
    %1196 = arith.muli %1175, %1195 : vector<8x2xi32>
    %1197 = arith.addi %1196, %1179 : vector<8x2xi32>
    %1198 = vector.extract_strided_slice %1197 {offsets = [0, 0], sizes = [8, 1], strides = [1, 1]} : vector<8x2xi32> to vector<8x1xi32>
    %1199 = vector.broadcast %1198 : vector<8x1xi32> to vector<8x16xi32>
    %1200 = arith.cmpi eq, %14, %1199 : vector<8x16xi32>
    %1201 = vector.extract_strided_slice %1194 {offsets = [0, 0], sizes = [8, 1], strides = [1, 1]} : vector<8x2xf32> to vector<8x1xf32>
    %cst_307 = arith.constant 0.000000e+00 : f32
    %1202 = vector.shape_cast %1201 : vector<8x1xf32> to vector<8x1xf32>
    %1203 = vector.broadcast %1202 : vector<8x1xf32> to vector<8x16xf32>
    %1204 = vector.broadcast %cst_307 : f32 to vector<8x16xf32>
    %1205 = arith.select %1200, %1203, %1204 : vector<8x16xi1>, vector<8x16xf32>
    %1206 = arith.addf %1173, %1205 : vector<8x16xf32>
    %1207 = vector.extract_strided_slice %1197 {offsets = [0, 1], sizes = [8, 1], strides = [1, 1]} : vector<8x2xi32> to vector<8x1xi32>
    %1208 = vector.broadcast %1207 : vector<8x1xi32> to vector<8x16xi32>
    %1209 = arith.cmpi eq, %14, %1208 : vector<8x16xi32>
    %1210 = vector.extract_strided_slice %1194 {offsets = [0, 1], sizes = [8, 1], strides = [1, 1]} : vector<8x2xf32> to vector<8x1xf32>
    %cst_308 = arith.constant 0.000000e+00 : f32
    %1211 = vector.shape_cast %1210 : vector<8x1xf32> to vector<8x1xf32>
    %1212 = vector.broadcast %1211 : vector<8x1xf32> to vector<8x16xf32>
    %1213 = vector.broadcast %cst_308 : f32 to vector<8x16xf32>
    %1214 = arith.select %1209, %1212, %1213 : vector<8x16xi1>, vector<8x16xf32>
    %1215 = arith.addf %1206, %1214 : vector<8x16xf32>
    %c1_i32_309 = arith.constant 1 : i32
    %1216 = vector.broadcast %c1_i32_309 : i32 to vector<8x2xi32>
    %1217 = arith.addi %1086, %1216 : vector<8x2xi32>
    %c0_i32_310 = arith.constant 0 : i32
    %1218 = vector.broadcast %c0_i32_310 : i32 to vector<8x2xi32>
    %1219 = arith.cmpi sge, %1217, %1218 : vector<8x2xi32>
    %c4_i32_311 = arith.constant 4 : i32
    %1220 = vector.broadcast %c4_i32_311 : i32 to vector<8x2xi32>
    %1221 = arith.cmpi slt, %1217, %1220 : vector<8x2xi32>
    %1222 = arith.andi %1219, %1221 : vector<8x2xi1>
    %c0_i32_312 = arith.constant 0 : i32
    %1223 = vector.broadcast %c0_i32_312 : i32 to vector<8x2xi32>
    %1224 = arith.cmpi sge, %1175, %1223 : vector<8x2xi32>
    %1225 = arith.andi %1222, %1224 : vector<8x2xi1>
    %c4_i32_313 = arith.constant 4 : i32
    %1226 = vector.broadcast %c4_i32_313 : i32 to vector<8x2xi32>
    %1227 = arith.cmpi slt, %1175, %1226 : vector<8x2xi32>
    %1228 = arith.andi %1225, %1227 : vector<8x2xi1>
    %1229 = arith.mulf %1088, %1089 : vector<8x2xf32>
    %1230 = arith.mulf %1229, %1090 : vector<8x2xf32>
    %cst_314 = arith.constant 0.000000e+00 : f32
    %1231 = vector.broadcast %cst_314 : f32 to vector<8x2xf32>
    %1232 = arith.select %1228, %1230, %1231 : vector<8x2xi1>, vector<8x2xf32>
    %c4_i32_315 = arith.constant 4 : i32
    %1233 = vector.broadcast %c4_i32_315 : i32 to vector<8x2xi32>
    %1234 = arith.muli %1175, %1233 : vector<8x2xi32>
    %1235 = arith.addi %1234, %1217 : vector<8x2xi32>
    %1236 = vector.extract_strided_slice %1235 {offsets = [0, 0], sizes = [8, 1], strides = [1, 1]} : vector<8x2xi32> to vector<8x1xi32>
    %1237 = vector.broadcast %1236 : vector<8x1xi32> to vector<8x16xi32>
    %1238 = arith.cmpi eq, %14, %1237 : vector<8x16xi32>
    %1239 = vector.extract_strided_slice %1232 {offsets = [0, 0], sizes = [8, 1], strides = [1, 1]} : vector<8x2xf32> to vector<8x1xf32>
    %cst_316 = arith.constant 0.000000e+00 : f32
    %1240 = vector.shape_cast %1239 : vector<8x1xf32> to vector<8x1xf32>
    %1241 = vector.broadcast %1240 : vector<8x1xf32> to vector<8x16xf32>
    %1242 = vector.broadcast %cst_316 : f32 to vector<8x16xf32>
    %1243 = arith.select %1238, %1241, %1242 : vector<8x16xi1>, vector<8x16xf32>
    %1244 = arith.addf %1215, %1243 : vector<8x16xf32>
    %1245 = vector.extract_strided_slice %1235 {offsets = [0, 1], sizes = [8, 1], strides = [1, 1]} : vector<8x2xi32> to vector<8x1xi32>
    %1246 = vector.broadcast %1245 : vector<8x1xi32> to vector<8x16xi32>
    %1247 = arith.cmpi eq, %14, %1246 : vector<8x16xi32>
    %1248 = vector.extract_strided_slice %1232 {offsets = [0, 1], sizes = [8, 1], strides = [1, 1]} : vector<8x2xf32> to vector<8x1xf32>
    %cst_317 = arith.constant 0.000000e+00 : f32
    %1249 = vector.shape_cast %1248 : vector<8x1xf32> to vector<8x1xf32>
    %1250 = vector.broadcast %1249 : vector<8x1xf32> to vector<8x16xf32>
    %1251 = vector.broadcast %cst_317 : f32 to vector<8x16xf32>
    %1252 = arith.select %1247, %1250, %1251 : vector<8x16xi1>, vector<8x16xf32>
    %1253 = arith.addf %1244, %1252 : vector<8x16xf32>
    %1254 = vector.extract_strided_slice %1 {offsets = [0, 24], sizes = [16, 8], strides = [1, 1]} : vector<20x32xf32> to vector<16x8xf32>
    %cst_318 = arith.constant dense<0.000000e+00> : vector<8x8xf32>
    %1255 = tpu.matmul %1253, %1254, %cst_318 {dimension_numbers = #tpu.dot_dimension_numbers<[1], [0], [0], [1], [0, 0, 1, 1], [], []>} : vector<8x16xf32>, vector<16x8xf32>, vector<8x8xf32> -> vector<8x8xf32>
    %1256 = arith.addf %1085, %1255 : vector<8x8xf32>
    %1257 = vector.extract_strided_slice %12 {offsets = [0, 14], sizes = [8, 2], strides = [1, 1]} : vector<8x16xi32> to vector<8x2xi32>
    %1258 = vector.extract_strided_slice %13 {offsets = [0, 14], sizes = [8, 2], strides = [1, 1]} : vector<8x16xi32> to vector<8x2xi32>
    %1259 = vector.extract_strided_slice %10 {offsets = [0, 14], sizes = [8, 2], strides = [1, 1]} : vector<8x16xf32> to vector<8x2xf32>
    %1260 = vector.extract_strided_slice %11 {offsets = [0, 14], sizes = [8, 2], strides = [1, 1]} : vector<8x16xf32> to vector<8x2xf32>
    %1261 = vector.extract_strided_slice %1084 {offsets = [0, 2], sizes = [8, 2], strides = [1, 1]} : vector<8x4xf32> to vector<8x2xf32>
    %cst_319 = arith.constant 0.000000e+00 : f32
    %1262 = vector.broadcast %cst_319 : f32 to vector<8x4xf32>
    %cst_320 = arith.constant 1.000000e+00 : f32
    %1263 = vector.broadcast %cst_320 : f32 to vector<8x2xf32>
    %1264 = arith.subf %1263, %1260 : vector<8x2xf32>
    %c0_i32_321 = arith.constant 0 : i32
    %1265 = vector.broadcast %c0_i32_321 : i32 to vector<8x2xi32>
    %1266 = arith.addi %1258, %1265 : vector<8x2xi32>
    %cst_322 = arith.constant 1.000000e+00 : f32
    %1267 = vector.broadcast %cst_322 : f32 to vector<8x2xf32>
    %1268 = arith.subf %1267, %1259 : vector<8x2xf32>
    %c0_i32_323 = arith.constant 0 : i32
    %1269 = vector.broadcast %c0_i32_323 : i32 to vector<8x2xi32>
    %1270 = arith.addi %1257, %1269 : vector<8x2xi32>
    %c0_i32_324 = arith.constant 0 : i32
    %1271 = vector.broadcast %c0_i32_324 : i32 to vector<8x2xi32>
    %1272 = arith.cmpi sge, %1270, %1271 : vector<8x2xi32>
    %c2_i32_325 = arith.constant 2 : i32
    %1273 = vector.broadcast %c2_i32_325 : i32 to vector<8x2xi32>
    %1274 = arith.cmpi slt, %1270, %1273 : vector<8x2xi32>
    %1275 = arith.andi %1272, %1274 : vector<8x2xi1>
    %c0_i32_326 = arith.constant 0 : i32
    %1276 = vector.broadcast %c0_i32_326 : i32 to vector<8x2xi32>
    %1277 = arith.cmpi sge, %1266, %1276 : vector<8x2xi32>
    %1278 = arith.andi %1275, %1277 : vector<8x2xi1>
    %c2_i32_327 = arith.constant 2 : i32
    %1279 = vector.broadcast %c2_i32_327 : i32 to vector<8x2xi32>
    %1280 = arith.cmpi slt, %1266, %1279 : vector<8x2xi32>
    %1281 = arith.andi %1278, %1280 : vector<8x2xi1>
    %1282 = arith.mulf %1268, %1264 : vector<8x2xf32>
    %1283 = arith.mulf %1282, %1261 : vector<8x2xf32>
    %cst_328 = arith.constant 0.000000e+00 : f32
    %1284 = vector.broadcast %cst_328 : f32 to vector<8x2xf32>
    %1285 = arith.select %1281, %1283, %1284 : vector<8x2xi1>, vector<8x2xf32>
    %c2_i32_329 = arith.constant 2 : i32
    %1286 = vector.broadcast %c2_i32_329 : i32 to vector<8x2xi32>
    %1287 = arith.muli %1266, %1286 : vector<8x2xi32>
    %1288 = arith.addi %1287, %1270 : vector<8x2xi32>
    %1289 = vector.extract_strided_slice %1288 {offsets = [0, 0], sizes = [8, 1], strides = [1, 1]} : vector<8x2xi32> to vector<8x1xi32>
    %1290 = vector.broadcast %1289 : vector<8x1xi32> to vector<8x4xi32>
    %1291 = arith.cmpi eq, %15, %1290 : vector<8x4xi32>
    %1292 = vector.extract_strided_slice %1285 {offsets = [0, 0], sizes = [8, 1], strides = [1, 1]} : vector<8x2xf32> to vector<8x1xf32>
    %cst_330 = arith.constant 0.000000e+00 : f32
    %1293 = vector.shape_cast %1292 : vector<8x1xf32> to vector<8x1xf32>
    %1294 = vector.broadcast %1293 : vector<8x1xf32> to vector<8x4xf32>
    %1295 = vector.broadcast %cst_330 : f32 to vector<8x4xf32>
    %1296 = arith.select %1291, %1294, %1295 : vector<8x4xi1>, vector<8x4xf32>
    %1297 = arith.addf %1262, %1296 : vector<8x4xf32>
    %1298 = vector.extract_strided_slice %1288 {offsets = [0, 1], sizes = [8, 1], strides = [1, 1]} : vector<8x2xi32> to vector<8x1xi32>
    %1299 = vector.broadcast %1298 : vector<8x1xi32> to vector<8x4xi32>
    %1300 = arith.cmpi eq, %15, %1299 : vector<8x4xi32>
    %1301 = vector.extract_strided_slice %1285 {offsets = [0, 1], sizes = [8, 1], strides = [1, 1]} : vector<8x2xf32> to vector<8x1xf32>
    %cst_331 = arith.constant 0.000000e+00 : f32
    %1302 = vector.shape_cast %1301 : vector<8x1xf32> to vector<8x1xf32>
    %1303 = vector.broadcast %1302 : vector<8x1xf32> to vector<8x4xf32>
    %1304 = vector.broadcast %cst_331 : f32 to vector<8x4xf32>
    %1305 = arith.select %1300, %1303, %1304 : vector<8x4xi1>, vector<8x4xf32>
    %1306 = arith.addf %1297, %1305 : vector<8x4xf32>
    %c1_i32_332 = arith.constant 1 : i32
    %1307 = vector.broadcast %c1_i32_332 : i32 to vector<8x2xi32>
    %1308 = arith.addi %1257, %1307 : vector<8x2xi32>
    %c0_i32_333 = arith.constant 0 : i32
    %1309 = vector.broadcast %c0_i32_333 : i32 to vector<8x2xi32>
    %1310 = arith.cmpi sge, %1308, %1309 : vector<8x2xi32>
    %c2_i32_334 = arith.constant 2 : i32
    %1311 = vector.broadcast %c2_i32_334 : i32 to vector<8x2xi32>
    %1312 = arith.cmpi slt, %1308, %1311 : vector<8x2xi32>
    %1313 = arith.andi %1310, %1312 : vector<8x2xi1>
    %c0_i32_335 = arith.constant 0 : i32
    %1314 = vector.broadcast %c0_i32_335 : i32 to vector<8x2xi32>
    %1315 = arith.cmpi sge, %1266, %1314 : vector<8x2xi32>
    %1316 = arith.andi %1313, %1315 : vector<8x2xi1>
    %c2_i32_336 = arith.constant 2 : i32
    %1317 = vector.broadcast %c2_i32_336 : i32 to vector<8x2xi32>
    %1318 = arith.cmpi slt, %1266, %1317 : vector<8x2xi32>
    %1319 = arith.andi %1316, %1318 : vector<8x2xi1>
    %1320 = arith.mulf %1259, %1264 : vector<8x2xf32>
    %1321 = arith.mulf %1320, %1261 : vector<8x2xf32>
    %cst_337 = arith.constant 0.000000e+00 : f32
    %1322 = vector.broadcast %cst_337 : f32 to vector<8x2xf32>
    %1323 = arith.select %1319, %1321, %1322 : vector<8x2xi1>, vector<8x2xf32>
    %c2_i32_338 = arith.constant 2 : i32
    %1324 = vector.broadcast %c2_i32_338 : i32 to vector<8x2xi32>
    %1325 = arith.muli %1266, %1324 : vector<8x2xi32>
    %1326 = arith.addi %1325, %1308 : vector<8x2xi32>
    %1327 = vector.extract_strided_slice %1326 {offsets = [0, 0], sizes = [8, 1], strides = [1, 1]} : vector<8x2xi32> to vector<8x1xi32>
    %1328 = vector.broadcast %1327 : vector<8x1xi32> to vector<8x4xi32>
    %1329 = arith.cmpi eq, %15, %1328 : vector<8x4xi32>
    %1330 = vector.extract_strided_slice %1323 {offsets = [0, 0], sizes = [8, 1], strides = [1, 1]} : vector<8x2xf32> to vector<8x1xf32>
    %cst_339 = arith.constant 0.000000e+00 : f32
    %1331 = vector.shape_cast %1330 : vector<8x1xf32> to vector<8x1xf32>
    %1332 = vector.broadcast %1331 : vector<8x1xf32> to vector<8x4xf32>
    %1333 = vector.broadcast %cst_339 : f32 to vector<8x4xf32>
    %1334 = arith.select %1329, %1332, %1333 : vector<8x4xi1>, vector<8x4xf32>
    %1335 = arith.addf %1306, %1334 : vector<8x4xf32>
    %1336 = vector.extract_strided_slice %1326 {offsets = [0, 1], sizes = [8, 1], strides = [1, 1]} : vector<8x2xi32> to vector<8x1xi32>
    %1337 = vector.broadcast %1336 : vector<8x1xi32> to vector<8x4xi32>
    %1338 = arith.cmpi eq, %15, %1337 : vector<8x4xi32>
    %1339 = vector.extract_strided_slice %1323 {offsets = [0, 1], sizes = [8, 1], strides = [1, 1]} : vector<8x2xf32> to vector<8x1xf32>
    %cst_340 = arith.constant 0.000000e+00 : f32
    %1340 = vector.shape_cast %1339 : vector<8x1xf32> to vector<8x1xf32>
    %1341 = vector.broadcast %1340 : vector<8x1xf32> to vector<8x4xf32>
    %1342 = vector.broadcast %cst_340 : f32 to vector<8x4xf32>
    %1343 = arith.select %1338, %1341, %1342 : vector<8x4xi1>, vector<8x4xf32>
    %1344 = arith.addf %1335, %1343 : vector<8x4xf32>
    %c1_i32_341 = arith.constant 1 : i32
    %1345 = vector.broadcast %c1_i32_341 : i32 to vector<8x2xi32>
    %1346 = arith.addi %1258, %1345 : vector<8x2xi32>
    %cst_342 = arith.constant 1.000000e+00 : f32
    %1347 = vector.broadcast %cst_342 : f32 to vector<8x2xf32>
    %1348 = arith.subf %1347, %1259 : vector<8x2xf32>
    %c0_i32_343 = arith.constant 0 : i32
    %1349 = vector.broadcast %c0_i32_343 : i32 to vector<8x2xi32>
    %1350 = arith.addi %1257, %1349 : vector<8x2xi32>
    %c0_i32_344 = arith.constant 0 : i32
    %1351 = vector.broadcast %c0_i32_344 : i32 to vector<8x2xi32>
    %1352 = arith.cmpi sge, %1350, %1351 : vector<8x2xi32>
    %c2_i32_345 = arith.constant 2 : i32
    %1353 = vector.broadcast %c2_i32_345 : i32 to vector<8x2xi32>
    %1354 = arith.cmpi slt, %1350, %1353 : vector<8x2xi32>
    %1355 = arith.andi %1352, %1354 : vector<8x2xi1>
    %c0_i32_346 = arith.constant 0 : i32
    %1356 = vector.broadcast %c0_i32_346 : i32 to vector<8x2xi32>
    %1357 = arith.cmpi sge, %1346, %1356 : vector<8x2xi32>
    %1358 = arith.andi %1355, %1357 : vector<8x2xi1>
    %c2_i32_347 = arith.constant 2 : i32
    %1359 = vector.broadcast %c2_i32_347 : i32 to vector<8x2xi32>
    %1360 = arith.cmpi slt, %1346, %1359 : vector<8x2xi32>
    %1361 = arith.andi %1358, %1360 : vector<8x2xi1>
    %1362 = arith.mulf %1348, %1260 : vector<8x2xf32>
    %1363 = arith.mulf %1362, %1261 : vector<8x2xf32>
    %cst_348 = arith.constant 0.000000e+00 : f32
    %1364 = vector.broadcast %cst_348 : f32 to vector<8x2xf32>
    %1365 = arith.select %1361, %1363, %1364 : vector<8x2xi1>, vector<8x2xf32>
    %c2_i32_349 = arith.constant 2 : i32
    %1366 = vector.broadcast %c2_i32_349 : i32 to vector<8x2xi32>
    %1367 = arith.muli %1346, %1366 : vector<8x2xi32>
    %1368 = arith.addi %1367, %1350 : vector<8x2xi32>
    %1369 = vector.extract_strided_slice %1368 {offsets = [0, 0], sizes = [8, 1], strides = [1, 1]} : vector<8x2xi32> to vector<8x1xi32>
    %1370 = vector.broadcast %1369 : vector<8x1xi32> to vector<8x4xi32>
    %1371 = arith.cmpi eq, %15, %1370 : vector<8x4xi32>
    %1372 = vector.extract_strided_slice %1365 {offsets = [0, 0], sizes = [8, 1], strides = [1, 1]} : vector<8x2xf32> to vector<8x1xf32>
    %cst_350 = arith.constant 0.000000e+00 : f32
    %1373 = vector.shape_cast %1372 : vector<8x1xf32> to vector<8x1xf32>
    %1374 = vector.broadcast %1373 : vector<8x1xf32> to vector<8x4xf32>
    %1375 = vector.broadcast %cst_350 : f32 to vector<8x4xf32>
    %1376 = arith.select %1371, %1374, %1375 : vector<8x4xi1>, vector<8x4xf32>
    %1377 = arith.addf %1344, %1376 : vector<8x4xf32>
    %1378 = vector.extract_strided_slice %1368 {offsets = [0, 1], sizes = [8, 1], strides = [1, 1]} : vector<8x2xi32> to vector<8x1xi32>
    %1379 = vector.broadcast %1378 : vector<8x1xi32> to vector<8x4xi32>
    %1380 = arith.cmpi eq, %15, %1379 : vector<8x4xi32>
    %1381 = vector.extract_strided_slice %1365 {offsets = [0, 1], sizes = [8, 1], strides = [1, 1]} : vector<8x2xf32> to vector<8x1xf32>
    %cst_351 = arith.constant 0.000000e+00 : f32
    %1382 = vector.shape_cast %1381 : vector<8x1xf32> to vector<8x1xf32>
    %1383 = vector.broadcast %1382 : vector<8x1xf32> to vector<8x4xf32>
    %1384 = vector.broadcast %cst_351 : f32 to vector<8x4xf32>
    %1385 = arith.select %1380, %1383, %1384 : vector<8x4xi1>, vector<8x4xf32>
    %1386 = arith.addf %1377, %1385 : vector<8x4xf32>
    %c1_i32_352 = arith.constant 1 : i32
    %1387 = vector.broadcast %c1_i32_352 : i32 to vector<8x2xi32>
    %1388 = arith.addi %1257, %1387 : vector<8x2xi32>
    %c0_i32_353 = arith.constant 0 : i32
    %1389 = vector.broadcast %c0_i32_353 : i32 to vector<8x2xi32>
    %1390 = arith.cmpi sge, %1388, %1389 : vector<8x2xi32>
    %c2_i32_354 = arith.constant 2 : i32
    %1391 = vector.broadcast %c2_i32_354 : i32 to vector<8x2xi32>
    %1392 = arith.cmpi slt, %1388, %1391 : vector<8x2xi32>
    %1393 = arith.andi %1390, %1392 : vector<8x2xi1>
    %c0_i32_355 = arith.constant 0 : i32
    %1394 = vector.broadcast %c0_i32_355 : i32 to vector<8x2xi32>
    %1395 = arith.cmpi sge, %1346, %1394 : vector<8x2xi32>
    %1396 = arith.andi %1393, %1395 : vector<8x2xi1>
    %c2_i32_356 = arith.constant 2 : i32
    %1397 = vector.broadcast %c2_i32_356 : i32 to vector<8x2xi32>
    %1398 = arith.cmpi slt, %1346, %1397 : vector<8x2xi32>
    %1399 = arith.andi %1396, %1398 : vector<8x2xi1>
    %1400 = arith.mulf %1259, %1260 : vector<8x2xf32>
    %1401 = arith.mulf %1400, %1261 : vector<8x2xf32>
    %cst_357 = arith.constant 0.000000e+00 : f32
    %1402 = vector.broadcast %cst_357 : f32 to vector<8x2xf32>
    %1403 = arith.select %1399, %1401, %1402 : vector<8x2xi1>, vector<8x2xf32>
    %c2_i32_358 = arith.constant 2 : i32
    %1404 = vector.broadcast %c2_i32_358 : i32 to vector<8x2xi32>
    %1405 = arith.muli %1346, %1404 : vector<8x2xi32>
    %1406 = arith.addi %1405, %1388 : vector<8x2xi32>
    %1407 = vector.extract_strided_slice %1406 {offsets = [0, 0], sizes = [8, 1], strides = [1, 1]} : vector<8x2xi32> to vector<8x1xi32>
    %1408 = vector.broadcast %1407 : vector<8x1xi32> to vector<8x4xi32>
    %1409 = arith.cmpi eq, %15, %1408 : vector<8x4xi32>
    %1410 = vector.extract_strided_slice %1403 {offsets = [0, 0], sizes = [8, 1], strides = [1, 1]} : vector<8x2xf32> to vector<8x1xf32>
    %cst_359 = arith.constant 0.000000e+00 : f32
    %1411 = vector.shape_cast %1410 : vector<8x1xf32> to vector<8x1xf32>
    %1412 = vector.broadcast %1411 : vector<8x1xf32> to vector<8x4xf32>
    %1413 = vector.broadcast %cst_359 : f32 to vector<8x4xf32>
    %1414 = arith.select %1409, %1412, %1413 : vector<8x4xi1>, vector<8x4xf32>
    %1415 = arith.addf %1386, %1414 : vector<8x4xf32>
    %1416 = vector.extract_strided_slice %1406 {offsets = [0, 1], sizes = [8, 1], strides = [1, 1]} : vector<8x2xi32> to vector<8x1xi32>
    %1417 = vector.broadcast %1416 : vector<8x1xi32> to vector<8x4xi32>
    %1418 = arith.cmpi eq, %15, %1417 : vector<8x4xi32>
    %1419 = vector.extract_strided_slice %1403 {offsets = [0, 1], sizes = [8, 1], strides = [1, 1]} : vector<8x2xf32> to vector<8x1xf32>
    %cst_360 = arith.constant 0.000000e+00 : f32
    %1420 = vector.shape_cast %1419 : vector<8x1xf32> to vector<8x1xf32>
    %1421 = vector.broadcast %1420 : vector<8x1xf32> to vector<8x4xf32>
    %1422 = vector.broadcast %cst_360 : f32 to vector<8x4xf32>
    %1423 = arith.select %1418, %1421, %1422 : vector<8x4xi1>, vector<8x4xf32>
    %1424 = arith.addf %1415, %1423 : vector<8x4xf32>
    %1425 = vector.extract_strided_slice %1 {offsets = [16, 24], sizes = [4, 8], strides = [1, 1]} : vector<20x32xf32> to vector<4x8xf32>
    %cst_361 = arith.constant dense<0.000000e+00> : vector<8x8xf32>
    %1426 = tpu.matmul %1424, %1425, %cst_361 {dimension_numbers = #tpu.dot_dimension_numbers<[1], [0], [0], [1], [0, 0, 1, 1], [], []>} : vector<8x4xf32>, vector<4x8xf32>, vector<8x8xf32> -> vector<8x8xf32>
    %1427 = arith.addf %1256, %1426 : vector<8x8xf32>
    %1428 = tpu.concatenate %368, %721, %1074, %1427 in 1 : vector<8x8xf32>, vector<8x8xf32>, vector<8x8xf32>, vector<8x8xf32> -> vector<8x32xf32>
    %c0_362 = arith.constant 0 : index
    %c0_363 = arith.constant 0 : index
    %c0_364 = arith.constant 0 : index
    %1429 = vector.load %arg5[%c0_362, %c0_363, %c0_364] : memref<1x8x32xf32, #tpu.memory_space<vmem>>, vector<1x8x32xf32>
    %1430 = vector.shape_cast %1429 : vector<1x8x32xf32> to vector<8x32xf32>
    %1431 = vector.shape_cast %1428 : vector<8x32xf32> to vector<1x8x32xf32>
    tpu.vector_store %arg5[%c0_362, %c0_363, %c0_364], %1431 {strides = array<i32>} : memref<1x8x32xf32, #tpu.memory_space<vmem>>, vector<1x8x32xf32>,
    return
  }
  func.func @transform_0(%arg0: i32) -> (i32, i32, i32) {
    %c0_i32 = arith.constant 0 : i32
    %c0_i32_0 = arith.constant 0 : i32
    %c0_i32_1 = arith.constant 0 : i32
    return %arg0, %c0_i32, %c0_i32_0 : i32, i32, i32
  }
  func.func @transform_1(%arg0: i32) -> (i32, i32, i32) {
    %c0_i32 = arith.constant 0 : i32
    %c0_i32_0 = arith.constant 0 : i32
    %c0_i32_1 = arith.constant 0 : i32
    return %arg0, %c0_i32, %c0_i32_0 : i32, i32, i32
  }
  func.func @transform_2(%arg0: i32) -> (i32, i32, i32) {
    %c0_i32 = arith.constant 0 : i32
    %c0_i32_0 = arith.constant 0 : i32
    %c0_i32_1 = arith.constant 0 : i32
    return %arg0, %c0_i32, %c0_i32_0 : i32, i32, i32
  }
  func.func @transform_3(%arg0: i32) -> (i32, i32, i32) {
    %c0_i32 = arith.constant 0 : i32
    %c0_i32_0 = arith.constant 0 : i32
    %c0_i32_1 = arith.constant 0 : i32
    return %arg0, %c0_i32, %c0_i32_0 : i32, i32, i32
  }
  func.func @transform_4(%arg0: i32) -> (i32, i32, i32) {
    %c0_i32 = arith.constant 0 : i32
    %c0_i32_0 = arith.constant 0 : i32
    %c0_i32_1 = arith.constant 0 : i32
    return %arg0, %c0_i32, %c0_i32_0 : i32, i32, i32
  }
}

module attributes {stable_mosaic.version = 11 : i64} {
  func.func @_linear_kernel(%arg0: i32, %arg1: memref<16x32xf32, #tpu.memory_space<vmem>>, %arg2: memref<32x32xf32, #tpu.memory_space<vmem>>, %arg3: memref<1x32xf32, #tpu.memory_space<vmem>>, %arg4: memref<16x32xf32, #tpu.memory_space<vmem>>) attributes {dimension_semantics = [#tpu.dimension_semantics<parallel>], iteration_bounds = array<i64: 1>, scalar_prefetch = 0 : i64, scratch_operands = 0 : i64, tpu.core_type = #tpu.core_type<tc>, window_params = [{transform_indices = @transform_0, window_bounds = array<i64: 16, 32>}, {pipeline_mode = #tpu.pipeline_mode<synchronous>, transform_indices = @transform_1, window_bounds = array<i64: 32, 32>}, {pipeline_mode = #tpu.pipeline_mode<synchronous>, transform_indices = @transform_2, window_bounds = array<i64: 1, 32>}, {transform_indices = @transform_3, window_bounds = array<i64: 16, 32>}]} {
    %c0 = arith.constant 0 : index
    %c0_0 = arith.constant 0 : index
    %0 = vector.load %arg1[%c0, %c0_0] : memref<16x32xf32, #tpu.memory_space<vmem>>, vector<16x32xf32>
    %c0_1 = arith.constant 0 : index
    %c0_2 = arith.constant 0 : index
    %1 = vector.load %arg2[%c0_1, %c0_2] : memref<32x32xf32, #tpu.memory_space<vmem>>, vector<32x32xf32>
    %cst = arith.constant dense<0.000000e+00> : vector<16x32xf32>
    %2 = tpu.matmul %0, %1, %cst {dimension_numbers = #tpu.dot_dimension_numbers<[1], [1], [0], [0], [0, 0, 1, 0], [], []>} : vector<16x32xf32>, vector<32x32xf32>, vector<16x32xf32> -> vector<16x32xf32>
    %c0_3 = arith.constant 0 : index
    %c0_4 = arith.constant 0 : index
    %3 = vector.load %arg3[%c0_3, %c0_4] : memref<1x32xf32, #tpu.memory_space<vmem>>, vector<1x32xf32>
    %4 = vector.broadcast %3 : vector<1x32xf32> to vector<16x32xf32>
    %5 = arith.addf %2, %4 : vector<16x32xf32>
    %c0_5 = arith.constant 0 : index
    %c0_6 = arith.constant 0 : index
    %6 = vector.load %arg4[%c0_5, %c0_6] : memref<16x32xf32, #tpu.memory_space<vmem>>, vector<16x32xf32>
    tpu.vector_store %arg4[%c0_5, %c0_6], %5 {strides = array<i32>} : memref<16x32xf32, #tpu.memory_space<vmem>>, vector<16x32xf32>,
    return
  }
  func.func @transform_0(%arg0: i32) -> (i32, i32) {
    %c0_i32 = arith.constant 0 : i32
    %c0_i32_0 = arith.constant 0 : i32
    return %arg0, %c0_i32 : i32, i32
  }
  func.func @transform_1(%arg0: i32) -> (i32, i32) {
    %c0_i32 = arith.constant 0 : i32
    %c0_i32_0 = arith.constant 0 : i32
    %c0_i32_1 = arith.constant 0 : i32
    return %c0_i32, %c0_i32_0 : i32, i32
  }
  func.func @transform_2(%arg0: i32) -> (i32, i32) {
    %c0_i32 = arith.constant 0 : i32
    %c0_i32_0 = arith.constant 0 : i32
    %c0_i32_1 = arith.constant 0 : i32
    return %c0_i32, %c0_i32_0 : i32, i32
  }
  func.func @transform_3(%arg0: i32) -> (i32, i32) {
    %c0_i32 = arith.constant 0 : i32
    %c0_i32_0 = arith.constant 0 : i32
    return %arg0, %c0_i32 : i32, i32
  }
}

</mosaic_0001>

<llo_original>
// kernel: msdeform_attn_forward.5
$region0: #{msdeform_attn_forward.5}
  #allocation0 [shape = 'u32[]', space=smem, size = 0x4, offset = 0x4, fixed_abs, tag = 'smem constant byte address 0x4 - core index']
  #allocation1 [shape = 'u32[144,128]{1,0:T(1,128)}', space=vmem, size = 0x12000, scoped, tag = 'internal scratch']
  %s0 = inlined_call_operand.vmem [shape: f32[16,32], index: 0, kind: input, shape index: {}]
  %s1 = inlined_call_operand.vmem [shape: f32[48,32], index: 1, kind: input, shape index: {}]
  %s2 = inlined_call_operand.vmem [shape: f32[1,48], index: 2, kind: input, shape index: {}]
  %s3 = inlined_call_operand.vmem [shape: f32[16,48], index: 3, kind: output, shape index: {}]
  %s4 = sld [smem:[#allocation0]]
  $region22: #{msdeform_attn_forward.5} parent=0
    _
  %s6 = ssub.s32 1, %s4
  %s7 = scalar_select 0, %s6, %s4
  // Predicated region
  $region2: #{msdeform_attn_forward.5} parent=0 // pred_check
    _
  $region3: #{msdeform_attn_forward.5} parent=0 // pred_check_branch
    %9 = sbr.rel (0) target = $region5
  $region4: #{msdeform_attn_forward.5} parent=0 // pred_region
    _
  $region5: #{msdeform_attn_forward.5} parent=0 // pred_fallthru
    _
  // Predicated region
  $region6: #{msdeform_attn_forward.5} parent=0 // pred_check
    _
  $region7: #{msdeform_attn_forward.5} parent=0 // pred_check_branch
    %11 = sbr.rel (0) target = $region9
  $region8: #{msdeform_attn_forward.5} parent=0 // pred_region
    _
  $region9: #{msdeform_attn_forward.5} parent=0 // pred_fallthru
    _
  // Predicated region
  $region10: #{msdeform_attn_forward.5} parent=0 // pred_check
    _
  $region11: #{msdeform_attn_forward.5} parent=0 // pred_check_branch
    %13 = sbr.rel (0) target = $region13
  $region12: #{msdeform_attn_forward.5} parent=0 // pred_region
    _
  $region13: #{msdeform_attn_forward.5} parent=0 // pred_fallthru
    _
  %v14 = vld [vmem:[%s0] sm:$0xff]
  %v15 = vld [vmem:[%s0 + $0x8] sm:$0xff]
  %v16 = vld [vmem:[%s1] sm:$0xff]
  %v17 = vld [vmem:[%s1 + $0x8] sm:$0xff]
  %v18 = vld [vmem:[%s1 + $0x10] sm:$0xff]
  %v19 = vld [vmem:[%s1 + $0x18] sm:$0xff]
  %v20 = vld [vmem:[%s1 + $0x20] sm:$0xff]
  %v21 = vld [vmem:[%s1 + $0x28] sm:$0xff]
  %v22 = vld [vmem:[%s2] sm:$0x1]
  %v24 = vlaneseq
  %v25 = vshrl.u32 %v24, 7
  %v26 = vsub.s32 0, %v25
  %v27 = vrot.slane %v22, %v26
  %vm29 = vcmask 261120
  %v31 = vsel %vm29, %v14, 0
  %v34 = vsel %vm29, %v15, 0
  %v37 = vsel %vm29, %v16, 0
  %v40 = vsel %vm29, %v17, 0
  %v43 = vsel %vm29, %v18, 0
  %v46 = vsel %vm29, %v19, 0
  %v49 = vsel %vm29, %v20, 0
  %v52 = vsel %vm29, %v21, 0
  %54 = vmatprep.subr.mxu0 0.0
  %55 = vmatpush1.xpose.msra.mxu0 %v37
  %56 = vmatprep.subr.mxu0 0.0
  %57 = vmatpush1.xpose.msra.mxu0 %v40
  %58 = vmatprep.subr.mxu0 0.0
  %59 = vmatpush1.xpose.msra.mxu0 %v43
  %60 = vmatprep.subr.mxu0 0.0
  %61 = vmatpush1.xpose.msra.mxu0 %v46
  %62 = vmatprep.subr.mxu0 0.0
  %63 = vmatpush1.xpose.msra.mxu0 %v49
  %64 = vmatprep.subr.mxu0 0.0
  %65 = vmatpush1.xpose.msra.mxu0 %v52
  %66 = vmatprep.subr.mxu0 0.0
  %67 = vmatpush1.xpose.msra.mxu0 0.0
  %68 = vmatprep.subr.mxu0 0.0
  %69 = vmatpush1.xpose.msra.mxu0 0.0
  %70 = vmatprep.subr.mxu0 0.0
  %71 = vmatpush1.xpose.msra.mxu0 0.0
  %72 = vmatprep.subr.mxu0 0.0
  %73 = vmatpush1.xpose.msra.mxu0 0.0
  %74 = vmatprep.subr.mxu0 0.0
  %75 = vmatpush1.xpose.msra.mxu0 0.0
  %76 = vmatprep.subr.mxu0 0.0
  %77 = vmatpush1.xpose.msra.mxu0 0.0
  %78 = vmatprep.subr.mxu0 0.0
  %79 = vmatpush1.xpose.msra.mxu0 0.0
  %80 = vmatprep.subr.mxu0 0.0
  %81 = vmatpush1.xpose.msra.mxu0 0.0
  %82 = vmatprep.subr.mxu0 0.0
  %83 = vmatpush1.xpose.msra.mxu0 0.0
  %84 = vmatprep.subr.mxu0 0.0
  %85 = vmatpush1.xpose.msra.mxu0 0.0
  %86 = vmatprep.subr.mxu0 0.0
  %87 = vmatpush1.xpose.msra.mxu0 0.0
  %88 = vmatprep.subr.mxu0 0.0
  %89 = vmatpush1.xpose.msra.mxu0 0.0
  %90 = vmatprep.subr.mxu0 0.0
  %91 = vmatpush1.xpose.msra.mxu0 0.0
  %92 = vmatprep.subr.mxu0 0.0
  %93 = vmatpush1.xpose.msra.mxu0 0.0
  %94 = vmatprep.subr.mxu0 0.0
  %95 = vmatpush1.xpose.msra.mxu0 0.0
  %96 = vmatprep.subr.mxu0 0.0
  %97 = vmatpush1.xpose.msra.mxu0 0.0
  %98 = vmatprep.subr.mxu0 0.0
  %99 = vmatpush1.xpose.msra.mxu0 0.0
  %100 = vmatprep.subr.mxu0 0.0
  %101 = vmatpush1.xpose.msra.mxu0 0.0
  %102 = vmatprep.subr.mxu0 0.0
  %103 = vmatpush1.xpose.msra.mxu0 0.0
  %104 = vmatprep.subr.mxu0 0.0
  %105 = vmatpush1.xpose.msra.mxu0 0.0
  %106 = vmatprep.subr.mxu0 0.0
  %107 = vmatpush1.xpose.msra.mxu0 0.0
  %108 = vmatprep.subr.mxu0 0.0
  %109 = vmatpush1.xpose.msra.mxu0 0.0
  %110 = vmatprep.subr.mxu0 0.0
  %111 = vmatpush1.xpose.msra.mxu0 0.0
  %112 = vmatprep.subr.mxu0 0.0
  %113 = vmatpush1.xpose.msra.mxu0 0.0
  %114 = vmatprep.subr.mxu0 0.0
  %115 = vmatpush1.xpose.msra.mxu0 0.0
  %116 = vmatprep.subr.mxu0 0.0
  %117 = vmatpush1.xpose.msra.mxu0 0.0
  %118 = vmatprep.mubr.f32.mxu0 0.0
  %119 = vmatmul.mubr.f32.gmra.mrb[0].mxu0 %v31
  %v120 = vpop.f32.mrb[0].mxu0
  %v121 = vadd.f32 %v27, %v120
  %v122 = vpop.f32.mrb[0].mxu0
  %123 = vmatprep.mubr.f32.mxu0 0.0
  %124 = vmatmul.mubr.f32.gmra.mrb[0].mxu0 %v34
  %v125 = vpop.f32.mrb[0].mxu0
  %v126 = vadd.f32 %v27, %v125
  %v127 = vpop.f32.mrb[0].mxu0
  %128 = vdwg.mxu0
  %vm129 = vcmask 392192
  %130 = vst.msk [vmem:[%s3] sm:$0xff] %vm129, %v121
  %131 = vst.msk [vmem:[%s3 + $0x8] sm:$0xff] %vm129, %v126
  // Predicated region
  $region14: #{msdeform_attn_forward.5} parent=0 // pred_check
    _
  $region15: #{msdeform_attn_forward.5} parent=0 // pred_check_branch
    %133 = sbr.rel (0) target = $region17
  $region16: #{msdeform_attn_forward.5} parent=0 // pred_region
    _
  $region17: #{msdeform_attn_forward.5} parent=0 // pred_fallthru
    _
  // Predicated region
  $region18: #{msdeform_attn_forward.5} parent=0 // pred_check
    _
  $region19: #{msdeform_attn_forward.5} parent=0 // pred_check_branch
    %135 = sbr.rel (0) target = $region21
  $region20: #{msdeform_attn_forward.5} parent=0 // pred_region
    _
  $region21: #{msdeform_attn_forward.5} parent=0 // pred_fallthru
    _

// kernel: msdeform_attn_forward.4
$region0: #{msdeform_attn_forward.4}
  #allocation0 [shape = 'u32[]', space=smem, size = 0x4, offset = 0x4, fixed_abs, tag = 'smem constant byte address 0x4 - core index']
  #allocation1 [shape = 'u32[144,128]{1,0:T(1,128)}', space=vmem, size = 0x12000, scoped, tag = 'internal scratch']
  %s0 = inlined_call_operand.vmem [shape: f32[40,32], index: 0, kind: input, shape index: {}]
  %s1 = inlined_call_operand.vmem [shape: f32[32,32], index: 1, kind: input, shape index: {}]
  %s2 = inlined_call_operand.vmem [shape: f32[1,32], index: 2, kind: input, shape index: {}]
  %s3 = inlined_call_operand.vmem [shape: f32[40,32], index: 3, kind: output, shape index: {}]
  %s4 = sld [smem:[#allocation0]]
  $region22: #{msdeform_attn_forward.4} parent=0
    _
  %s6 = ssub.s32 1, %s4
  %s7 = scalar_select 0, %s6, %s4
  // Predicated region
  $region2: #{msdeform_attn_forward.4} parent=0 // pred_check
    _
  $region3: #{msdeform_attn_forward.4} parent=0 // pred_check_branch
    %9 = sbr.rel (0) target = $region5
  $region4: #{msdeform_attn_forward.4} parent=0 // pred_region
    _
  $region5: #{msdeform_attn_forward.4} parent=0 // pred_fallthru
    _
  // Predicated region
  $region6: #{msdeform_attn_forward.4} parent=0 // pred_check
    _
  $region7: #{msdeform_attn_forward.4} parent=0 // pred_check_branch
    %11 = sbr.rel (0) target = $region9
  $region8: #{msdeform_attn_forward.4} parent=0 // pred_region
    _
  $region9: #{msdeform_attn_forward.4} parent=0 // pred_fallthru
    _
  // Predicated region
  $region10: #{msdeform_attn_forward.4} parent=0 // pred_check
    _
  $region11: #{msdeform_attn_forward.4} parent=0 // pred_check_branch
    %13 = sbr.rel (0) target = $region13
  $region12: #{msdeform_attn_forward.4} parent=0 // pred_region
    _
  $region13: #{msdeform_attn_forward.4} parent=0 // pred_fallthru
    _
  %v14 = vld [vmem:[%s0] sm:$0xff]
  %v15 = vld [vmem:[%s0 + $0x8] sm:$0xff]
  %v16 = vld [vmem:[%s0 + $0x10] sm:$0xff]
  %v17 = vld [vmem:[%s0 + $0x18] sm:$0xff]
  %v18 = vld [vmem:[%s0 + $0x20] sm:$0xff]
  %v19 = vld [vmem:[%s1] sm:$0xff]
  %v20 = vld [vmem:[%s1 + $0x8] sm:$0xff]
  %v21 = vld [vmem:[%s1 + $0x10] sm:$0xff]
  %v22 = vld [vmem:[%s1 + $0x18] sm:$0xff]
  %v23 = vld [vmem:[%s2] sm:$0x1]
  %v25 = vlaneseq
  %v26 = vshrl.u32 %v25, 7
  %v27 = vsub.s32 0, %v26
  %v28 = vrot.slane %v23, %v27
  %vm30 = vcmask 261120
  %v32 = vsel %vm30, %v14, 0
  %v35 = vsel %vm30, %v15, 0
  %v38 = vsel %vm30, %v16, 0
  %v41 = vsel %vm30, %v17, 0
  %v44 = vsel %vm30, %v18, 0
  %v47 = vsel %vm30, %v19, 0
  %v50 = vsel %vm30, %v20, 0
  %v53 = vsel %vm30, %v21, 0
  %v56 = vsel %vm30, %v22, 0
  %58 = vmatprep.subr.mxu0 0.0
  %59 = vmatpush1.xpose.msra.mxu0 %v47
  %60 = vmatprep.subr.mxu0 0.0
  %61 = vmatpush1.xpose.msra.mxu0 %v50
  %62 = vmatprep.subr.mxu0 0.0
  %63 = vmatpush1.xpose.msra.mxu0 %v53
  %64 = vmatprep.subr.mxu0 0.0
  %65 = vmatpush1.xpose.msra.mxu0 %v56
  %66 = vmatprep.subr.mxu0 0.0
  %67 = vmatpush1.xpose.msra.mxu0 0.0
  %68 = vmatprep.subr.mxu0 0.0
  %69 = vmatpush1.xpose.msra.mxu0 0.0
  %70 = vmatprep.subr.mxu0 0.0
  %71 = vmatpush1.xpose.msra.mxu0 0.0
  %72 = vmatprep.subr.mxu0 0.0
  %73 = vmatpush1.xpose.msra.mxu0 0.0
  %74 = vmatprep.subr.mxu0 0.0
  %75 = vmatpush1.xpose.msra.mxu0 0.0
  %76 = vmatprep.subr.mxu0 0.0
  %77 = vmatpush1.xpose.msra.mxu0 0.0
  %78 = vmatprep.subr.mxu0 0.0
  %79 = vmatpush1.xpose.msra.mxu0 0.0
  %80 = vmatprep.subr.mxu0 0.0
  %81 = vmatpush1.xpose.msra.mxu0 0.0
  %82 = vmatprep.subr.mxu0 0.0
  %83 = vmatpush1.xpose.msra.mxu0 0.0
  %84 = vmatprep.subr.mxu0 0.0
  %85 = vmatpush1.xpose.msra.mxu0 0.0
  %86 = vmatprep.subr.mxu0 0.0
  %87 = vmatpush1.xpose.msra.mxu0 0.0
  %88 = vmatprep.subr.mxu0 0.0
  %89 = vmatpush1.xpose.msra.mxu0 0.0
  %90 = vmatprep.subr.mxu0 0.0
  %91 = vmatpush1.xpose.msra.mxu0 0.0
  %92 = vmatprep.subr.mxu0 0.0
  %93 = vmatpush1.xpose.msra.mxu0 0.0
  %94 = vmatprep.subr.mxu0 0.0
  %95 = vmatpush1.xpose.msra.mxu0 0.0
  %96 = vmatprep.subr.mxu0 0.0
  %97 = vmatpush1.xpose.msra.mxu0 0.0
  %98 = vmatprep.subr.mxu0 0.0
  %99 = vmatpush1.xpose.msra.mxu0 0.0
  %100 = vmatprep.subr.mxu0 0.0
  %101 = vmatpush1.xpose.msra.mxu0 0.0
  %102 = vmatprep.subr.mxu0 0.0
  %103 = vmatpush1.xpose.msra.mxu0 0.0
  %104 = vmatprep.subr.mxu0 0.0
  %105 = vmatpush1.xpose.msra.mxu0 0.0
  %106 = vmatprep.subr.mxu0 0.0
  %107 = vmatpush1.xpose.msra.mxu0 0.0
  %108 = vmatprep.subr.mxu0 0.0
  %109 = vmatpush1.xpose.msra.mxu0 0.0
  %110 = vmatprep.subr.mxu0 0.0
  %111 = vmatpush1.xpose.msra.mxu0 0.0
  %112 = vmatprep.subr.mxu0 0.0
  %113 = vmatpush1.xpose.msra.mxu0 0.0
  %114 = vmatprep.subr.mxu0 0.0
  %115 = vmatpush1.xpose.msra.mxu0 0.0
  %116 = vmatprep.subr.mxu0 0.0
  %117 = vmatpush1.xpose.msra.mxu0 0.0
  %118 = vmatprep.subr.mxu0 0.0
  %119 = vmatpush1.xpose.msra.mxu0 0.0
  %120 = vmatprep.subr.mxu0 0.0
  %121 = vmatpush1.xpose.msra.mxu0 0.0
  %122 = vmatprep.mubr.f32.mxu0 0.0
  %123 = vmatmul.mubr.f32.gmra.mrb[0].mxu0 %v32
  %v124 = vpop.f32.mrb[0].mxu0
  %v125 = vadd.f32 %v28, %v124
  %v126 = vpop.f32.mrb[0].mxu0
  %127 = vmatprep.mubr.f32.mxu0 0.0
  %128 = vmatmul.mubr.f32.gmra.mrb[0].mxu0 %v35
  %v129 = vpop.f32.mrb[0].mxu0
  %v130 = vadd.f32 %v28, %v129
  %v131 = vpop.f32.mrb[0].mxu0
  %132 = vmatprep.mubr.f32.mxu0 0.0
  %133 = vmatmul.mubr.f32.gmra.mrb[0].mxu0 %v38
  %v134 = vpop.f32.mrb[0].mxu0
  %v135 = vadd.f32 %v28, %v134
  %v136 = vpop.f32.mrb[0].mxu0
  %137 = vmatprep.mubr.f32.mxu0 0.0
  %138 = vmatmul.mubr.f32.gmra.mrb[0].mxu0 %v41
  %v139 = vpop.f32.mrb[0].mxu0
  %v140 = vadd.f32 %v28, %v139
  %v141 = vpop.f32.mrb[0].mxu0
  %142 = vmatprep.mubr.f32.mxu0 0.0
  %143 = vmatmul.mubr.f32.gmra.mrb[0].mxu0 %v44
  %v144 = vpop.f32.mrb[0].mxu0
  %v145 = vadd.f32 %v28, %v144
  %v146 = vpop.f32.mrb[0].mxu0
  %147 = vdwg.mxu0
  %148 = vst.msk [vmem:[%s3] sm:$0xff] %vm30, %v125
  %149 = vst.msk [vmem:[%s3 + $0x8] sm:$0xff] %vm30, %v130
  %150 = vst.msk [vmem:[%s3 + $0x10] sm:$0xff] %vm30, %v135
  %151 = vst.msk [vmem:[%s3 + $0x18] sm:$0xff] %vm30, %v140
  %152 = vst.msk [vmem:[%s3 + $0x20] sm:$0xff] %vm30, %v145
  // Predicated region
  $region14: #{msdeform_attn_forward.4} parent=0 // pred_check
    _
  $region15: #{msdeform_attn_forward.4} parent=0 // pred_check_branch
    %154 = sbr.rel (0) target = $region17
  $region16: #{msdeform_attn_forward.4} parent=0 // pred_region
    _
  $region17: #{msdeform_attn_forward.4} parent=0 // pred_fallthru
    _
  // Predicated region
  $region18: #{msdeform_attn_forward.4} parent=0 // pred_check
    _
  $region19: #{msdeform_attn_forward.4} parent=0 // pred_check_branch
    %156 = sbr.rel (0) target = $region21
  $region20: #{msdeform_attn_forward.4} parent=0 // pred_region
    _
  $region21: #{msdeform_attn_forward.4} parent=0 // pred_fallthru
    _

// kernel: msdeform_attn_forward.7
$region0: #{msdeform_attn_forward.7}
  #allocation0 [shape = 'u32[]', space=smem, size = 0x4, offset = 0x4, fixed_abs, tag = 'smem constant byte address 0x4 - core index']
  #allocation1 [shape = 'u32[144,128]{1,0:T(1,128)}', space=vmem, size = 0x12000, scoped, tag = 'internal scratch']
  %s0 = inlined_call_operand.vmem [shape: f32[16,32], index: 0, kind: input, shape index: {}]
  %s1 = inlined_call_operand.vmem [shape: f32[32,32], index: 1, kind: input, shape index: {}]
  %s2 = inlined_call_operand.vmem [shape: f32[1,32], index: 2, kind: input, shape index: {}]
  %s3 = inlined_call_operand.hbm [shape: f32[16,32], index: 3, kind: output, shape index: {}]
  %s4 = sld [smem:[#allocation0]]
  $region22: #{msdeform_attn_forward.7} parent=0
    _
  %s6 = ssub.s32 1, %s4
  %s7 = scalar_select 0, %s6, %s4
  $region1: #{msdeform_attn_forward.7} parent=0
    #allocation2 [shape = 'u8[8192]{0}', space=vmem, size = 0x2000, scoped, tag = 'output window, operand 0, single buffered']
    #allocation3 [shape = 's32[1]{0}', space=sflag, size = 0x4, scoped, tag = 'scoped memory for msdeform_attn_forward.7']
    %8 = vsyncpa [#allocation3], 0
    // Predicated region
    $region2: #{msdeform_attn_forward.7} parent=1 // pred_check
      _
    $region3: #{msdeform_attn_forward.7} parent=1 // pred_check_branch
      %10 = sbr.rel (0) target = $region5
    $region4: #{msdeform_attn_forward.7} parent=1 // pred_region
      _
    $region5: #{msdeform_attn_forward.7} parent=1 // pred_fallthru
      _
    // Predicated region
    $region6: #{msdeform_attn_forward.7} parent=1 // pred_check
      _
    $region7: #{msdeform_attn_forward.7} parent=1 // pred_check_branch
      %12 = sbr.rel (0) target = $region9
    $region8: #{msdeform_attn_forward.7} parent=1 // pred_region
      _
    $region9: #{msdeform_attn_forward.7} parent=1 // pred_fallthru
      _
    // Predicated region
    $region10: #{msdeform_attn_forward.7} parent=1 // pred_check
      _
    $region11: #{msdeform_attn_forward.7} parent=1 // pred_check_branch
      %14 = sbr.rel (0) target = $region13
    $region12: #{msdeform_attn_forward.7} parent=1 // pred_region
      _
    $region13: #{msdeform_attn_forward.7} parent=1 // pred_fallthru
      _
    %v15 = vld [vmem:[%s0] sm:$0xff]
    %v16 = vld [vmem:[%s0 + $0x8] sm:$0xff]
    %v17 = vld [vmem:[%s1] sm:$0xff]
    %v18 = vld [vmem:[%s1 + $0x8] sm:$0xff]
    %v19 = vld [vmem:[%s1 + $0x10] sm:$0xff]
    %v20 = vld [vmem:[%s1 + $0x18] sm:$0xff]
    %v21 = vld [vmem:[%s2] sm:$0x1]
    %v23 = vlaneseq
    %v24 = vshrl.u32 %v23, 7
    %v25 = vsub.s32 0, %v24
    %v26 = vrot.slane %v21, %v25
    %vm28 = vcmask 261120
    %v30 = vsel %vm28, %v15, 0
    %v33 = vsel %vm28, %v16, 0
    %v36 = vsel %vm28, %v17, 0
    %v39 = vsel %vm28, %v18, 0
    %v42 = vsel %vm28, %v19, 0
    %v45 = vsel %vm28, %v20, 0
    %47 = vmatprep.subr.mxu0 0.0
    %48 = vmatpush1.xpose.msra.mxu0 %v36
    %49 = vmatprep.subr.mxu0 0.0
    %50 = vmatpush1.xpose.msra.mxu0 %v39
    %51 = vmatprep.subr.mxu0 0.0
    %52 = vmatpush1.xpose.msra.mxu0 %v42
    %53 = vmatprep.subr.mxu0 0.0
    %54 = vmatpush1.xpose.msra.mxu0 %v45
    %55 = vmatprep.subr.mxu0 0.0
    %56 = vmatpush1.xpose.msra.mxu0 0.0
    %57 = vmatprep.subr.mxu0 0.0
    %58 = vmatpush1.xpose.msra.mxu0 0.0
    %59 = vmatprep.subr.mxu0 0.0
    %60 = vmatpush1.xpose.msra.mxu0 0.0
    %61 = vmatprep.subr.mxu0 0.0
    %62 = vmatpush1.xpose.msra.mxu0 0.0
    %63 = vmatprep.subr.mxu0 0.0
    %64 = vmatpush1.xpose.msra.mxu0 0.0
    %65 = vmatprep.subr.mxu0 0.0
    %66 = vmatpush1.xpose.msra.mxu0 0.0
    %67 = vmatprep.subr.mxu0 0.0
    %68 = vmatpush1.xpose.msra.mxu0 0.0
    %69 = vmatprep.subr.mxu0 0.0
    %70 = vmatpush1.xpose.msra.mxu0 0.0
    %71 = vmatprep.subr.mxu0 0.0
    %72 = vmatpush1.xpose.msra.mxu0 0.0
    %73 = vmatprep.subr.mxu0 0.0
    %74 = vmatpush1.xpose.msra.mxu0 0.0
    %75 = vmatprep.subr.mxu0 0.0
    %76 = vmatpush1.xpose.msra.mxu0 0.0
    %77 = vmatprep.subr.mxu0 0.0
    %78 = vmatpush1.xpose.msra.mxu0 0.0
    %79 = vmatprep.subr.mxu0 0.0
    %80 = vmatpush1.xpose.msra.mxu0 0.0
    %81 = vmatprep.subr.mxu0 0.0
    %82 = vmatpush1.xpose.msra.mxu0 0.0
    %83 = vmatprep.subr.mxu0 0.0
    %84 = vmatpush1.xpose.msra.mxu0 0.0
    %85 = vmatprep.subr.mxu0 0.0
    %86 = vmatpush1.xpose.msra.mxu0 0.0
    %87 = vmatprep.subr.mxu0 0.0
    %88 = vmatpush1.xpose.msra.mxu0 0.0
    %89 = vmatprep.subr.mxu0 0.0
    %90 = vmatpush1.xpose.msra.mxu0 0.0
    %91 = vmatprep.subr.mxu0 0.0
    %92 = vmatpush1.xpose.msra.mxu0 0.0
    %93 = vmatprep.subr.mxu0 0.0
    %94 = vmatpush1.xpose.msra.mxu0 0.0
    %95 = vmatprep.subr.mxu0 0.0
    %96 = vmatpush1.xpose.msra.mxu0 0.0
    %97 = vmatprep.subr.mxu0 0.0
    %98 = vmatpush1.xpose.msra.mxu0 0.0
    %99 = vmatprep.subr.mxu0 0.0
    %100 = vmatpush1.xpose.msra.mxu0 0.0
    %101 = vmatprep.subr.mxu0 0.0
    %102 = vmatpush1.xpose.msra.mxu0 0.0
    %103 = vmatprep.subr.mxu0 0.0
    %104 = vmatpush1.xpose.msra.mxu0 0.0
    %105 = vmatprep.subr.mxu0 0.0
    %106 = vmatpush1.xpose.msra.mxu0 0.0
    %107 = vmatprep.subr.mxu0 0.0
    %108 = vmatpush1.xpose.msra.mxu0 0.0
    %109 = vmatprep.subr.mxu0 0.0
    %110 = vmatpush1.xpose.msra.mxu0 0.0
    %111 = vmatprep.mubr.f32.mxu0 0.0
    %112 = vmatmul.mubr.f32.gmra.mrb[0].mxu0 %v30
    %v113 = vpop.f32.mrb[0].mxu0
    %v114 = vadd.f32 %v26, %v113
    %v115 = vpop.f32.mrb[0].mxu0
    %116 = vmatprep.mubr.f32.mxu0 0.0
    %117 = vmatmul.mubr.f32.gmra.mrb[0].mxu0 %v33
    %v118 = vpop.f32.mrb[0].mxu0
    %v119 = vadd.f32 %v26, %v118
    %v120 = vpop.f32.mrb[0].mxu0
    %121 = vdwg.mxu0
    %122 = vst.msk [vmem:[#allocation2] sm:$0xff] %vm28, %v114
    %123 = vst.msk [vmem:[#allocation2 + $0x8] sm:$0xff] %vm28, %v119
    // Predicated region
    $region14: #{msdeform_attn_forward.7} parent=1 // pred_check
      _
    $region15: #{msdeform_attn_forward.7} parent=1 // pred_check_branch
      %125 = sbr.rel (0) target = $region17
    $region16: #{msdeform_attn_forward.7} parent=1 // pred_region
      %s127 = ssub.s32 256, 256
      %128 = vsyncadd [#allocation3], %s127
      %s129 = sshll.u32 [#allocation2], 4
      %s130 = int_to_ptr.vmem [resolvable:$true] %s129
      %135 = dma.vmem_to_hbm [thread:$0]  %s130, 256, %s3, [#allocation3], 128, 128, 8
    $region17: #{msdeform_attn_forward.7} parent=1 // pred_fallthru
      _
    // Predicated region
    $region18: #{msdeform_attn_forward.7} parent=1 // pred_check
      _
    $region19: #{msdeform_attn_forward.7} parent=1 // pred_check_branch
      %137 = sbr.rel (0) target = $region21
    $region20: #{msdeform_attn_forward.7} parent=1 // pred_region
      %138 = dma.done [#allocation3], 256
    $region21: #{msdeform_attn_forward.7} parent=1 // pred_fallthru
      _
    %139 = vsyncpa [#allocation3], 1

// kernel: msdeform_attn_forward.6
$region0: #{msdeform_attn_forward.6}
  #allocation0 [shape = 'u32[]', space=smem, size = 0x4, offset = 0x4, fixed_abs, tag = 'smem constant byte address 0x4 - core index']
  #allocation1 [shape = 'u32[144,128]{1,0:T(1,128)}', space=vmem, size = 0x12000, scoped, tag = 'internal scratch']
  %s0 = inlined_call_operand.vmem [shape: f32[2,20,32], index: 0, kind: input, shape index: {}]
  %s1 = inlined_call_operand.vmem [shape: f32[2,8,16], index: 1, kind: input, shape index: {}]
  %s2 = inlined_call_operand.vmem [shape: f32[2,8,16], index: 2, kind: input, shape index: {}]
  %s3 = inlined_call_operand.vmem [shape: f32[2,8,16], index: 3, kind: input, shape index: {}]
  %s4 = inlined_call_operand.vmem [shape: f32[2,8,32], index: 4, kind: output, shape index: {}]
  %s5 = sld [smem:[#allocation0]]
  $region49: #{msdeform_attn_forward.6} parent=0
    _
  %s7 = ssub.s32 1, %s5
  %s8 = scalar_select 0, %s7, %s5
  loop: start=0, step=1, limit=4
  $region2: #{msdeform_attn_forward.6} parent=0 // loop_pre_header
    _
  $region3: #{msdeform_attn_forward.6} parent=0 // loop_header
    %s10 = sphi 0, %s14
    %p11 = scmp.ge.s32.totalorder %s10, 4
    %s20 = sphi 0, %s22
    %s23 = sphi 0, %s20
    %s24 = sphi 0, %s23
    %s40 = sphi 0, %s24
    %s46 = sphi 0, %s48
    %s49 = sphi 0, %s46
    %s50 = sphi 0, %s49
    %s66 = sphi 0, %s50
    %s72 = sphi 0, %s74
    %s75 = sphi 0, %s72
    %s76 = sphi 0, %s75
    %s92 = sphi 0, %s76
    %s98 = sphi 0, %s100
    %s101 = sphi 0, %s98
    %s102 = sphi 0, %s101
    %s118 = sphi 0, %s102
    %s124 = sphi 0, %s126
    %s127 = sphi 0, %s124
    %s128 = sphi 0, %s127
    %s144 = sphi 0, %s128
  $region4: #{msdeform_attn_forward.6} parent=0 // loop_header_branch
    %13 = sbr.rel (%p11) target = $region8
  $region5: #{msdeform_attn_forward.6} parent=0 // loop_body
    %s15 = ssub.s32 %s10, 1
    %s16 = ssub.s32 %s10, 2
    %s17 = sadd.s32 %s10, 1
    %s18 = ssub.s32 %s10, %s17
    %p19 = scmp.eq.s32.totalorder %s18, 0
    %s21 = sadd.s32 %s20, 1
    %s22 = scalar_select %p19, %s20, %s21
    %p25 = pneg %p19
    %p26 = scmp.eq.s32.totalorder %s10, 1
    %p27 = por %p25, %p26
    %p28 = scmp.ne.s32.totalorder %s20, %s23
    %p29 = scmp.eq.s32.totalorder %s10, 0
    %p30 = por %p28, %p29
    %p31 = scmp.ne.s32.totalorder %s20, %s23
    %p32 = scmp.eq.s32.totalorder %s15, 1
    %p33 = por %p31, %p32
    %p34 = scmp.ne.s32.totalorder %s23, %s24
    %p35 = scmp.eq.s32.totalorder %s15, 0
    %p36 = por %p34, %p35
    %p37 = scmp.ne.s32.totalorder %s23, %s24
    %p38 = scmp.eq.s32.totalorder %s16, 1
    %p39 = por %p37, %p38
    %p41 = scmp.ne.s32.totalorder %s24, %s40
    %p42 = scmp.eq.s32.totalorder %s16, 0
    %p43 = por %p41, %p42
    %s44 = ssub.s32 %s10, %s17
    %p45 = scmp.eq.s32.totalorder %s44, 0
    %s47 = sadd.s32 %s46, 1
    %s48 = scalar_select %p45, %s46, %s47
    %p51 = pneg %p45
    %p52 = scmp.eq.s32.totalorder %s10, 1
    %p53 = por %p51, %p52
    %p54 = scmp.ne.s32.totalorder %s46, %s49
    %p55 = scmp.eq.s32.totalorder %s10, 0
    %p56 = por %p54, %p55
    %p57 = scmp.ne.s32.totalorder %s46, %s49
    %p58 = scmp.eq.s32.totalorder %s15, 1
    %p59 = por %p57, %p58
    %p60 = scmp.ne.s32.totalorder %s49, %s50
    %p61 = scmp.eq.s32.totalorder %s15, 0
    %p62 = por %p60, %p61
    %p63 = scmp.ne.s32.totalorder %s49, %s50
    %p64 = scmp.eq.s32.totalorder %s16, 1
    %p65 = por %p63, %p64
    %p67 = scmp.ne.s32.totalorder %s50, %s66
    %p68 = scmp.eq.s32.totalorder %s16, 0
    %p69 = por %p67, %p68
    %s70 = ssub.s32 %s10, %s17
    %p71 = scmp.eq.s32.totalorder %s70, 0
    %s73 = sadd.s32 %s72, 1
    %s74 = scalar_select %p71, %s72, %s73
    %p77 = pneg %p71
    %p78 = scmp.eq.s32.totalorder %s10, 1
    %p79 = por %p77, %p78
    %p80 = scmp.ne.s32.totalorder %s72, %s75
    %p81 = scmp.eq.s32.totalorder %s10, 0
    %p82 = por %p80, %p81
    %p83 = scmp.ne.s32.totalorder %s72, %s75
    %p84 = scmp.eq.s32.totalorder %s15, 1
    %p85 = por %p83, %p84
    %p86 = scmp.ne.s32.totalorder %s75, %s76
    %p87 = scmp.eq.s32.totalorder %s15, 0
    %p88 = por %p86, %p87
    %p89 = scmp.ne.s32.totalorder %s75, %s76
    %p90 = scmp.eq.s32.totalorder %s16, 1
    %p91 = por %p89, %p90
    %p93 = scmp.ne.s32.totalorder %s76, %s92
    %p94 = scmp.eq.s32.totalorder %s16, 0
    %p95 = por %p93, %p94
    %s96 = ssub.s32 %s10, %s17
    %p97 = scmp.eq.s32.totalorder %s96, 0
    %s99 = sadd.s32 %s98, 1
    %s100 = scalar_select %p97, %s98, %s99
    %p103 = pneg %p97
    %p104 = scmp.eq.s32.totalorder %s10, 1
    %p105 = por %p103, %p104
    %p106 = scmp.ne.s32.totalorder %s98, %s101
    %p107 = scmp.eq.s32.totalorder %s10, 0
    %p108 = por %p106, %p107
    %p109 = scmp.ne.s32.totalorder %s98, %s101
    %p110 = scmp.eq.s32.totalorder %s15, 1
    %p111 = por %p109, %p110
    %p112 = scmp.ne.s32.totalorder %s101, %s102
    %p113 = scmp.eq.s32.totalorder %s15, 0
    %p114 = por %p112, %p113
    %p115 = scmp.ne.s32.totalorder %s101, %s102
    %p116 = scmp.eq.s32.totalorder %s16, 1
    %p117 = por %p115, %p116
    %p119 = scmp.ne.s32.totalorder %s102, %s118
    %p120 = scmp.eq.s32.totalorder %s16, 0
    %p121 = por %p119, %p120
    %s122 = ssub.s32 %s10, %s17
    %p123 = scmp.eq.s32.totalorder %s122, 0
    %s125 = sadd.s32 %s124, 1
    %s126 = scalar_select %p123, %s124, %s125
    %p129 = pneg %p123
    %p130 = scmp.eq.s32.totalorder %s10, 1
    %p131 = por %p129, %p130
    %p132 = scmp.ne.s32.totalorder %s124, %s127
    %p133 = scmp.eq.s32.totalorder %s10, 0
    %p134 = por %p132, %p133
    %p135 = scmp.ne.s32.totalorder %s124, %s127
    %p136 = scmp.eq.s32.totalorder %s15, 1
    %p137 = por %p135, %p136
    %p138 = scmp.ne.s32.totalorder %s127, %s128
    %p139 = scmp.eq.s32.totalorder %s15, 0
    %p140 = por %p138, %p139
    %p141 = scmp.ne.s32.totalorder %s127, %s128
    %p142 = scmp.eq.s32.totalorder %s16, 1
    %p143 = por %p141, %p142
    %p145 = scmp.ne.s32.totalorder %s128, %s144
    %p146 = scmp.eq.s32.totalorder %s16, 0
    %p147 = por %p145, %p146
    %p148 = scmp.le.s32.totalorder 1, %s10
    %p149 = scmp.lt.s32.totalorder %s10, 3
    %p150 = pnand %p148, %p149
    %p151 = pneg %p150
    // Predicated region
    $region9: #{msdeform_attn_forward.6} parent=5 // pred_check
      _
    $region10: #{msdeform_attn_forward.6} parent=5 // pred_check_branch
      %153 = sbr.rel (%p150) target = $region12
    $region11: #{msdeform_attn_forward.6} parent=5 // pred_region
      %s154 = ssub.s32 %s10, 1
    $region12: #{msdeform_attn_forward.6} parent=5 // pred_fallthru
      _
    %p155 = scmp.lt.s32.totalorder %s10, 2
    // Predicated region
    $region13: #{msdeform_attn_forward.6} parent=5 // pred_check
      %p156 = pneg %p155
    $region14: #{msdeform_attn_forward.6} parent=5 // pred_check_branch
      %158 = sbr.rel (%p156) target = $region16
    $region15: #{msdeform_attn_forward.6} parent=5 // pred_region
      // Predicated region
      $region17: #{msdeform_attn_forward.6} parent=15 // pred_check
        %p159 = pneg %p30
      $region18: #{msdeform_attn_forward.6} parent=15 // pred_check_branch
        %161 = sbr.rel (%p159) target = $region20
      $region19: #{msdeform_attn_forward.6} parent=15 // pred_region
        %p162 = scmp.lt.s32.totalorder %s10, 1
        %s163 = scalar_select %p162, %s10, 1
        %s164 = smul.addr %s163, 3
        %s165 = smul.addr %s164, 8
        %s166 = scalar_lea.vmem %s0, %s165
      $region20: #{msdeform_attn_forward.6} parent=15 // pred_fallthru
        _
      // Predicated region
      $region21: #{msdeform_attn_forward.6} parent=15 // pred_check
        %p167 = pneg %p56
      $region22: #{msdeform_attn_forward.6} parent=15 // pred_check_branch
        %169 = sbr.rel (%p167) target = $region24
      $region23: #{msdeform_attn_forward.6} parent=15 // pred_region
        %p170 = scmp.lt.s32.totalorder %s10, 1
        %s171 = scalar_select %p170, %s10, 1
        %s172 = smul.addr %s171, 8
        %s173 = scalar_lea.vmem %s1, %s172
      $region24: #{msdeform_attn_forward.6} parent=15 // pred_fallthru
        _
      // Predicated region
      $region25: #{msdeform_attn_forward.6} parent=15 // pred_check
        %p174 = pneg %p82
      $region26: #{msdeform_attn_forward.6} parent=15 // pred_check_branch
        %176 = sbr.rel (%p174) target = $region28
      $region27: #{msdeform_attn_forward.6} parent=15 // pred_region
        %p177 = scmp.lt.s32.totalorder %s10, 1
        %s178 = scalar_select %p177, %s10, 1
        %s179 = smul.addr %s178, 8
        %s180 = scalar_lea.vmem %s2, %s179
      $region28: #{msdeform_attn_forward.6} parent=15 // pred_fallthru
        _
      // Predicated region
      $region29: #{msdeform_attn_forward.6} parent=15 // pred_check
        %p181 = pneg %p108
      $region30: #{msdeform_attn_forward.6} parent=15 // pred_check_branch
        %183 = sbr.rel (%p181) target = $region32
      $region31: #{msdeform_attn_forward.6} parent=15 // pred_region
        %p184 = scmp.lt.s32.totalorder %s10, 1
        %s185 = scalar_select %p184, %s10, 1
        %s186 = smul.addr %s185, 8
        %s187 = scalar_lea.vmem %s3, %s186
      $region32: #{msdeform_attn_forward.6} parent=15 // pred_fallthru
        _
    $region16: #{msdeform_attn_forward.6} parent=5 // pred_fallthru
      _
    %p188 = scmp.le.s32.totalorder 1, %s10
    %p189 = scmp.lt.s32.totalorder %s10, 3
    %p190 = pnand %p188, %p189
    %p191 = pneg %p190
    // Predicated region
    $region33: #{msdeform_attn_forward.6} parent=5 // pred_check
      _
    $region34: #{msdeform_attn_forward.6} parent=5 // pred_check_branch
      %193 = sbr.rel (%p190) target = $region36
    $region35: #{msdeform_attn_forward.6} parent=5 // pred_region
      %s194 = ssub.s32 %s10, 1
      %p195 = scmp.lt.s32.totalorder %s15, 1
      %s196 = scalar_select %p195, %s15, 1
      %s197 = smul.addr %s196, 3
      %s198 = smul.addr %s197, 8
      %s199 = scalar_lea.vmem %s0, %s198
      %p200 = pneg %p36
      %p201 = pneg %p33
      %p202 = scmp.lt.s32.totalorder %s15, 1
      %s203 = scalar_select %p202, %s15, 1
      %s204 = smul.addr %s203, 8
      %s205 = scalar_lea.vmem %s1, %s204
      %p206 = pneg %p62
      %p207 = pneg %p59
      %p208 = scmp.lt.s32.totalorder %s15, 1
      %s209 = scalar_select %p208, %s15, 1
      %s210 = smul.addr %s209, 8
      %s211 = scalar_lea.vmem %s2, %s210
      %p212 = pneg %p88
      %p213 = pneg %p85
      %p214 = scmp.lt.s32.totalorder %s15, 1
      %s215 = scalar_select %p214, %s15, 1
      %s216 = smul.addr %s215, 8
      %s217 = scalar_lea.vmem %s3, %s216
      %p218 = pneg %p114
      %p219 = pneg %p111
      %p220 = pneg %p140
      %p221 = pneg %p137
      %p222 = scmp.lt.s32.totalorder %s15, 1
      %s223 = scalar_select %p222, %s15, 1
      %s224 = smul.addr %s223, 8
      %s225 = scalar_lea.vmem %s4, %s224
      %p226 = scmp.lt.s32.totalorder %s15, 1
      %s227 = scalar_select %p226, %s15, 1
      %s228 = smul.addr %s227, 3
      %s229 = smul.addr %s228, 8
      %s230 = scalar_lea.vmem %s0, %s229
      %p231 = scmp.lt.s32.totalorder %s15, 1
      %s232 = scalar_select %p231, %s15, 1
      %s233 = smul.addr %s232, 8
      %s234 = scalar_lea.vmem %s1, %s233
      %p235 = scmp.lt.s32.totalorder %s15, 1
      %s236 = scalar_select %p235, %s15, 1
      %s237 = smul.addr %s236, 8
      %s238 = scalar_lea.vmem %s2, %s237
      %p239 = scmp.lt.s32.totalorder %s15, 1
      %s240 = scalar_select %p239, %s15, 1
      %s241 = smul.addr %s240, 8
      %s242 = scalar_lea.vmem %s3, %s241
      %p243 = scmp.lt.s32.totalorder %s15, 1
      %s244 = scalar_select %p243, %s15, 1
      %s245 = smul.addr %s244, 8
      %s246 = scalar_lea.vmem %s4, %s245
      %v247 = vld [vmem:[%s230] sm:$0xff]
      %v248 = vld [vmem:[%s230 + $0x8] sm:$0xff]
      %v249 = vld [vmem:[%s230 + $0x10] sm:$0xf]
      %v250 = vld [vmem:[%s234] sm:$0xff]
      %v251 = vld [vmem:[%s238] sm:$0xff]
      %v252 = vld [vmem:[%s242] sm:$0xff]
      %v253 = vfloor.f32 %v250
      %v254 = vfloor.f32 %v251
      %v255 = vsub.f32 %v250, %v253
      %v256 = vsub.f32 %v251, %v254
      %v257 = vcvt.f32.s32.to.zero.pseudo %v253
      %v258 = vcvt.f32.s32.to.zero.pseudo %v254
      %v259 = vlaneseq
      %v260 = vand.u32 %v259, 127
      %vm261 = vcmask 31744
      %v262 = vsel %vm261, %v252, -inf
      %263 = vmax.xlane.f32.xlu0 %v262
      %v264 = vpop.xlane.xlu0 %263
      %v265 = vsub.f32 %v252, %v264
      %v266 = vmul.f32 %v265, 1.442695
      %v267 = vpow.pop %v266
      %v268 = vsel %vm261, %v267, 0.0
      %269 = vadd.xlane.f32.xlu0 %v268
      %v270 = vpop.xlane.xlu0 %269
      %v271 = vrcp.pop %v270
      %v272 = vmul.f32 %v267, %v271
      %v273 = vsub.f32 1.0, %v256
      %v274 = vsub.f32 1.0, %v255
      %vm275 = vcmp.ge.s32.totalorder %v257, 0
      %vm276 = vcmp.lt.s32.totalorder %v257, 4
      %vm277 = vmand %vm275, %vm276
      %vm278 = vcmp.ge.s32.totalorder %v258, 0
      %vm279 = vmand %vm277, %vm278
      %vm280 = vcmp.lt.s32.totalorder %v258, 4
      %vm281 = vmand %vm279, %vm280
      %v282 = vmul.f32 %v274, %v273
      %v283 = vmul.f32 %v282, %v272
      %v284 = vsel %vm281, %v283, 0.0
      %v285 = vmul.u32 %v258, 4
      %v286 = vadd.s32 %v285, %v257
      %287 = vset.pattern.permute.xlu0 0
      %288 = vperm.xlu0 %287, %v286
      %v289 = vpop.permute.xlu0 %288
      %vm290 = vcmp.eq.s32.totalorder %v260, %v289
      %292 = vset.pattern.permute.xlu0 0
      %293 = vperm.xlu0 %292, %v284
      %v294 = vpop.permute.xlu0 %293
      %v296 = vsel %vm290, %v294, 0.0
      %v297 = vadd.f32 %v296, 0.0
      %298 = vset.pattern.permute.xlu0 1
      %299 = vperm.xlu0 %298, %v286
      %v300 = vpop.permute.xlu0 %299
      %vm301 = vcmp.eq.s32.totalorder %v260, %v300
      %302 = vset.pattern.permute.xlu0 1
      %303 = vperm.xlu0 %302, %v284
      %v304 = vpop.permute.xlu0 %303
      %v306 = vsel %vm301, %v304, 0.0
      %v307 = vadd.f32 %v297, %v306
      %v308 = vadd.s32 %v257, 1
      %vm309 = vcmp.ge.s32.totalorder %v308, 0
      %vm310 = vcmp.lt.s32.totalorder %v308, 4
      %vm311 = vmand %vm309, %vm310
      %vm312 = vmand %vm311, %vm278
      %vm313 = vmand %vm312, %vm280
      %v314 = vmul.f32 %v255, %v273
      %v315 = vmul.f32 %v314, %v272
      %v316 = vsel %vm313, %v315, 0.0
      %v317 = vadd.s32 %v285, %v308
      %318 = vset.pattern.permute.xlu0 0
      %319 = vperm.xlu0 %318, %v317
      %v320 = vpop.permute.xlu0 %319
      %vm321 = vcmp.eq.s32.totalorder %v260, %v320
      %323 = vset.pattern.permute.xlu0 0
      %324 = vperm.xlu0 %323, %v316
      %v325 = vpop.permute.xlu0 %324
      %v327 = vsel %vm321, %v325, 0.0
      %v328 = vadd.f32 %v307, %v327
      %329 = vset.pattern.permute.xlu0 1
      %330 = vperm.xlu0 %329, %v317
      %v331 = vpop.permute.xlu0 %330
      %vm332 = vcmp.eq.s32.totalorder %v260, %v331
      %333 = vset.pattern.permute.xlu0 1
      %334 = vperm.xlu0 %333, %v316
      %v335 = vpop.permute.xlu0 %334
      %v337 = vsel %vm332, %v335, 0.0
      %v338 = vadd.f32 %v328, %v337
      %v339 = vadd.s32 %v258, 1
      %vm340 = vcmp.ge.s32.totalorder %v339, 0
      %vm341 = vmand %vm277, %vm340
      %vm342 = vcmp.lt.s32.totalorder %v339, 4
      %vm343 = vmand %vm341, %vm342
      %v344 = vmul.f32 %v274, %v256
      %v345 = vmul.f32 %v344, %v272
      %v346 = vsel %vm343, %v345, 0.0
      %v347 = vmul.u32 %v339, 4
      %v348 = vadd.s32 %v347, %v257
      %349 = vset.pattern.permute.xlu0 0
      %350 = vperm.xlu0 %349, %v348
      %v351 = vpop.permute.xlu0 %350
      %vm352 = vcmp.eq.s32.totalorder %v260, %v351
      %354 = vset.pattern.permute.xlu0 0
      %355 = vperm.xlu0 %354, %v346
      %v356 = vpop.permute.xlu0 %355
      %v358 = vsel %vm352, %v356, 0.0
      %v359 = vadd.f32 %v338, %v358
      %360 = vset.pattern.permute.xlu0 1
      %361 = vperm.xlu0 %360, %v348
      %v362 = vpop.permute.xlu0 %361
      %vm363 = vcmp.eq.s32.totalorder %v260, %v362
      %364 = vset.pattern.permute.xlu0 1
      %365 = vperm.xlu0 %364, %v346
      %v366 = vpop.permute.xlu0 %365
      %v368 = vsel %vm363, %v366, 0.0
      %v369 = vadd.f32 %v359, %v368
      %vm370 = vmand %vm311, %vm340
      %vm371 = vmand %vm370, %vm342
      %v372 = vmul.f32 %v255, %v256
      %v373 = vmul.f32 %v372, %v272
      %v374 = vsel %vm371, %v373, 0.0
      %v375 = vadd.s32 %v347, %v308
      %376 = vset.pattern.permute.xlu0 0
      %377 = vperm.xlu0 %376, %v375
      %v378 = vpop.permute.xlu0 %377
      %vm379 = vcmp.eq.s32.totalorder %v260, %v378
      %381 = vset.pattern.permute.xlu0 0
      %382 = vperm.xlu0 %381, %v374
      %v383 = vpop.permute.xlu0 %382
      %v385 = vsel %vm379, %v383, 0.0
      %v386 = vadd.f32 %v369, %v385
      %387 = vset.pattern.permute.xlu0 1
      %388 = vperm.xlu0 %387, %v375
      %v389 = vpop.permute.xlu0 %388
      %vm390 = vcmp.eq.s32.totalorder %v260, %v389
      %391 = vset.pattern.permute.xlu0 1
      %392 = vperm.xlu0 %391, %v374
      %v393 = vpop.permute.xlu0 %392
      %v395 = vsel %vm390, %v393, 0.0
      %v396 = vadd.f32 %v386, %v395
      %vm397 = vcmp.lt.s32.totalorder %v257, 2
      %vm398 = vmand %vm275, %vm397
      %vm399 = vmand %vm398, %vm278
      %vm400 = vcmp.lt.s32.totalorder %v258, 2
      %vm401 = vmand %vm399, %vm400
      %v402 = vsel %vm401, %v283, 0.0
      %v403 = vmul.u32 %v258, 2
      %v404 = vadd.s32 %v403, %v257
      %405 = vset.pattern.permute.xlu0 2
      %406 = vperm.xlu0 %405, %v404
      %v407 = vpop.permute.xlu0 %406
      %vm408 = vcmp.eq.s32.totalorder %v260, %v407
      %410 = vset.pattern.permute.xlu0 2
      %411 = vperm.xlu0 %410, %v402
      %v412 = vpop.permute.xlu0 %411
      %v414 = vsel %vm408, %v412, 0.0
      %v415 = vadd.f32 %v414, 0.0
      %416 = vset.pattern.permute.xlu0 3
      %417 = vperm.xlu0 %416, %v404
      %v418 = vpop.permute.xlu0 %417
      %vm419 = vcmp.eq.s32.totalorder %v260, %v418
      %420 = vset.pattern.permute.xlu0 3
      %421 = vperm.xlu0 %420, %v402
      %v422 = vpop.permute.xlu0 %421
      %v424 = vsel %vm419, %v422, 0.0
      %v425 = vadd.f32 %v415, %v424
      %vm426 = vcmp.lt.s32.totalorder %v308, 2
      %vm427 = vmand %vm309, %vm426
      %vm428 = vmand %vm427, %vm278
      %vm429 = vmand %vm428, %vm400
      %v430 = vsel %vm429, %v315, 0.0
      %v431 = vadd.s32 %v403, %v308
      %432 = vset.pattern.permute.xlu0 2
      %433 = vperm.xlu0 %432, %v431
      %v434 = vpop.permute.xlu0 %433
      %vm435 = vcmp.eq.s32.totalorder %v260, %v434
      %437 = vset.pattern.permute.xlu0 2
      %438 = vperm.xlu0 %437, %v430
      %v439 = vpop.permute.xlu0 %438
      %v441 = vsel %vm435, %v439, 0.0
      %v442 = vadd.f32 %v425, %v441
      %443 = vset.pattern.permute.xlu0 3
      %444 = vperm.xlu0 %443, %v431
      %v445 = vpop.permute.xlu0 %444
      %vm446 = vcmp.eq.s32.totalorder %v260, %v445
      %447 = vset.pattern.permute.xlu0 3
      %448 = vperm.xlu0 %447, %v430
      %v449 = vpop.permute.xlu0 %448
      %v451 = vsel %vm446, %v449, 0.0
      %v452 = vadd.f32 %v442, %v451
      %vm453 = vmand %vm398, %vm340
      %vm454 = vcmp.lt.s32.totalorder %v339, 2
      %vm455 = vmand %vm453, %vm454
      %v456 = vsel %vm455, %v345, 0.0
      %v457 = vmul.u32 %v339, 2
      %v458 = vadd.s32 %v457, %v257
      %459 = vset.pattern.permute.xlu0 2
      %460 = vperm.xlu0 %459, %v458
      %v461 = vpop.permute.xlu0 %460
      %vm462 = vcmp.eq.s32.totalorder %v260, %v461
      %464 = vset.pattern.permute.xlu0 2
      %465 = vperm.xlu0 %464, %v456
      %v466 = vpop.permute.xlu0 %465
      %v468 = vsel %vm462, %v466, 0.0
      %v469 = vadd.f32 %v452, %v468
      %470 = vset.pattern.permute.xlu0 3
      %471 = vperm.xlu0 %470, %v458
      %v472 = vpop.permute.xlu0 %471
      %vm473 = vcmp.eq.s32.totalorder %v260, %v472
      %474 = vset.pattern.permute.xlu0 3
      %475 = vperm.xlu0 %474, %v456
      %v476 = vpop.permute.xlu0 %475
      %v478 = vsel %vm473, %v476, 0.0
      %v479 = vadd.f32 %v469, %v478
      %vm480 = vmand %vm427, %vm340
      %vm481 = vmand %vm480, %vm454
      %v482 = vsel %vm481, %v373, 0.0
      %v483 = vadd.s32 %v457, %v308
      %484 = vset.pattern.permute.xlu0 2
      %485 = vperm.xlu0 %484, %v483
      %v486 = vpop.permute.xlu0 %485
      %vm487 = vcmp.eq.s32.totalorder %v260, %v486
      %489 = vset.pattern.permute.xlu0 2
      %490 = vperm.xlu0 %489, %v482
      %v491 = vpop.permute.xlu0 %490
      %v493 = vsel %vm487, %v491, 0.0
      %v494 = vadd.f32 %v479, %v493
      %495 = vset.pattern.permute.xlu0 3
      %496 = vperm.xlu0 %495, %v483
      %v497 = vpop.permute.xlu0 %496
      %vm498 = vcmp.eq.s32.totalorder %v260, %v497
      %499 = vset.pattern.permute.xlu0 3
      %500 = vperm.xlu0 %499, %v482
      %v501 = vpop.permute.xlu0 %500
      %v503 = vsel %vm498, %v501, 0.0
      %v504 = vadd.f32 %v494, %v503
      %v506 = vsel %vm261, %v504, 0
      %vm508 = vcmask 1043456
      %v510 = vsel %vm508, %v249, 0
      %512 = vmatprep.subr.mxu0 0.0
      %513 = vmatpush1.msra.mxu0 %v510
      %514 = vmatprep.subr.mxu0 0.0
      %515 = vmatpush1.msra.mxu0 0.0
      %516 = vmatprep.subr.mxu0 0.0
      %517 = vmatpush1.msra.mxu0 0.0
      %518 = vmatprep.subr.mxu0 0.0
      %519 = vmatpush1.msra.mxu0 0.0
      %520 = vmatprep.subr.mxu0 0.0
      %521 = vmatpush1.msra.mxu0 0.0
      %522 = vmatprep.subr.mxu0 0.0
      %523 = vmatpush1.msra.mxu0 0.0
      %524 = vmatprep.subr.mxu0 0.0
      %525 = vmatpush1.msra.mxu0 0.0
      %526 = vmatprep.subr.mxu0 0.0
      %527 = vmatpush1.msra.mxu0 0.0
      %528 = vmatprep.subr.mxu0 0.0
      %529 = vmatpush1.msra.mxu0 0.0
      %530 = vmatprep.subr.mxu0 0.0
      %531 = vmatpush1.msra.mxu0 0.0
      %532 = vmatprep.subr.mxu0 0.0
      %533 = vmatpush1.msra.mxu0 0.0
      %534 = vmatprep.subr.mxu0 0.0
      %535 = vmatpush1.msra.mxu0 0.0
      %536 = vmatprep.subr.mxu0 0.0
      %537 = vmatpush1.msra.mxu0 0.0
      %538 = vmatprep.subr.mxu0 0.0
      %539 = vmatpush1.msra.mxu0 0.0
      %540 = vmatprep.subr.mxu0 0.0
      %541 = vmatpush1.msra.mxu0 0.0
      %542 = vmatprep.subr.mxu0 0.0
      %543 = vmatpush1.msra.mxu0 0.0
      %544 = vmatprep.subr.mxu0 0.0
      %545 = vmatpush1.msra.mxu0 0.0
      %546 = vmatprep.subr.mxu0 0.0
      %547 = vmatpush1.msra.mxu0 0.0
      %548 = vmatprep.subr.mxu0 0.0
      %549 = vmatpush1.msra.mxu0 0.0
      %550 = vmatprep.subr.mxu0 0.0
      %551 = vmatpush1.msra.mxu0 0.0
      %552 = vmatprep.subr.mxu0 0.0
      %553 = vmatpush1.msra.mxu0 0.0
      %554 = vmatprep.subr.mxu0 0.0
      %555 = vmatpush1.msra.mxu0 0.0
      %556 = vmatprep.subr.mxu0 0.0
      %557 = vmatpush1.msra.mxu0 0.0
      %558 = vmatprep.subr.mxu0 0.0
      %559 = vmatpush1.msra.mxu0 0.0
      %560 = vmatprep.subr.mxu0 0.0
      %561 = vmatpush1.msra.mxu0 0.0
      %562 = vmatprep.subr.mxu0 0.0
      %563 = vmatpush1.msra.mxu0 0.0
      %564 = vmatprep.subr.mxu0 0.0
      %565 = vmatpush1.msra.mxu0 0.0
      %566 = vmatprep.subr.mxu0 0.0
      %567 = vmatpush1.msra.mxu0 0.0
      %568 = vmatprep.subr.mxu0 0.0
      %569 = vmatpush1.msra.mxu0 0.0
      %570 = vmatprep.subr.mxu0 0.0
      %571 = vmatpush1.msra.mxu0 0.0
      %572 = vmatprep.subr.mxu0 0.0
      %573 = vmatpush1.msra.mxu0 0.0
      %574 = vmatprep.subr.mxu0 0.0
      %575 = vmatpush1.msra.mxu0 0.0
      %576 = vmatprep.mubr.f32.mxu0 0.0
      %577 = vmatmul.mubr.f32.gmra.mrb[0].mxu0 %v506
      %v578 = vpop.f32.mrb[0].mxu0
      %v579 = vadd.f32 0.0, %v578
      %v580 = vpop.f32.mrb[0].mxu0
      %581 = vdwg.mxu0
      %vm582 = vcmask 130048
      %v584 = vsel %vm582, %v396, 0
      %586 = vmatprep.subr.mxu0 0.0
      %587 = vmatpush1.msra.mxu0 %v247
      %588 = vmatprep.subr.mxu0 0.0
      %589 = vmatpush1.msra.mxu0 %v248
      %590 = vmatprep.subr.mxu0 0.0
      %591 = vmatpush1.msra.mxu0 0.0
      %592 = vmatprep.subr.mxu0 0.0
      %593 = vmatpush1.msra.mxu0 0.0
      %594 = vmatprep.subr.mxu0 0.0
      %595 = vmatpush1.msra.mxu0 0.0
      %596 = vmatprep.subr.mxu0 0.0
      %597 = vmatpush1.msra.mxu0 0.0
      %598 = vmatprep.subr.mxu0 0.0
      %599 = vmatpush1.msra.mxu0 0.0
      %600 = vmatprep.subr.mxu0 0.0
      %601 = vmatpush1.msra.mxu0 0.0
      %602 = vmatprep.subr.mxu0 0.0
      %603 = vmatpush1.msra.mxu0 0.0
      %604 = vmatprep.subr.mxu0 0.0
      %605 = vmatpush1.msra.mxu0 0.0
      %606 = vmatprep.subr.mxu0 0.0
      %607 = vmatpush1.msra.mxu0 0.0
      %608 = vmatprep.subr.mxu0 0.0
      %609 = vmatpush1.msra.mxu0 0.0
      %610 = vmatprep.subr.mxu0 0.0
      %611 = vmatpush1.msra.mxu0 0.0
      %612 = vmatprep.subr.mxu0 0.0
      %613 = vmatpush1.msra.mxu0 0.0
      %614 = vmatprep.subr.mxu0 0.0
      %615 = vmatpush1.msra.mxu0 0.0
      %616 = vmatprep.subr.mxu0 0.0
      %617 = vmatpush1.msra.mxu0 0.0
      %618 = vmatprep.subr.mxu0 0.0
      %619 = vmatpush1.msra.mxu0 0.0
      %620 = vmatprep.subr.mxu0 0.0
      %621 = vmatpush1.msra.mxu0 0.0
      %622 = vmatprep.subr.mxu0 0.0
      %623 = vmatpush1.msra.mxu0 0.0
      %624 = vmatprep.subr.mxu0 0.0
      %625 = vmatpush1.msra.mxu0 0.0
      %626 = vmatprep.subr.mxu0 0.0
      %627 = vmatpush1.msra.mxu0 0.0
      %628 = vmatprep.subr.mxu0 0.0
      %629 = vmatpush1.msra.mxu0 0.0
      %630 = vmatprep.subr.mxu0 0.0
      %631 = vmatpush1.msra.mxu0 0.0
      %632 = vmatprep.subr.mxu0 0.0
      %633 = vmatpush1.msra.mxu0 0.0
      %634 = vmatprep.subr.mxu0 0.0
      %635 = vmatpush1.msra.mxu0 0.0
      %636 = vmatprep.subr.mxu0 0.0
      %637 = vmatpush1.msra.mxu0 0.0
      %638 = vmatprep.subr.mxu0 0.0
      %639 = vmatpush1.msra.mxu0 0.0
      %640 = vmatprep.subr.mxu0 0.0
      %641 = vmatpush1.msra.mxu0 0.0
      %642 = vmatprep.subr.mxu0 0.0
      %643 = vmatpush1.msra.mxu0 0.0
      %644 = vmatprep.subr.mxu0 0.0
      %645 = vmatpush1.msra.mxu0 0.0
      %646 = vmatprep.subr.mxu0 0.0
      %647 = vmatpush1.msra.mxu0 0.0
      %648 = vmatprep.subr.mxu0 0.0
      %649 = vmatpush1.msra.mxu0 0.0
      %650 = vmatprep.mubr.f32.mxu0 0.0
      %651 = vmatmul.mubr.f32.gmra.mrb[0].mxu0 %v584
      %v652 = vpop.f32.mrb[0].mxu0
      %v653 = vadd.f32 %v579, %v652
      %v654 = vpop.f32.mrb[0].mxu0
      %655 = vdwg.mxu0
      %vm656 = vcmask 64544
      %v657 = vsel %vm656, %v252, -inf
      %658 = vmax.xlane.f32.xlu0 %v657
      %v659 = vpop.xlane.xlu0 %658
      %v660 = vsub.f32 %v252, %v659
      %v661 = vmul.f32 %v660, 1.442695
      %v662 = vpow.pop %v661
      %664 = vrot.lane.b32.xlu0 %v662, 124
      %v665 = vpop.permute.xlu0 %664
      %v667 = vsel %vm261, %v665, 0.0
      %668 = vadd.xlane.f32.xlu0 %v667
      %v669 = vpop.xlane.xlu0 %668
      %v670 = vrcp.pop %v669
      %v671 = vmul.f32 %v662, %v670
      %v672 = vmul.f32 %v282, %v671
      %v673 = vsel %vm281, %v672, 0.0
      %674 = vset.pattern.permute.xlu0 4
      %675 = vperm.xlu0 %674, %v286
      %v676 = vpop.permute.xlu0 %675
      %vm677 = vcmp.eq.s32.totalorder %v260, %v676
      %679 = vset.pattern.permute.xlu0 4
      %680 = vperm.xlu0 %679, %v673
      %v681 = vpop.permute.xlu0 %680
      %v683 = vsel %vm677, %v681, 0.0
      %v684 = vadd.f32 %v683, 0.0
      %685 = vset.pattern.permute.xlu0 5
      %686 = vperm.xlu0 %685, %v286
      %v687 = vpop.permute.xlu0 %686
      %vm688 = vcmp.eq.s32.totalorder %v260, %v687
      %689 = vset.pattern.permute.xlu0 5
      %690 = vperm.xlu0 %689, %v673
      %v691 = vpop.permute.xlu0 %690
      %v693 = vsel %vm688, %v691, 0.0
      %v694 = vadd.f32 %v684, %v693
      %v695 = vmul.f32 %v314, %v671
      %v696 = vsel %vm313, %v695, 0.0
      %697 = vset.pattern.permute.xlu0 4
      %698 = vperm.xlu0 %697, %v317
      %v699 = vpop.permute.xlu0 %698
      %vm700 = vcmp.eq.s32.totalorder %v260, %v699
      %702 = vset.pattern.permute.xlu0 4
      %703 = vperm.xlu0 %702, %v696
      %v704 = vpop.permute.xlu0 %703
      %v706 = vsel %vm700, %v704, 0.0
      %v707 = vadd.f32 %v694, %v706
      %708 = vset.pattern.permute.xlu0 5
      %709 = vperm.xlu0 %708, %v317
      %v710 = vpop.permute.xlu0 %709
      %vm711 = vcmp.eq.s32.totalorder %v260, %v710
      %712 = vset.pattern.permute.xlu0 5
      %713 = vperm.xlu0 %712, %v696
      %v714 = vpop.permute.xlu0 %713
      %v716 = vsel %vm711, %v714, 0.0
      %v717 = vadd.f32 %v707, %v716
      %v718 = vmul.f32 %v344, %v671
      %v719 = vsel %vm343, %v718, 0.0
      %720 = vset.pattern.permute.xlu0 4
      %721 = vperm.xlu0 %720, %v348
      %v722 = vpop.permute.xlu0 %721
      %vm723 = vcmp.eq.s32.totalorder %v260, %v722
      %725 = vset.pattern.permute.xlu0 4
      %726 = vperm.xlu0 %725, %v719
      %v727 = vpop.permute.xlu0 %726
      %v729 = vsel %vm723, %v727, 0.0
      %v730 = vadd.f32 %v717, %v729
      %731 = vset.pattern.permute.xlu0 5
      %732 = vperm.xlu0 %731, %v348
      %v733 = vpop.permute.xlu0 %732
      %vm734 = vcmp.eq.s32.totalorder %v260, %v733
      %735 = vset.pattern.permute.xlu0 5
      %736 = vperm.xlu0 %735, %v719
      %v737 = vpop.permute.xlu0 %736
      %v739 = vsel %vm734, %v737, 0.0
      %v740 = vadd.f32 %v730, %v739
      %v741 = vmul.f32 %v372, %v671
      %v742 = vsel %vm371, %v741, 0.0
      %743 = vset.pattern.permute.xlu0 4
      %744 = vperm.xlu0 %743, %v375
      %v745 = vpop.permute.xlu0 %744
      %vm746 = vcmp.eq.s32.totalorder %v260, %v745
      %748 = vset.pattern.permute.xlu0 4
      %749 = vperm.xlu0 %748, %v742
      %v750 = vpop.permute.xlu0 %749
      %v752 = vsel %vm746, %v750, 0.0
      %v753 = vadd.f32 %v740, %v752
      %754 = vset.pattern.permute.xlu0 5
      %755 = vperm.xlu0 %754, %v375
      %v756 = vpop.permute.xlu0 %755
      %vm757 = vcmp.eq.s32.totalorder %v260, %v756
      %758 = vset.pattern.permute.xlu0 5
      %759 = vperm.xlu0 %758, %v742
      %v760 = vpop.permute.xlu0 %759
      %v762 = vsel %vm757, %v760, 0.0
      %v763 = vadd.f32 %v753, %v762
      %v764 = vsel %vm401, %v672, 0.0
      %765 = vset.pattern.permute.xlu0 6
      %766 = vperm.xlu0 %765, %v404
      %v767 = vpop.permute.xlu0 %766
      %vm768 = vcmp.eq.s32.totalorder %v260, %v767
      %770 = vset.pattern.permute.xlu0 6
      %771 = vperm.xlu0 %770, %v764
      %v772 = vpop.permute.xlu0 %771
      %v774 = vsel %vm768, %v772, 0.0
      %v775 = vadd.f32 %v774, 0.0
      %776 = vset.pattern.permute.xlu0 7
      %777 = vperm.xlu0 %776, %v404
      %v778 = vpop.permute.xlu0 %777
      %vm779 = vcmp.eq.s32.totalorder %v260, %v778
      %780 = vset.pattern.permute.xlu0 7
      %781 = vperm.xlu0 %780, %v764
      %v782 = vpop.permute.xlu0 %781
      %v784 = vsel %vm779, %v782, 0.0
      %v785 = vadd.f32 %v775, %v784
      %v786 = vsel %vm429, %v695, 0.0
      %787 = vset.pattern.permute.xlu0 6
      %788 = vperm.xlu0 %787, %v431
      %v789 = vpop.permute.xlu0 %788
      %vm790 = vcmp.eq.s32.totalorder %v260, %v789
      %792 = vset.pattern.permute.xlu0 6
      %793 = vperm.xlu0 %792, %v786
      %v794 = vpop.permute.xlu0 %793
      %v796 = vsel %vm790, %v794, 0.0
      %v797 = vadd.f32 %v785, %v796
      %798 = vset.pattern.permute.xlu0 7
      %799 = vperm.xlu0 %798, %v431
      %v800 = vpop.permute.xlu0 %799
      %vm801 = vcmp.eq.s32.totalorder %v260, %v800
      %802 = vset.pattern.permute.xlu0 7
      %803 = vperm.xlu0 %802, %v786
      %v804 = vpop.permute.xlu0 %803
      %v806 = vsel %vm801, %v804, 0.0
      %v807 = vadd.f32 %v797, %v806
      %v808 = vsel %vm455, %v718, 0.0
      %809 = vset.pattern.permute.xlu0 6
      %810 = vperm.xlu0 %809, %v458
      %v811 = vpop.permute.xlu0 %810
      %vm812 = vcmp.eq.s32.totalorder %v260, %v811
      %814 = vset.pattern.permute.xlu0 6
      %815 = vperm.xlu0 %814, %v808
      %v816 = vpop.permute.xlu0 %815
      %v818 = vsel %vm812, %v816, 0.0
      %v819 = vadd.f32 %v807, %v818
      %820 = vset.pattern.permute.xlu0 7
      %821 = vperm.xlu0 %820, %v458
      %v822 = vpop.permute.xlu0 %821
      %vm823 = vcmp.eq.s32.totalorder %v260, %v822
      %824 = vset.pattern.permute.xlu0 7
      %825 = vperm.xlu0 %824, %v808
      %v826 = vpop.permute.xlu0 %825
      %v828 = vsel %vm823, %v826, 0.0
      %v829 = vadd.f32 %v819, %v828
      %v830 = vsel %vm481, %v741, 0.0
      %831 = vset.pattern.permute.xlu0 6
      %832 = vperm.xlu0 %831, %v483
      %v833 = vpop.permute.xlu0 %832
      %vm834 = vcmp.eq.s32.totalorder %v260, %v833
      %836 = vset.pattern.permute.xlu0 6
      %837 = vperm.xlu0 %836, %v830
      %v838 = vpop.permute.xlu0 %837
      %v840 = vsel %vm834, %v838, 0.0
      %v841 = vadd.f32 %v829, %v840
      %842 = vset.pattern.permute.xlu0 7
      %843 = vperm.xlu0 %842, %v483
      %v844 = vpop.permute.xlu0 %843
      %vm845 = vcmp.eq.s32.totalorder %v260, %v844
      %846 = vset.pattern.permute.xlu0 7
      %847 = vperm.xlu0 %846, %v830
      %v848 = vpop.permute.xlu0 %847
      %v850 = vsel %vm845, %v848, 0.0
      %v851 = vadd.f32 %v841, %v850
      %852 = vrot.lane.b32.xlu0 %v249, 120
      %v853 = vpop.permute.xlu0 %852
      %v855 = vsel %vm261, %v851, 0
      %v857 = vsel %vm508, %v853, 0
      %859 = vmatprep.subr.mxu0 0.0
      %860 = vmatpush1.msra.mxu0 %v857
      %861 = vmatprep.subr.mxu0 0.0
      %862 = vmatpush1.msra.mxu0 0.0
      %863 = vmatprep.subr.mxu0 0.0
      %864 = vmatpush1.msra.mxu0 0.0
      %865 = vmatprep.subr.mxu0 0.0
      %866 = vmatpush1.msra.mxu0 0.0
      %867 = vmatprep.subr.mxu0 0.0
      %868 = vmatpush1.msra.mxu0 0.0
      %869 = vmatprep.subr.mxu0 0.0
      %870 = vmatpush1.msra.mxu0 0.0
      %871 = vmatprep.subr.mxu0 0.0
      %872 = vmatpush1.msra.mxu0 0.0
      %873 = vmatprep.subr.mxu0 0.0
      %874 = vmatpush1.msra.mxu0 0.0
      %875 = vmatprep.subr.mxu0 0.0
      %876 = vmatpush1.msra.mxu0 0.0
      %877 = vmatprep.subr.mxu0 0.0
      %878 = vmatpush1.msra.mxu0 0.0
      %879 = vmatprep.subr.mxu0 0.0
      %880 = vmatpush1.msra.mxu0 0.0
      %881 = vmatprep.subr.mxu0 0.0
      %882 = vmatpush1.msra.mxu0 0.0
      %883 = vmatprep.subr.mxu0 0.0
      %884 = vmatpush1.msra.mxu0 0.0
      %885 = vmatprep.subr.mxu0 0.0
      %886 = vmatpush1.msra.mxu0 0.0
      %887 = vmatprep.subr.mxu0 0.0
      %888 = vmatpush1.msra.mxu0 0.0
      %889 = vmatprep.subr.mxu0 0.0
      %890 = vmatpush1.msra.mxu0 0.0
      %891 = vmatprep.subr.mxu0 0.0
      %892 = vmatpush1.msra.mxu0 0.0
      %893 = vmatprep.subr.mxu0 0.0
      %894 = vmatpush1.msra.mxu0 0.0
      %895 = vmatprep.subr.mxu0 0.0
      %896 = vmatpush1.msra.mxu0 0.0
      %897 = vmatprep.subr.mxu0 0.0
      %898 = vmatpush1.msra.mxu0 0.0
      %899 = vmatprep.subr.mxu0 0.0
      %900 = vmatpush1.msra.mxu0 0.0
      %901 = vmatprep.subr.mxu0 0.0
      %902 = vmatpush1.msra.mxu0 0.0
      %903 = vmatprep.subr.mxu0 0.0
      %904 = vmatpush1.msra.mxu0 0.0
      %905 = vmatprep.subr.mxu0 0.0
      %906 = vmatpush1.msra.mxu0 0.0
      %907 = vmatprep.subr.mxu0 0.0
      %908 = vmatpush1.msra.mxu0 0.0
      %909 = vmatprep.subr.mxu0 0.0
      %910 = vmatpush1.msra.mxu0 0.0
      %911 = vmatprep.subr.mxu0 0.0
      %912 = vmatpush1.msra.mxu0 0.0
      %913 = vmatprep.subr.mxu0 0.0
      %914 = vmatpush1.msra.mxu0 0.0
      %915 = vmatprep.subr.mxu0 0.0
      %916 = vmatpush1.msra.mxu0 0.0
      %917 = vmatprep.subr.mxu0 0.0
      %918 = vmatpush1.msra.mxu0 0.0
      %919 = vmatprep.subr.mxu0 0.0
      %920 = vmatpush1.msra.mxu0 0.0
      %921 = vmatprep.subr.mxu0 0.0
      %922 = vmatpush1.msra.mxu0 0.0
      %923 = vmatprep.mubr.f32.mxu0 0.0
      %924 = vmatmul.mubr.f32.gmra.mrb[0].mxu0 %v855
      %v925 = vpop.f32.mrb[0].mxu0
      %v926 = vadd.f32 0.0, %v925
      %v927 = vpop.f32.mrb[0].mxu0
      %928 = vdwg.mxu0
      %931 = vrot.lane.b32.xlu0 %v247, 120
      %v932 = vpop.permute.xlu0 %931
      %933 = vrot.lane.b32.xlu0 %v248, 120
      %v934 = vpop.permute.xlu0 %933
      %v938 = vsel %vm582, %v763, 0
      %940 = vmatprep.subr.mxu0 0.0
      %941 = vmatpush1.msra.mxu0 %v932
      %942 = vmatprep.subr.mxu0 0.0
      %943 = vmatpush1.msra.mxu0 %v934
      %944 = vmatprep.subr.mxu0 0.0
      %945 = vmatpush1.msra.mxu0 0.0
      %946 = vmatprep.subr.mxu0 0.0
      %947 = vmatpush1.msra.mxu0 0.0
      %948 = vmatprep.subr.mxu0 0.0
      %949 = vmatpush1.msra.mxu0 0.0
      %950 = vmatprep.subr.mxu0 0.0
      %951 = vmatpush1.msra.mxu0 0.0
      %952 = vmatprep.subr.mxu0 0.0
      %953 = vmatpush1.msra.mxu0 0.0
      %954 = vmatprep.subr.mxu0 0.0
      %955 = vmatpush1.msra.mxu0 0.0
      %956 = vmatprep.subr.mxu0 0.0
      %957 = vmatpush1.msra.mxu0 0.0
      %958 = vmatprep.subr.mxu0 0.0
      %959 = vmatpush1.msra.mxu0 0.0
      %960 = vmatprep.subr.mxu0 0.0
      %961 = vmatpush1.msra.mxu0 0.0
      %962 = vmatprep.subr.mxu0 0.0
      %963 = vmatpush1.msra.mxu0 0.0
      %964 = vmatprep.subr.mxu0 0.0
      %965 = vmatpush1.msra.mxu0 0.0
      %966 = vmatprep.subr.mxu0 0.0
      %967 = vmatpush1.msra.mxu0 0.0
      %968 = vmatprep.subr.mxu0 0.0
      %969 = vmatpush1.msra.mxu0 0.0
      %970 = vmatprep.subr.mxu0 0.0
      %971 = vmatpush1.msra.mxu0 0.0
      %972 = vmatprep.subr.mxu0 0.0
      %973 = vmatpush1.msra.mxu0 0.0
      %974 = vmatprep.subr.mxu0 0.0
      %975 = vmatpush1.msra.mxu0 0.0
      %976 = vmatprep.subr.mxu0 0.0
      %977 = vmatpush1.msra.mxu0 0.0
      %978 = vmatprep.subr.mxu0 0.0
      %979 = vmatpush1.msra.mxu0 0.0
      %980 = vmatprep.subr.mxu0 0.0
      %981 = vmatpush1.msra.mxu0 0.0
      %982 = vmatprep.subr.mxu0 0.0
      %983 = vmatpush1.msra.mxu0 0.0
      %984 = vmatprep.subr.mxu0 0.0
      %985 = vmatpush1.msra.mxu0 0.0
      %986 = vmatprep.subr.mxu0 0.0
      %987 = vmatpush1.msra.mxu0 0.0
      %988 = vmatprep.subr.mxu0 0.0
      %989 = vmatpush1.msra.mxu0 0.0
      %990 = vmatprep.subr.mxu0 0.0
      %991 = vmatpush1.msra.mxu0 0.0
      %992 = vmatprep.subr.mxu0 0.0
      %993 = vmatpush1.msra.mxu0 0.0
      %994 = vmatprep.subr.mxu0 0.0
      %995 = vmatpush1.msra.mxu0 0.0
      %996 = vmatprep.subr.mxu0 0.0
      %997 = vmatpush1.msra.mxu0 0.0
      %998 = vmatprep.subr.mxu0 0.0
      %999 = vmatpush1.msra.mxu0 0.0
      %1000 = vmatprep.subr.mxu0 0.0
      %1001 = vmatpush1.msra.mxu0 0.0
      %1002 = vmatprep.subr.mxu0 0.0
      %1003 = vmatpush1.msra.mxu0 0.0
      %1004 = vmatprep.mubr.f32.mxu0 0.0
      %1005 = vmatmul.mubr.f32.gmra.mrb[0].mxu0 %v938
      %v1006 = vpop.f32.mrb[0].mxu0
      %v1007 = vadd.f32 %v926, %v1006
      %v1008 = vpop.f32.mrb[0].mxu0
      %1009 = vdwg.mxu0
      %vm1010 = vcmask 97344
      %v1011 = vsel %vm1010, %v252, -inf
      %1012 = vmax.xlane.f32.xlu0 %v1011
      %v1013 = vpop.xlane.xlu0 %1012
      %v1014 = vsub.f32 %v252, %v1013
      %v1015 = vmul.f32 %v1014, 1.442695
      %v1016 = vpow.pop %v1015
      %1018 = vrot.lane.b32.xlu0 %v1016, 120
      %v1019 = vpop.permute.xlu0 %1018
      %v1021 = vsel %vm261, %v1019, 0.0
      %1022 = vadd.xlane.f32.xlu0 %v1021
      %v1023 = vpop.xlane.xlu0 %1022
      %v1024 = vrcp.pop %v1023
      %v1025 = vmul.f32 %v1016, %v1024
      %v1026 = vmul.f32 %v282, %v1025
      %v1027 = vsel %vm281, %v1026, 0.0
      %1028 = vset.pattern.permute.xlu0 8
      %1029 = vperm.xlu0 %1028, %v286
      %v1030 = vpop.permute.xlu0 %1029
      %vm1031 = vcmp.eq.s32.totalorder %v260, %v1030
      %1033 = vset.pattern.permute.xlu0 8
      %1034 = vperm.xlu0 %1033, %v1027
      %v1035 = vpop.permute.xlu0 %1034
      %v1037 = vsel %vm1031, %v1035, 0.0
      %v1038 = vadd.f32 %v1037, 0.0
      %1039 = vset.pattern.permute.xlu0 9
      %1040 = vperm.xlu0 %1039, %v286
      %v1041 = vpop.permute.xlu0 %1040
      %vm1042 = vcmp.eq.s32.totalorder %v260, %v1041
      %1043 = vset.pattern.permute.xlu0 9
      %1044 = vperm.xlu0 %1043, %v1027
      %v1045 = vpop.permute.xlu0 %1044
      %v1047 = vsel %vm1042, %v1045, 0.0
      %v1048 = vadd.f32 %v1038, %v1047
      %v1049 = vmul.f32 %v314, %v1025
      %v1050 = vsel %vm313, %v1049, 0.0
      %1051 = vset.pattern.permute.xlu0 8
      %1052 = vperm.xlu0 %1051, %v317
      %v1053 = vpop.permute.xlu0 %1052
      %vm1054 = vcmp.eq.s32.totalorder %v260, %v1053
      %1056 = vset.pattern.permute.xlu0 8
      %1057 = vperm.xlu0 %1056, %v1050
      %v1058 = vpop.permute.xlu0 %1057
      %v1060 = vsel %vm1054, %v1058, 0.0
      %v1061 = vadd.f32 %v1048, %v1060
      %1062 = vset.pattern.permute.xlu0 9
      %1063 = vperm.xlu0 %1062, %v317
      %v1064 = vpop.permute.xlu0 %1063
      %vm1065 = vcmp.eq.s32.totalorder %v260, %v1064
      %1066 = vset.pattern.permute.xlu0 9
      %1067 = vperm.xlu0 %1066, %v1050
      %v1068 = vpop.permute.xlu0 %1067
      %v1070 = vsel %vm1065, %v1068, 0.0
      %v1071 = vadd.f32 %v1061, %v1070
      %v1072 = vmul.f32 %v344, %v1025
      %v1073 = vsel %vm343, %v1072, 0.0
      %1074 = vset.pattern.permute.xlu0 8
      %1075 = vperm.xlu0 %1074, %v348
      %v1076 = vpop.permute.xlu0 %1075
      %vm1077 = vcmp.eq.s32.totalorder %v260, %v1076
      %1079 = vset.pattern.permute.xlu0 8
      %1080 = vperm.xlu0 %1079, %v1073
      %v1081 = vpop.permute.xlu0 %1080
      %v1083 = vsel %vm1077, %v1081, 0.0
      %v1084 = vadd.f32 %v1071, %v1083
      %1085 = vset.pattern.permute.xlu0 9
      %1086 = vperm.xlu0 %1085, %v348
      %v1087 = vpop.permute.xlu0 %1086
      %vm1088 = vcmp.eq.s32.totalorder %v260, %v1087
      %1089 = vset.pattern.permute.xlu0 9
      %1090 = vperm.xlu0 %1089, %v1073
      %v1091 = vpop.permute.xlu0 %1090
      %v1093 = vsel %vm1088, %v1091, 0.0
      %v1094 = vadd.f32 %v1084, %v1093
      %v1095 = vmul.f32 %v372, %v1025
      %v1096 = vsel %vm371, %v1095, 0.0
      %1097 = vset.pattern.permute.xlu0 8
      %1098 = vperm.xlu0 %1097, %v375
      %v1099 = vpop.permute.xlu0 %1098
      %vm1100 = vcmp.eq.s32.totalorder %v260, %v1099
      %1102 = vset.pattern.permute.xlu0 8
      %1103 = vperm.xlu0 %1102, %v1096
      %v1104 = vpop.permute.xlu0 %1103
      %v1106 = vsel %vm1100, %v1104, 0.0
      %v1107 = vadd.f32 %v1094, %v1106
      %1108 = vset.pattern.permute.xlu0 9
      %1109 = vperm.xlu0 %1108, %v375
      %v1110 = vpop.permute.xlu0 %1109
      %vm1111 = vcmp.eq.s32.totalorder %v260, %v1110
      %1112 = vset.pattern.permute.xlu0 9
      %1113 = vperm.xlu0 %1112, %v1096
      %v1114 = vpop.permute.xlu0 %1113
      %v1116 = vsel %vm1111, %v1114, 0.0
      %v1117 = vadd.f32 %v1107, %v1116
      %v1118 = vsel %vm401, %v1026, 0.0
      %1119 = vset.pattern.permute.xlu0 10
      %1120 = vperm.xlu0 %1119, %v404
      %v1121 = vpop.permute.xlu0 %1120
      %vm1122 = vcmp.eq.s32.totalorder %v260, %v1121
      %1124 = vset.pattern.permute.xlu0 10
      %1125 = vperm.xlu0 %1124, %v1118
      %v1126 = vpop.permute.xlu0 %1125
      %v1128 = vsel %vm1122, %v1126, 0.0
      %v1129 = vadd.f32 %v1128, 0.0
      %1130 = vset.pattern.permute.xlu0 11
      %1131 = vperm.xlu0 %1130, %v404
      %v1132 = vpop.permute.xlu0 %1131
      %vm1133 = vcmp.eq.s32.totalorder %v260, %v1132
      %1134 = vset.pattern.permute.xlu0 11
      %1135 = vperm.xlu0 %1134, %v1118
      %v1136 = vpop.permute.xlu0 %1135
      %v1138 = vsel %vm1133, %v1136, 0.0
      %v1139 = vadd.f32 %v1129, %v1138
      %v1140 = vsel %vm429, %v1049, 0.0
      %1141 = vset.pattern.permute.xlu0 10
      %1142 = vperm.xlu0 %1141, %v431
      %v1143 = vpop.permute.xlu0 %1142
      %vm1144 = vcmp.eq.s32.totalorder %v260, %v1143
      %1146 = vset.pattern.permute.xlu0 10
      %1147 = vperm.xlu0 %1146, %v1140
      %v1148 = vpop.permute.xlu0 %1147
      %v1150 = vsel %vm1144, %v1148, 0.0
      %v1151 = vadd.f32 %v1139, %v1150
      %1152 = vset.pattern.permute.xlu0 11
      %1153 = vperm.xlu0 %1152, %v431
      %v1154 = vpop.permute.xlu0 %1153
      %vm1155 = vcmp.eq.s32.totalorder %v260, %v1154
      %1156 = vset.pattern.permute.xlu0 11
      %1157 = vperm.xlu0 %1156, %v1140
      %v1158 = vpop.permute.xlu0 %1157
      %v1160 = vsel %vm1155, %v1158, 0.0
      %v1161 = vadd.f32 %v1151, %v1160
      %v1162 = vsel %vm455, %v1072, 0.0
      %1163 = vset.pattern.permute.xlu0 10
      %1164 = vperm.xlu0 %1163, %v458
      %v1165 = vpop.permute.xlu0 %1164
      %vm1166 = vcmp.eq.s32.totalorder %v260, %v1165
      %1168 = vset.pattern.permute.xlu0 10
      %1169 = vperm.xlu0 %1168, %v1162
      %v1170 = vpop.permute.xlu0 %1169
      %v1172 = vsel %vm1166, %v1170, 0.0
      %v1173 = vadd.f32 %v1161, %v1172
      %1174 = vset.pattern.permute.xlu0 11
      %1175 = vperm.xlu0 %1174, %v458
      %v1176 = vpop.permute.xlu0 %1175
      %vm1177 = vcmp.eq.s32.totalorder %v260, %v1176
      %1178 = vset.pattern.permute.xlu0 11
      %1179 = vperm.xlu0 %1178, %v1162
      %v1180 = vpop.permute.xlu0 %1179
      %v1182 = vsel %vm1177, %v1180, 0.0
      %v1183 = vadd.f32 %v1173, %v1182
      %v1184 = vsel %vm481, %v1095, 0.0
      %1185 = vset.pattern.permute.xlu0 10
      %1186 = vperm.xlu0 %1185, %v483
      %v1187 = vpop.permute.xlu0 %1186
      %vm1188 = vcmp.eq.s32.totalorder %v260, %v1187
      %1190 = vset.pattern.permute.xlu0 10
      %1191 = vperm.xlu0 %1190, %v1184
      %v1192 = vpop.permute.xlu0 %1191
      %v1194 = vsel %vm1188, %v1192, 0.0
      %v1195 = vadd.f32 %v1183, %v1194
      %1196 = vset.pattern.permute.xlu0 11
      %1197 = vperm.xlu0 %1196, %v483
      %v1198 = vpop.permute.xlu0 %1197
      %vm1199 = vcmp.eq.s32.totalorder %v260, %v1198
      %1200 = vset.pattern.permute.xlu0 11
      %1201 = vperm.xlu0 %1200, %v1184
      %v1202 = vpop.permute.xlu0 %1201
      %v1204 = vsel %vm1199, %v1202, 0.0
      %v1205 = vadd.f32 %v1195, %v1204
      %1206 = vrot.lane.b32.xlu0 %v249, 112
      %v1207 = vpop.permute.xlu0 %1206
      %v1209 = vsel %vm261, %v1205, 0
      %v1211 = vsel %vm508, %v1207, 0
      %1213 = vmatprep.subr.mxu0 0.0
      %1214 = vmatpush1.msra.mxu0 %v1211
      %1215 = vmatprep.subr.mxu0 0.0
      %1216 = vmatpush1.msra.mxu0 0.0
      %1217 = vmatprep.subr.mxu0 0.0
      %1218 = vmatpush1.msra.mxu0 0.0
      %1219 = vmatprep.subr.mxu0 0.0
      %1220 = vmatpush1.msra.mxu0 0.0
      %1221 = vmatprep.subr.mxu0 0.0
      %1222 = vmatpush1.msra.mxu0 0.0
      %1223 = vmatprep.subr.mxu0 0.0
      %1224 = vmatpush1.msra.mxu0 0.0
      %1225 = vmatprep.subr.mxu0 0.0
      %1226 = vmatpush1.msra.mxu0 0.0
      %1227 = vmatprep.subr.mxu0 0.0
      %1228 = vmatpush1.msra.mxu0 0.0
      %1229 = vmatprep.subr.mxu0 0.0
      %1230 = vmatpush1.msra.mxu0 0.0
      %1231 = vmatprep.subr.mxu0 0.0
      %1232 = vmatpush1.msra.mxu0 0.0
      %1233 = vmatprep.subr.mxu0 0.0
      %1234 = vmatpush1.msra.mxu0 0.0
      %1235 = vmatprep.subr.mxu0 0.0
      %1236 = vmatpush1.msra.mxu0 0.0
      %1237 = vmatprep.subr.mxu0 0.0
      %1238 = vmatpush1.msra.mxu0 0.0
      %1239 = vmatprep.subr.mxu0 0.0
      %1240 = vmatpush1.msra.mxu0 0.0
      %1241 = vmatprep.subr.mxu0 0.0
      %1242 = vmatpush1.msra.mxu0 0.0
      %1243 = vmatprep.subr.mxu0 0.0
      %1244 = vmatpush1.msra.mxu0 0.0
      %1245 = vmatprep.subr.mxu0 0.0
      %1246 = vmatpush1.msra.mxu0 0.0
      %1247 = vmatprep.subr.mxu0 0.0
      %1248 = vmatpush1.msra.mxu0 0.0
      %1249 = vmatprep.subr.mxu0 0.0
      %1250 = vmatpush1.msra.mxu0 0.0
      %1251 = vmatprep.subr.mxu0 0.0
      %1252 = vmatpush1.msra.mxu0 0.0
      %1253 = vmatprep.subr.mxu0 0.0
      %1254 = vmatpush1.msra.mxu0 0.0
      %1255 = vmatprep.subr.mxu0 0.0
      %1256 = vmatpush1.msra.mxu0 0.0
      %1257 = vmatprep.subr.mxu0 0.0
      %1258 = vmatpush1.msra.mxu0 0.0
      %1259 = vmatprep.subr.mxu0 0.0
      %1260 = vmatpush1.msra.mxu0 0.0
      %1261 = vmatprep.subr.mxu0 0.0
      %1262 = vmatpush1.msra.mxu0 0.0
      %1263 = vmatprep.subr.mxu0 0.0
      %1264 = vmatpush1.msra.mxu0 0.0
      %1265 = vmatprep.subr.mxu0 0.0
      %1266 = vmatpush1.msra.mxu0 0.0
      %1267 = vmatprep.subr.mxu0 0.0
      %1268 = vmatpush1.msra.mxu0 0.0
      %1269 = vmatprep.subr.mxu0 0.0
      %1270 = vmatpush1.msra.mxu0 0.0
      %1271 = vmatprep.subr.mxu0 0.0
      %1272 = vmatpush1.msra.mxu0 0.0
      %1273 = vmatprep.subr.mxu0 0.0
      %1274 = vmatpush1.msra.mxu0 0.0
      %1275 = vmatprep.subr.mxu0 0.0
      %1276 = vmatpush1.msra.mxu0 0.0
      %1277 = vmatprep.mubr.f32.mxu0 0.0
      %1278 = vmatmul.mubr.f32.gmra.mrb[0].mxu0 %v1209
      %v1279 = vpop.f32.mrb[0].mxu0
      %v1280 = vadd.f32 0.0, %v1279
      %v1281 = vpop.f32.mrb[0].mxu0
      %1282 = vdwg.mxu0
      %1283 = vrot.lane.b32.xlu0 %v247, 112
      %v1284 = vpop.permute.xlu0 %1283
      %1285 = vrot.lane.b32.xlu0 %v248, 112
      %v1286 = vpop.permute.xlu0 %1285
      %v1290 = vsel %vm582, %v1117, 0
      %1292 = vmatprep.subr.mxu0 0.0
      %1293 = vmatpush1.msra.mxu0 %v1284
      %1294 = vmatprep.subr.mxu0 0.0
      %1295 = vmatpush1.msra.mxu0 %v1286
      %1296 = vmatprep.subr.mxu0 0.0
      %1297 = vmatpush1.msra.mxu0 0.0
      %1298 = vmatprep.subr.mxu0 0.0
      %1299 = vmatpush1.msra.mxu0 0.0
      %1300 = vmatprep.subr.mxu0 0.0
      %1301 = vmatpush1.msra.mxu0 0.0
      %1302 = vmatprep.subr.mxu0 0.0
      %1303 = vmatpush1.msra.mxu0 0.0
      %1304 = vmatprep.subr.mxu0 0.0
      %1305 = vmatpush1.msra.mxu0 0.0
      %1306 = vmatprep.subr.mxu0 0.0
      %1307 = vmatpush1.msra.mxu0 0.0
      %1308 = vmatprep.subr.mxu0 0.0
      %1309 = vmatpush1.msra.mxu0 0.0
      %1310 = vmatprep.subr.mxu0 0.0
      %1311 = vmatpush1.msra.mxu0 0.0
      %1312 = vmatprep.subr.mxu0 0.0
      %1313 = vmatpush1.msra.mxu0 0.0
      %1314 = vmatprep.subr.mxu0 0.0
      %1315 = vmatpush1.msra.mxu0 0.0
      %1316 = vmatprep.subr.mxu0 0.0
      %1317 = vmatpush1.msra.mxu0 0.0
      %1318 = vmatprep.subr.mxu0 0.0
      %1319 = vmatpush1.msra.mxu0 0.0
      %1320 = vmatprep.subr.mxu0 0.0
      %1321 = vmatpush1.msra.mxu0 0.0
      %1322 = vmatprep.subr.mxu0 0.0
      %1323 = vmatpush1.msra.mxu0 0.0
      %1324 = vmatprep.subr.mxu0 0.0
      %1325 = vmatpush1.msra.mxu0 0.0
      %1326 = vmatprep.subr.mxu0 0.0
      %1327 = vmatpush1.msra.mxu0 0.0
      %1328 = vmatprep.subr.mxu0 0.0
      %1329 = vmatpush1.msra.mxu0 0.0
      %1330 = vmatprep.subr.mxu0 0.0
      %1331 = vmatpush1.msra.mxu0 0.0
      %1332 = vmatprep.subr.mxu0 0.0
      %1333 = vmatpush1.msra.mxu0 0.0
      %1334 = vmatprep.subr.mxu0 0.0
      %1335 = vmatpush1.msra.mxu0 0.0
      %1336 = vmatprep.subr.mxu0 0.0
      %1337 = vmatpush1.msra.mxu0 0.0
      %1338 = vmatprep.subr.mxu0 0.0
      %1339 = vmatpush1.msra.mxu0 0.0
      %1340 = vmatprep.subr.mxu0 0.0
      %1341 = vmatpush1.msra.mxu0 0.0
      %1342 = vmatprep.subr.mxu0 0.0
      %1343 = vmatpush1.msra.mxu0 0.0
      %1344 = vmatprep.subr.mxu0 0.0
      %1345 = vmatpush1.msra.mxu0 0.0
      %1346 = vmatprep.subr.mxu0 0.0
      %1347 = vmatpush1.msra.mxu0 0.0
      %1348 = vmatprep.subr.mxu0 0.0
      %1349 = vmatpush1.msra.mxu0 0.0
      %1350 = vmatprep.subr.mxu0 0.0
      %1351 = vmatpush1.msra.mxu0 0.0
      %1352 = vmatprep.subr.mxu0 0.0
      %1353 = vmatpush1.msra.mxu0 0.0
      %1354 = vmatprep.subr.mxu0 0.0
      %1355 = vmatpush1.msra.mxu0 0.0
      %1356 = vmatprep.mubr.f32.mxu0 0.0
      %1357 = vmatmul.mubr.f32.gmra.mrb[0].mxu0 %v1290
      %v1358 = vpop.f32.mrb[0].mxu0
      %v1359 = vadd.f32 %v1280, %v1358
      %v1360 = vpop.f32.mrb[0].mxu0
      %1361 = vdwg.mxu0
      %vm1362 = vcmask 130144
      %v1363 = vsel %vm1362, %v252, -inf
      %1364 = vmax.xlane.f32.xlu0 %v1363
      %v1365 = vpop.xlane.xlu0 %1364
      %v1366 = vsub.f32 %v252, %v1365
      %v1367 = vmul.f32 %v1366, 1.442695
      %v1368 = vpow.pop %v1367
      %1370 = vrot.lane.b32.xlu0 %v1368, 116
      %v1371 = vpop.permute.xlu0 %1370
      %v1373 = vsel %vm261, %v1371, 0.0
      %1374 = vadd.xlane.f32.xlu0 %v1373
      %v1375 = vpop.xlane.xlu0 %1374
      %v1376 = vrcp.pop %v1375
      %v1377 = vmul.f32 %v1368, %v1376
      %v1378 = vmul.f32 %v282, %v1377
      %v1379 = vsel %vm281, %v1378, 0.0
      %1380 = vset.pattern.permute.xlu0 12
      %1381 = vperm.xlu0 %1380, %v286
      %v1382 = vpop.permute.xlu0 %1381
      %vm1383 = vcmp.eq.s32.totalorder %v260, %v1382
      %1385 = vset.pattern.permute.xlu0 12
      %1386 = vperm.xlu0 %1385, %v1379
      %v1387 = vpop.permute.xlu0 %1386
      %v1389 = vsel %vm1383, %v1387, 0.0
      %v1390 = vadd.f32 %v1389, 0.0
      %1391 = vset.pattern.permute.xlu0 13
      %1392 = vperm.xlu0 %1391, %v286
      %v1393 = vpop.permute.xlu0 %1392
      %vm1394 = vcmp.eq.s32.totalorder %v260, %v1393
      %1395 = vset.pattern.permute.xlu0 13
      %1396 = vperm.xlu0 %1395, %v1379
      %v1397 = vpop.permute.xlu0 %1396
      %v1399 = vsel %vm1394, %v1397, 0.0
      %v1400 = vadd.f32 %v1390, %v1399
      %v1401 = vmul.f32 %v314, %v1377
      %v1402 = vsel %vm313, %v1401, 0.0
      %1403 = vset.pattern.permute.xlu0 12
      %1404 = vperm.xlu0 %1403, %v317
      %v1405 = vpop.permute.xlu0 %1404
      %vm1406 = vcmp.eq.s32.totalorder %v260, %v1405
      %1408 = vset.pattern.permute.xlu0 12
      %1409 = vperm.xlu0 %1408, %v1402
      %v1410 = vpop.permute.xlu0 %1409
      %v1412 = vsel %vm1406, %v1410, 0.0
      %v1413 = vadd.f32 %v1400, %v1412
      %1414 = vset.pattern.permute.xlu0 13
      %1415 = vperm.xlu0 %1414, %v317
      %v1416 = vpop.permute.xlu0 %1415
      %vm1417 = vcmp.eq.s32.totalorder %v260, %v1416
      %1418 = vset.pattern.permute.xlu0 13
      %1419 = vperm.xlu0 %1418, %v1402
      %v1420 = vpop.permute.xlu0 %1419
      %v1422 = vsel %vm1417, %v1420, 0.0
      %v1423 = vadd.f32 %v1413, %v1422
      %v1424 = vmul.f32 %v344, %v1377
      %v1425 = vsel %vm343, %v1424, 0.0
      %1426 = vset.pattern.permute.xlu0 12
      %1427 = vperm.xlu0 %1426, %v348
      %v1428 = vpop.permute.xlu0 %1427
      %vm1429 = vcmp.eq.s32.totalorder %v260, %v1428
      %1431 = vset.pattern.permute.xlu0 12
      %1432 = vperm.xlu0 %1431, %v1425
      %v1433 = vpop.permute.xlu0 %1432
      %v1435 = vsel %vm1429, %v1433, 0.0
      %v1436 = vadd.f32 %v1423, %v1435
      %1437 = vset.pattern.permute.xlu0 13
      %1438 = vperm.xlu0 %1437, %v348
      %v1439 = vpop.permute.xlu0 %1438
      %vm1440 = vcmp.eq.s32.totalorder %v260, %v1439
      %1441 = vset.pattern.permute.xlu0 13
      %1442 = vperm.xlu0 %1441, %v1425
      %v1443 = vpop.permute.xlu0 %1442
      %v1445 = vsel %vm1440, %v1443, 0.0
      %v1446 = vadd.f32 %v1436, %v1445
      %v1447 = vmul.f32 %v372, %v1377
      %v1448 = vsel %vm371, %v1447, 0.0
      %1449 = vset.pattern.permute.xlu0 12
      %1450 = vperm.xlu0 %1449, %v375
      %v1451 = vpop.permute.xlu0 %1450
      %vm1452 = vcmp.eq.s32.totalorder %v260, %v1451
      %1454 = vset.pattern.permute.xlu0 12
      %1455 = vperm.xlu0 %1454, %v1448
      %v1456 = vpop.permute.xlu0 %1455
      %v1458 = vsel %vm1452, %v1456, 0.0
      %v1459 = vadd.f32 %v1446, %v1458
      %1460 = vset.pattern.permute.xlu0 13
      %1461 = vperm.xlu0 %1460, %v375
      %v1462 = vpop.permute.xlu0 %1461
      %vm1463 = vcmp.eq.s32.totalorder %v260, %v1462
      %1464 = vset.pattern.permute.xlu0 13
      %1465 = vperm.xlu0 %1464, %v1448
      %v1466 = vpop.permute.xlu0 %1465
      %v1468 = vsel %vm1463, %v1466, 0.0
      %v1469 = vadd.f32 %v1459, %v1468
      %v1470 = vsel %vm401, %v1378, 0.0
      %1471 = vset.pattern.permute.xlu0 14
      %1472 = vperm.xlu0 %1471, %v404
      %v1473 = vpop.permute.xlu0 %1472
      %vm1474 = vcmp.eq.s32.totalorder %v260, %v1473
      %1476 = vset.pattern.permute.xlu0 14
      %1477 = vperm.xlu0 %1476, %v1470
      %v1478 = vpop.permute.xlu0 %1477
      %v1480 = vsel %vm1474, %v1478, 0.0
      %v1481 = vadd.f32 %v1480, 0.0
      %1482 = vset.pattern.permute.xlu0 15
      %1483 = vperm.xlu0 %1482, %v404
      %v1484 = vpop.permute.xlu0 %1483
      %vm1485 = vcmp.eq.s32.totalorder %v260, %v1484
      %1486 = vset.pattern.permute.xlu0 15
      %1487 = vperm.xlu0 %1486, %v1470
      %v1488 = vpop.permute.xlu0 %1487
      %v1490 = vsel %vm1485, %v1488, 0.0
      %v1491 = vadd.f32 %v1481, %v1490
      %v1492 = vsel %vm429, %v1401, 0.0
      %1493 = vset.pattern.permute.xlu0 14
      %1494 = vperm.xlu0 %1493, %v431
      %v1495 = vpop.permute.xlu0 %1494
      %vm1496 = vcmp.eq.s32.totalorder %v260, %v1495
      %1498 = vset.pattern.permute.xlu0 14
      %1499 = vperm.xlu0 %1498, %v1492
      %v1500 = vpop.permute.xlu0 %1499
      %v1502 = vsel %vm1496, %v1500, 0.0
      %v1503 = vadd.f32 %v1491, %v1502
      %1504 = vset.pattern.permute.xlu0 15
      %1505 = vperm.xlu0 %1504, %v431
      %v1506 = vpop.permute.xlu0 %1505
      %vm1507 = vcmp.eq.s32.totalorder %v260, %v1506
      %1508 = vset.pattern.permute.xlu0 15
      %1509 = vperm.xlu0 %1508, %v1492
      %v1510 = vpop.permute.xlu0 %1509
      %v1512 = vsel %vm1507, %v1510, 0.0
      %v1513 = vadd.f32 %v1503, %v1512
      %v1514 = vsel %vm455, %v1424, 0.0
      %1515 = vset.pattern.permute.xlu0 14
      %1516 = vperm.xlu0 %1515, %v458
      %v1517 = vpop.permute.xlu0 %1516
      %vm1518 = vcmp.eq.s32.totalorder %v260, %v1517
      %1520 = vset.pattern.permute.xlu0 14
      %1521 = vperm.xlu0 %1520, %v1514
      %v1522 = vpop.permute.xlu0 %1521
      %v1524 = vsel %vm1518, %v1522, 0.0
      %v1525 = vadd.f32 %v1513, %v1524
      %1526 = vset.pattern.permute.xlu0 15
      %1527 = vperm.xlu0 %1526, %v458
      %v1528 = vpop.permute.xlu0 %1527
      %vm1529 = vcmp.eq.s32.totalorder %v260, %v1528
      %1530 = vset.pattern.permute.xlu0 15
      %1531 = vperm.xlu0 %1530, %v1514
      %v1532 = vpop.permute.xlu0 %1531
      %v1534 = vsel %vm1529, %v1532, 0.0
      %v1535 = vadd.f32 %v1525, %v1534
      %v1536 = vsel %vm481, %v1447, 0.0
      %1537 = vset.pattern.permute.xlu0 14
      %1538 = vperm.xlu0 %1537, %v483
      %v1539 = vpop.permute.xlu0 %1538
      %vm1540 = vcmp.eq.s32.totalorder %v260, %v1539
      %1542 = vset.pattern.permute.xlu0 14
      %1543 = vperm.xlu0 %1542, %v1536
      %v1544 = vpop.permute.xlu0 %1543
      %v1546 = vsel %vm1540, %v1544, 0.0
      %v1547 = vadd.f32 %v1535, %v1546
      %1548 = vset.pattern.permute.xlu0 15
      %1549 = vperm.xlu0 %1548, %v483
      %v1550 = vpop.permute.xlu0 %1549
      %vm1551 = vcmp.eq.s32.totalorder %v260, %v1550
      %1552 = vset.pattern.permute.xlu0 15
      %1553 = vperm.xlu0 %1552, %v1536
      %v1554 = vpop.permute.xlu0 %1553
      %v1556 = vsel %vm1551, %v1554, 0.0
      %v1557 = vadd.f32 %v1547, %v1556
      %1558 = vrot.lane.b32.xlu0 %v249, 104
      %v1559 = vpop.permute.xlu0 %1558
      %v1561 = vsel %vm261, %v1557, 0
      %v1563 = vsel %vm508, %v1559, 0
      %1565 = vmatprep.subr.mxu0 0.0
      %1566 = vmatpush1.msra.mxu0 %v1563
      %1567 = vmatprep.subr.mxu0 0.0
      %1568 = vmatpush1.msra.mxu0 0.0
      %1569 = vmatprep.subr.mxu0 0.0
      %1570 = vmatpush1.msra.mxu0 0.0
      %1571 = vmatprep.subr.mxu0 0.0
      %1572 = vmatpush1.msra.mxu0 0.0
      %1573 = vmatprep.subr.mxu0 0.0
      %1574 = vmatpush1.msra.mxu0 0.0
      %1575 = vmatprep.subr.mxu0 0.0
      %1576 = vmatpush1.msra.mxu0 0.0
      %1577 = vmatprep.subr.mxu0 0.0
      %1578 = vmatpush1.msra.mxu0 0.0
      %1579 = vmatprep.subr.mxu0 0.0
      %1580 = vmatpush1.msra.mxu0 0.0
      %1581 = vmatprep.subr.mxu0 0.0
      %1582 = vmatpush1.msra.mxu0 0.0
      %1583 = vmatprep.subr.mxu0 0.0
      %1584 = vmatpush1.msra.mxu0 0.0
      %1585 = vmatprep.subr.mxu0 0.0
      %1586 = vmatpush1.msra.mxu0 0.0
      %1587 = vmatprep.subr.mxu0 0.0
      %1588 = vmatpush1.msra.mxu0 0.0
      %1589 = vmatprep.subr.mxu0 0.0
      %1590 = vmatpush1.msra.mxu0 0.0
      %1591 = vmatprep.subr.mxu0 0.0
      %1592 = vmatpush1.msra.mxu0 0.0
      %1593 = vmatprep.subr.mxu0 0.0
      %1594 = vmatpush1.msra.mxu0 0.0
      %1595 = vmatprep.subr.mxu0 0.0
      %1596 = vmatpush1.msra.mxu0 0.0
      %1597 = vmatprep.subr.mxu0 0.0
      %1598 = vmatpush1.msra.mxu0 0.0
      %1599 = vmatprep.subr.mxu0 0.0
      %1600 = vmatpush1.msra.mxu0 0.0
      %1601 = vmatprep.subr.mxu0 0.0
      %1602 = vmatpush1.msra.mxu0 0.0
      %1603 = vmatprep.subr.mxu0 0.0
      %1604 = vmatpush1.msra.mxu0 0.0
      %1605 = vmatprep.subr.mxu0 0.0
      %1606 = vmatpush1.msra.mxu0 0.0
      %1607 = vmatprep.subr.mxu0 0.0
      %1608 = vmatpush1.msra.mxu0 0.0
      %1609 = vmatprep.subr.mxu0 0.0
      %1610 = vmatpush1.msra.mxu0 0.0
      %1611 = vmatprep.subr.mxu0 0.0
      %1612 = vmatpush1.msra.mxu0 0.0
      %1613 = vmatprep.subr.mxu0 0.0
      %1614 = vmatpush1.msra.mxu0 0.0
      %1615 = vmatprep.subr.mxu0 0.0
      %1616 = vmatpush1.msra.mxu0 0.0
      %1617 = vmatprep.subr.mxu0 0.0
      %1618 = vmatpush1.msra.mxu0 0.0
      %1619 = vmatprep.subr.mxu0 0.0
      %1620 = vmatpush1.msra.mxu0 0.0
      %1621 = vmatprep.subr.mxu0 0.0
      %1622 = vmatpush1.msra.mxu0 0.0
      %1623 = vmatprep.subr.mxu0 0.0
      %1624 = vmatpush1.msra.mxu0 0.0
      %1625 = vmatprep.subr.mxu0 0.0
      %1626 = vmatpush1.msra.mxu0 0.0
      %1627 = vmatprep.subr.mxu0 0.0
      %1628 = vmatpush1.msra.mxu0 0.0
      %1629 = vmatprep.mubr.f32.mxu0 0.0
      %1630 = vmatmul.mubr.f32.gmra.mrb[0].mxu0 %v1561
      %v1631 = vpop.f32.mrb[0].mxu0
      %v1632 = vadd.f32 0.0, %v1631
      %v1633 = vpop.f32.mrb[0].mxu0
      %1634 = vdwg.mxu0
      %1635 = vrot.lane.b32.xlu0 %v247, 104
      %v1636 = vpop.permute.xlu0 %1635
      %1637 = vrot.lane.b32.xlu0 %v248, 104
      %v1638 = vpop.permute.xlu0 %1637
      %v1642 = vsel %vm582, %v1469, 0
      %1644 = vmatprep.subr.mxu0 0.0
      %1645 = vmatpush1.msra.mxu0 %v1636
      %1646 = vmatprep.subr.mxu0 0.0
      %1647 = vmatpush1.msra.mxu0 %v1638
      %1648 = vmatprep.subr.mxu0 0.0
      %1649 = vmatpush1.msra.mxu0 0.0
      %1650 = vmatprep.subr.mxu0 0.0
      %1651 = vmatpush1.msra.mxu0 0.0
      %1652 = vmatprep.subr.mxu0 0.0
      %1653 = vmatpush1.msra.mxu0 0.0
      %1654 = vmatprep.subr.mxu0 0.0
      %1655 = vmatpush1.msra.mxu0 0.0
      %1656 = vmatprep.subr.mxu0 0.0
      %1657 = vmatpush1.msra.mxu0 0.0
      %1658 = vmatprep.subr.mxu0 0.0
      %1659 = vmatpush1.msra.mxu0 0.0
      %1660 = vmatprep.subr.mxu0 0.0
      %1661 = vmatpush1.msra.mxu0 0.0
      %1662 = vmatprep.subr.mxu0 0.0
      %1663 = vmatpush1.msra.mxu0 0.0
      %1664 = vmatprep.subr.mxu0 0.0
      %1665 = vmatpush1.msra.mxu0 0.0
      %1666 = vmatprep.subr.mxu0 0.0
      %1667 = vmatpush1.msra.mxu0 0.0
      %1668 = vmatprep.subr.mxu0 0.0
      %1669 = vmatpush1.msra.mxu0 0.0
      %1670 = vmatprep.subr.mxu0 0.0
      %1671 = vmatpush1.msra.mxu0 0.0
      %1672 = vmatprep.subr.mxu0 0.0
      %1673 = vmatpush1.msra.mxu0 0.0
      %1674 = vmatprep.subr.mxu0 0.0
      %1675 = vmatpush1.msra.mxu0 0.0
      %1676 = vmatprep.subr.mxu0 0.0
      %1677 = vmatpush1.msra.mxu0 0.0
      %1678 = vmatprep.subr.mxu0 0.0
      %1679 = vmatpush1.msra.mxu0 0.0
      %1680 = vmatprep.subr.mxu0 0.0
      %1681 = vmatpush1.msra.mxu0 0.0
      %1682 = vmatprep.subr.mxu0 0.0
      %1683 = vmatpush1.msra.mxu0 0.0
      %1684 = vmatprep.subr.mxu0 0.0
      %1685 = vmatpush1.msra.mxu0 0.0
      %1686 = vmatprep.subr.mxu0 0.0
      %1687 = vmatpush1.msra.mxu0 0.0
      %1688 = vmatprep.subr.mxu0 0.0
      %1689 = vmatpush1.msra.mxu0 0.0
      %1690 = vmatprep.subr.mxu0 0.0
      %1691 = vmatpush1.msra.mxu0 0.0
      %1692 = vmatprep.subr.mxu0 0.0
      %1693 = vmatpush1.msra.mxu0 0.0
      %1694 = vmatprep.subr.mxu0 0.0
      %1695 = vmatpush1.msra.mxu0 0.0
      %1696 = vmatprep.subr.mxu0 0.0
      %1697 = vmatpush1.msra.mxu0 0.0
      %1698 = vmatprep.subr.mxu0 0.0
      %1699 = vmatpush1.msra.mxu0 0.0
      %1700 = vmatprep.subr.mxu0 0.0
      %1701 = vmatpush1.msra.mxu0 0.0
      %1702 = vmatprep.subr.mxu0 0.0
      %1703 = vmatpush1.msra.mxu0 0.0
      %1704 = vmatprep.subr.mxu0 0.0
      %1705 = vmatpush1.msra.mxu0 0.0
      %1706 = vmatprep.subr.mxu0 0.0
      %1707 = vmatpush1.msra.mxu0 0.0
      %1708 = vmatprep.mubr.f32.mxu0 0.0
      %1709 = vmatmul.mubr.f32.gmra.mrb[0].mxu0 %v1642
      %v1710 = vpop.f32.mrb[0].mxu0
      %v1711 = vadd.f32 %v1632, %v1710
      %v1712 = vpop.f32.mrb[0].mxu0
      %1713 = vdwg.mxu0
      %1715 = vrot.lane.b32.xlu0 %v1007, 8
      %v1716 = vpop.permute.xlu0 %1715
      %1719 = vrot.lane.b32.xlu0 %v1359, 16
      %v1720 = vpop.permute.xlu0 %1719
      %1723 = vrot.lane.b32.xlu0 %v1711, 24
      %v1724 = vpop.permute.xlu0 %1723
      %vm1726 = vcmask 64512
      %v1727 = vsel %vm1726, %v653, %v1716
      %v1728 = vsel %vm582, %v1727, %v1720
      %vm1729 = vcmask 195584
      %v1730 = vsel %vm1729, %v1728, %v1724
      %vm1731 = vcmask 261120
      %1732 = vst.msk [vmem:[%s246] sm:$0xff] %vm1731, %v1730
      %p1733 = scmp.lt.s32.totalorder %s15, 1
      %s1734 = scalar_select %p1733, %s15, 1
      %s1735 = smul.addr %s1734, 8
      %s1736 = scalar_lea.vmem %s4, %s1735
      // Predicated region
      $region37: #{msdeform_attn_forward.6} parent=35 // pred_check
        %p1737 = pneg %p137
      $region38: #{msdeform_attn_forward.6} parent=35 // pred_check_branch
        %1739 = sbr.rel (%p1737) target = $region40
      $region39: #{msdeform_attn_forward.6} parent=35 // pred_region
        _
      $region40: #{msdeform_attn_forward.6} parent=35 // pred_fallthru
        _
    $region36: #{msdeform_attn_forward.6} parent=5 // pred_fallthru
      _
    %p1740 = scmp.le.s32.totalorder 2, %s10
    // Predicated region
    $region41: #{msdeform_attn_forward.6} parent=5 // pred_check
      %p1741 = pneg %p1740
    $region42: #{msdeform_attn_forward.6} parent=5 // pred_check_branch
      %1743 = sbr.rel (%p1741) target = $region44
    $region43: #{msdeform_attn_forward.6} parent=5 // pred_region
      %s1744 = ssub.s32 %s10, 2
      // Predicated region
      $region45: #{msdeform_attn_forward.6} parent=43 // pred_check
        %p1745 = pneg %p143
      $region46: #{msdeform_attn_forward.6} parent=43 // pred_check_branch
        %1747 = sbr.rel (%p1745) target = $region48
      $region47: #{msdeform_attn_forward.6} parent=43 // pred_region
        %p1748 = scmp.lt.s32.totalorder %s16, 1
        %s1749 = scalar_select %p1748, %s16, 1
        %s1750 = smul.addr %s1749, 8
        %s1751 = scalar_lea.vmem %s4, %s1750
      $region48: #{msdeform_attn_forward.6} parent=43 // pred_fallthru
        _
    $region44: #{msdeform_attn_forward.6} parent=5 // pred_fallthru
      _
  $region6: #{msdeform_attn_forward.6} parent=0 // loop_footer
    %s14 = sadd.s32 1, %s10
  $region7: #{msdeform_attn_forward.6} parent=0 // loop_footer_branch
    %9 = sbr.rel target = $region3
  $region8: #{msdeform_attn_forward.6} parent=0 // loop_exit
    _

</llo_original>
